<compile_context>
chip_gen: v5e
topology: v5e:2x2
jax: 0.10.0
libtpu: 0.0.40
codegen_flags: <defaults>
</compile_context>

<pallas_src>
import jax
import jax.numpy as jnp
from jax.experimental import pallas as pl
from jax.experimental.pallas import tpu as pltpu

_LANES = 128


def _round_up(x, m):
    return ((x + m - 1) // m) * m


def _pick_tile(total, cap):
    """Largest divisor of `total` that is <= cap (so grid blocks tile exactly)."""
    t = max(1, min(total, cap))
    while total % t:
        t -= 1
    return t


# ----------------------------- Pallas kernels ------------------------------

def _patch_conv_kernel(x_ref, w_ref, b_ref, o_ref):
    """Conv2d(k=7, s=2, p=3) for one batch element, accumulated over 49 taps.

    x_ref: (2, 2, 1, Ho+3, Wo+3, Cin)  stride-phase decomposed padded input.
    w_ref: (49, Cin, Cp)               (kh, kw) taps flattened; Cp = Cout padded to 128.
    b_ref: (1, Cp)
    o_ref: (1, Ho*Wo, Cp)
    """
    _, _, _, hp, wp, cin = x_ref.shape
    ho, wo = hp - 3, wp - 3
    cp = o_ref.shape[-1]

    # Load the four stride phases once; every tap reuses them (no HBM re-reads).
    xph = [[x_ref[0, 0, 0], x_ref[0, 1, 0]],
           [x_ref[1, 0, 0], x_ref[1, 1, 0]]]

    acc = jnp.zeros((ho * wo, cp), jnp.float32)
    for kh in range(7):
        for kw in range(7):
            ph, pw = kh % 2, kw % 2
            a, b = kh // 2, kw // 2
            # out[i, j] += x_pad[2i+kh, 2j+kw, :] @ w[kh, kw]  (static, contiguous slice)
            win = xph[ph][pw][a:a + ho, b:b + wo, :]            # (Ho, Wo, Cin)
            acc = acc + jnp.dot(win.reshape(ho * wo, cin),
                                w_ref[kh * 7 + kw],
                                preferred_element_type=jnp.float32)
    # Bias added exactly once, after the full tap reduction.
    o_ref[0] = (acc + b_ref[...]).astype(o_ref.dtype)


def _conv1x1_maxpool_kernel(x_ref, w_ref, b_ref, o_ref):
    """Fused Conv2d(1x1) + MaxPool2d(2,2) on a tile of output-row pairs.

    x_ref: (TR, 2, W, Cp_in)   TR pairs of input rows (one pair -> one output row).
    w_ref: (Cp_in, Cp_out)
    b_ref: (1, Cp_out)
    o_ref: (TR, W//2, Cp_out)  pooled output tile (only this goes back to HBM).
    """
    tr, _, w, cin = x_ref.shape
    wo = w // 2
    cout = o_ref.shape[-1]

    # One lane-dense MXU matmul for the whole tile (Cp_in/Cp_out are 128-multiples).
    x2d = x_ref[...].reshape(tr * 2 * w, cin)
    y = jnp.dot(x2d, w_ref[...], preferred_element_type=jnp.float32) + b_ref[...]

    # In-register 2x2 max pooling; only the pooled tile is stored.
    y = y.reshape(tr, 2, wo, 2, cout)
    y = jnp.max(y, axis=3)          # pool over column pairs
    y = jnp.max(y, axis=1)          # pool over row pairs
    o_ref[...] = y.astype(o_ref.dtype)


# ------------------------------ Pallas wrappers ----------------------------

def _patch_conv7x7_s2_p3(x_nhwc, w49, b):
    """Conv2d(Cin, Cout, 7, stride=2, padding=3), NHWC in / NHWC(padded C) out."""
    n, h, w, cin = x_nhwc.shape
    assert h % 2 == 0 and w % 2 == 0, "even spatial dims expected (stride-2 patch embed)"
    ho, wo = h // 2, w // 2
    hp, wp = ho + 3, wo + 3
    cp = w49.shape[-1]

    xp = jnp.pad(x_nhwc, ((0, 0), (3, 3), (3, 3), (0, 0)))
    # Stride-phase decomposition (pure layout, 1x input size — no 49x im2col in HBM).
    phases = jnp.stack(
        [jnp.stack([xp[:, ph::2, pw::2, :] for pw in (0, 1)], axis=0) for ph in (0, 1)],
        axis=0)                                             # (2, 2, N, Ho+3, Wo+3, Cin)

    out = pl.pallas_call(
        _patch_conv_kernel,
        out_shape=jax.ShapeDtypeStruct((n, ho * wo, cp), jnp.float32),
        grid=(n,),
        in_specs=[
            pl.BlockSpec((2, 2, 1, hp, wp, cin), lambda i: (0, 0, i, 0, 0, 0)),
            pl.BlockSpec((49, cin, cp), lambda i: (0, 0, 0)),
            pl.BlockSpec((1, cp), lambda i: (0, 0)),
        ],
        out_specs=pl.BlockSpec((1, ho * wo, cp), lambda i: (i, 0, 0)),
        compiler_params=pltpu.CompilerParams(dimension_semantics=("parallel",)),
    )(phases, w49, b)
    return out.reshape(n, ho, wo, cp)


def _conv1x1_maxpool(x_nhwc, wmat, bias, row_tile_cap=256):
    """Fused Conv2d(1x1) + MaxPool2d(2,2); NHWC(padded C) in / NHWC(padded C) out."""
    n, h, w, cin = x_nhwc.shape
    assert h % 2 == 0 and w % 2 == 0, "even spatial dims expected by MaxPool2d(2,2)"
    ho, wo = h // 2, w // 2
    cout = wmat.shape[-1]

    xv = x_nhwc.reshape(n * ho, 2, w, cin)     # pure reshape, no data movement
    r = n * ho
    tr = _pick_tile(r, row_tile_cap)           # M-tiling over output rows

    out = pl.pallas_call(
        _conv1x1_maxpool_kernel,
        out_shape=jax.ShapeDtypeStruct((r, wo, cout), jnp.float32),
        grid=(r // tr,),
        in_specs=[
            pl.BlockSpec((tr, 2, w, cin), lambda i: (i, 0, 0, 0)),
            pl.BlockSpec((cin, cout), lambda i: (0, 0)),
            pl.BlockSpec((1, cout), lambda i: (0, 0)),
        ],
        out_specs=pl.BlockSpec((tr, wo, cout), lambda i: (i, 0, 0)),
        compiler_params=pltpu.CompilerParams(dimension_semantics=("parallel",)),
    )(xv, wmat, bias)
    return out.reshape(n, ho, wo, cout)


# --------------------------- Parameter construction ------------------------

def init_params(key, nb_filter, layers, input_channel=1):
    """PyTorch-style conv init; weights stored pre-transposed + zero-padded to 128 lanes."""
    params = {}

    # patchemb: Conv2d(input_channel, nb_filter[0], 7, stride=2, padding=3)
    c0, c0p = nb_filter[0], _round_up(nb_filter[0], _LANES)
    fan_in = input_channel * 7 * 7
    bound = 1.0 / (fan_in ** 0.5)
    kw_, key = jax.random.split(key)
    w = jax.random.uniform(kw_, (c0, input_channel, 7, 7),
                           minval=-bound, maxval=bound, dtype=jnp.float32)
    kb, key = jax.random.split(key)
    b = jax.random.uniform(kb, (c0,), minval=-bound, maxval=bound, dtype=jnp.float32)
    # torch (Cout,Cin,7,7) -> (kh,kw,ci,Cout) -> (49, Cin, Cout), pad Cout to 128.
    w49 = jnp.transpose(w, (2, 3, 1, 0)).reshape(49, input_channel, c0)
    params["patch_w"] = jnp.pad(w49, ((0, 0), (0, 0), (0, c0p - c0)))
    params["patch_b"] = jnp.pad(b, (0, c0p - c0)).reshape(1, c0p)

    # stage k>0: Conv2d(nb_filter[k-1], nb_filter[k], 1)
    for k in range(1, len(layers)):
        cin, cout = nb_filter[k - 1], nb_filter[k]
        cinp, coutp = _round_up(cin, _LANES), _round_up(cout, _LANES)
        bound = 1.0 / (cin ** 0.5)
        kw_, key = jax.random.split(key)
        w = jax.random.uniform(kw_, (cout, cin, 1, 1),
                               minval=-bound, maxval=bound, dtype=jnp.float32)
        kb, key = jax.random.split(key)
        b = jax.random.uniform(kb, (cout,), minval=-bound, maxval=bound, dtype=jnp.float32)
        w2 = jnp.transpose(w, (2, 3, 1, 0)).reshape(cin, cout)
        # zero-pad: padded input rows and padded output cols contribute exactly 0.
        params[f"conv1x1_{k}_w"] = jnp.pad(w2, ((0, cinp - cin), (0, coutp - cout)))
        params[f"conv1x1_{k}_b"] = jnp.pad(b, (0, coutp - cout)).reshape(1, coutp)
    return params


# -------------------------------- Forward ----------------------------------

def mlpmixer_encoder_forward(params, x_nchw, nb_filter, layers):
    x = jnp.transpose(x_nchw, (0, 2, 3, 1))                 # NCHW (PyTorch) -> NHWC
    cur = _patch_conv7x7_s2_p3(x, params["patch_w"], params["patch_b"])
    outs = []
    for k in range(len(layers)):
        if k > 0:
            cur = _conv1x1_maxpool(cur, params[f"conv1x1_{k}_w"],
                                   params[f"conv1x1_{k}_b"])
        # Rearrange('n c a b -> n a b c') is a no-op: kernels already compute in NHWC.
        # TODO(synk): cycle_blocks(nb_filter[k], k, layers, ...) body is not provided in
        # the reference sepMLP.py — applied as identity.
        # Rearrange('n a b c -> n c a b') + lane-padding removal, matching PyTorch output:
        outs.append(jnp.transpose(cur[..., :nb_filter[k]], (0, 3, 1, 2)))
    return outs


# ------------------------- Pure-JAX reference (check) ----------------------

def _reference_forward(params, x_nchw, nb_filter, layers, input_channel):
    x = jnp.transpose(x_nchw, (0, 2, 3, 1))
    c0 = nb_filter[0]
    w = params["patch_w"][:, :, :c0].reshape(7, 7, input_channel, c0)   # HWIO
    b = params["patch_b"][0, :c0]
    cur = jax.lax.conv_general_dilated(
        x, w, window_strides=(2, 2), padding=((3, 3), (3, 3)),
        dimension_numbers=("NHWC", "HWIO", "NHWC")) + b
    outs = []
    for k in range(len(layers)):
        if k > 0:
            cin, cout = nb_filter[k - 1], nb_filter[k]
            wk = params[f"conv1x1_{k}_w"][:cin, :cout]
            bk = params[f"conv1x1_{k}_b"][0, :cout]
            cur = jnp.einsum("nhwc,cd->nhwd", cur, wk) + bk
            cur = jax.lax.reduce_window(cur, -jnp.inf, jax.lax.max,
                                        (1, 2, 2, 1), (1, 2, 2, 1), "VALID")
        outs.append(jnp.transpose(cur, (0, 3, 1, 2)))
    return outs


# --------------------------------- Main -------------------------------------

if __name__ == "__main__":
    nb_filter = [8, 16, 32]
    layers = [1, 1, 1]
    input_channel = 1

    x = jax.random.normal(jax.random.PRNGKey(0),
                          (2, input_channel, 16, 16), dtype=jnp.float32)
    params = init_params(jax.random.PRNGKey(42), nb_filter, layers, input_channel)

    fwd = jax.jit(lambda p, xx: mlpmixer_encoder_forward(p, xx, nb_filter, layers))
    outs = fwd(params, x)
    for o in outs:
        jax.block_until_ready(o)

    # expected per-stage NCHW shapes
    assert outs[0].shape == (2, 8, 8, 8)
    assert outs[1].shape == (2, 16, 4, 4)
    assert outs[2].shape == (2, 32, 2, 2)

    # numerical parity against a pure-JAX reference of the same module
    refs = _reference_forward(params, x, nb_filter, layers, input_channel)
    for o, r in zip(outs, refs):
        assert o.shape == r.shape
        assert float(jnp.max(jnp.abs(o - r))) < 1e-4

    print("KERNEL_OK")
</pallas_src>

<mosaic_0001>
module attributes {stable_mosaic.version = 11 : i64} {
  func.func @_patch_conv_kernel(%arg0: i32, %arg1: memref<2x2x1x11x11x1xf32, #tpu.memory_space<vmem>>, %arg2: memref<49x1x128xf32, #tpu.memory_space<vmem>>, %arg3: memref<1x128xf32, #tpu.memory_space<vmem>>, %arg4: memref<1x64x128xf32, #tpu.memory_space<vmem>>) attributes {dimension_semantics = [#tpu.dimension_semantics<parallel>], iteration_bounds = array<i64: 2>, scalar_prefetch = 0 : i64, scratch_operands = 0 : i64, tpu.core_type = #tpu.core_type<tc>, window_params = [{transform_indices = @transform_0, window_bounds = array<i64: 2, 2, 1, 11, 11, 1>}, {pipeline_mode = #tpu.pipeline_mode<synchronous>, transform_indices = @transform_1, window_bounds = array<i64: 49, 1, 128>}, {pipeline_mode = #tpu.pipeline_mode<synchronous>, transform_indices = @transform_2, window_bounds = array<i64: 1, 128>}, {transform_indices = @transform_3, window_bounds = array<i64: 1, 64, 128>}]} {
    %c0 = arith.constant 0 : index
    %c0_0 = arith.constant 0 : index
    %c0_1 = arith.constant 0 : index
    %c0_2 = arith.constant 0 : index
    %c0_3 = arith.constant 0 : index
    %c0_4 = arith.constant 0 : index
    %0 = vector.load %arg1[%c0, %c0_0, %c0_1, %c0_2, %c0_3, %c0_4] : memref<2x2x1x11x11x1xf32, #tpu.memory_space<vmem>>, vector<1x1x1x11x11x1xf32>
    %1 = vector.shape_cast %0 : vector<1x1x1x11x11x1xf32> to vector<11x11x1xf32>
    %c0_5 = arith.constant 0 : index
    %c1 = arith.constant 1 : index
    %c0_6 = arith.constant 0 : index
    %c0_7 = arith.constant 0 : index
    %c0_8 = arith.constant 0 : index
    %c0_9 = arith.constant 0 : index
    %2 = vector.load %arg1[%c0_5, %c1, %c0_6, %c0_7, %c0_8, %c0_9] : memref<2x2x1x11x11x1xf32, #tpu.memory_space<vmem>>, vector<1x1x1x11x11x1xf32>
    %3 = vector.shape_cast %2 : vector<1x1x1x11x11x1xf32> to vector<11x11x1xf32>
    %c1_10 = arith.constant 1 : index
    %c0_11 = arith.constant 0 : index
    %c0_12 = arith.constant 0 : index
    %c0_13 = arith.constant 0 : index
    %c0_14 = arith.constant 0 : index
    %c0_15 = arith.constant 0 : index
    %4 = vector.load %arg1[%c1_10, %c0_11, %c0_12, %c0_13, %c0_14, %c0_15] : memref<2x2x1x11x11x1xf32, #tpu.memory_space<vmem>>, vector<1x1x1x11x11x1xf32>
    %5 = vector.shape_cast %4 : vector<1x1x1x11x11x1xf32> to vector<11x11x1xf32>
    %c1_16 = arith.constant 1 : index
    %c1_17 = arith.constant 1 : index
    %c0_18 = arith.constant 0 : index
    %c0_19 = arith.constant 0 : index
    %c0_20 = arith.constant 0 : index
    %c0_21 = arith.constant 0 : index
    %6 = vector.load %arg1[%c1_16, %c1_17, %c0_18, %c0_19, %c0_20, %c0_21] : memref<2x2x1x11x11x1xf32, #tpu.memory_space<vmem>>, vector<1x1x1x11x11x1xf32>
    %7 = vector.shape_cast %6 : vector<1x1x1x11x11x1xf32> to vector<11x11x1xf32>
    %cst = arith.constant 0.000000e+00 : f32
    %8 = vector.broadcast %cst : f32 to vector<64x128xf32>
    %9 = vector.extract_strided_slice %1 {offsets = [0, 0, 0], sizes = [8, 8, 1], strides = [1, 1, 1]} : vector<11x11x1xf32> to vector<8x8x1xf32>
    %10 = vector.shape_cast %9 : vector<8x8x1xf32> to vector<64x1xf32>
    %c0_22 = arith.constant 0 : index
    %c0_23 = arith.constant 0 : index
    %c0_24 = arith.constant 0 : index
    %11 = vector.load %arg2[%c0_22, %c0_23, %c0_24] : memref<49x1x128xf32, #tpu.memory_space<vmem>>, vector<1x1x128xf32>
    %12 = vector.shape_cast %11 : vector<1x1x128xf32> to vector<1x128xf32>
    %cst_25 = arith.constant dense<0.000000e+00> : vector<64x128xf32>
    %13 = tpu.matmul %10, %12, %cst_25 {dimension_numbers = #tpu.dot_dimension_numbers<[1], [0], [0], [1], [0, 0, 1, 1], [], []>} : vector<64x1xf32>, vector<1x128xf32>, vector<64x128xf32> -> vector<64x128xf32>
    %14 = arith.addf %8, %13 : vector<64x128xf32>
    %15 = vector.extract_strided_slice %3 {offsets = [0, 0, 0], sizes = [8, 8, 1], strides = [1, 1, 1]} : vector<11x11x1xf32> to vector<8x8x1xf32>
    %16 = vector.shape_cast %15 : vector<8x8x1xf32> to vector<64x1xf32>
    %c1_26 = arith.constant 1 : index
    %c0_27 = arith.constant 0 : index
    %c0_28 = arith.constant 0 : index
    %17 = vector.load %arg2[%c1_26, %c0_27, %c0_28] : memref<49x1x128xf32, #tpu.memory_space<vmem>>, vector<1x1x128xf32>
    %18 = vector.shape_cast %17 : vector<1x1x128xf32> to vector<1x128xf32>
    %cst_29 = arith.constant dense<0.000000e+00> : vector<64x128xf32>
    %19 = tpu.matmul %16, %18, %cst_29 {dimension_numbers = #tpu.dot_dimension_numbers<[1], [0], [0], [1], [0, 0, 1, 1], [], []>} : vector<64x1xf32>, vector<1x128xf32>, vector<64x128xf32> -> vector<64x128xf32>
    %20 = arith.addf %14, %19 : vector<64x128xf32>
    %21 = vector.extract_strided_slice %1 {offsets = [0, 1, 0], sizes = [8, 8, 1], strides = [1, 1, 1]} : vector<11x11x1xf32> to vector<8x8x1xf32>
    %22 = vector.shape_cast %21 : vector<8x8x1xf32> to vector<64x1xf32>
    %c2 = arith.constant 2 : index
    %c0_30 = arith.constant 0 : index
    %c0_31 = arith.constant 0 : index
    %23 = vector.load %arg2[%c2, %c0_30, %c0_31] : memref<49x1x128xf32, #tpu.memory_space<vmem>>, vector<1x1x128xf32>
    %24 = vector.shape_cast %23 : vector<1x1x128xf32> to vector<1x128xf32>
    %cst_32 = arith.constant dense<0.000000e+00> : vector<64x128xf32>
    %25 = tpu.matmul %22, %24, %cst_32 {dimension_numbers = #tpu.dot_dimension_numbers<[1], [0], [0], [1], [0, 0, 1, 1], [], []>} : vector<64x1xf32>, vector<1x128xf32>, vector<64x128xf32> -> vector<64x128xf32>
    %26 = arith.addf %20, %25 : vector<64x128xf32>
    %27 = vector.extract_strided_slice %3 {offsets = [0, 1, 0], sizes = [8, 8, 1], strides = [1, 1, 1]} : vector<11x11x1xf32> to vector<8x8x1xf32>
    %28 = vector.shape_cast %27 : vector<8x8x1xf32> to vector<64x1xf32>
    %c3 = arith.constant 3 : index
    %c0_33 = arith.constant 0 : index
    %c0_34 = arith.constant 0 : index
    %29 = vector.load %arg2[%c3, %c0_33, %c0_34] : memref<49x1x128xf32, #tpu.memory_space<vmem>>, vector<1x1x128xf32>
    %30 = vector.shape_cast %29 : vector<1x1x128xf32> to vector<1x128xf32>
    %cst_35 = arith.constant dense<0.000000e+00> : vector<64x128xf32>
    %31 = tpu.matmul %28, %30, %cst_35 {dimension_numbers = #tpu.dot_dimension_numbers<[1], [0], [0], [1], [0, 0, 1, 1], [], []>} : vector<64x1xf32>, vector<1x128xf32>, vector<64x128xf32> -> vector<64x128xf32>
    %32 = arith.addf %26, %31 : vector<64x128xf32>
    %33 = vector.extract_strided_slice %1 {offsets = [0, 2, 0], sizes = [8, 8, 1], strides = [1, 1, 1]} : vector<11x11x1xf32> to vector<8x8x1xf32>
    %34 = vector.shape_cast %33 : vector<8x8x1xf32> to vector<64x1xf32>
    %c4 = arith.constant 4 : index
    %c0_36 = arith.constant 0 : index
    %c0_37 = arith.constant 0 : index
    %35 = vector.load %arg2[%c4, %c0_36, %c0_37] : memref<49x1x128xf32, #tpu.memory_space<vmem>>, vector<1x1x128xf32>
    %36 = vector.shape_cast %35 : vector<1x1x128xf32> to vector<1x128xf32>
    %cst_38 = arith.constant dense<0.000000e+00> : vector<64x128xf32>
    %37 = tpu.matmul %34, %36, %cst_38 {dimension_numbers = #tpu.dot_dimension_numbers<[1], [0], [0], [1], [0, 0, 1, 1], [], []>} : vector<64x1xf32>, vector<1x128xf32>, vector<64x128xf32> -> vector<64x128xf32>
    %38 = arith.addf %32, %37 : vector<64x128xf32>
    %39 = vector.extract_strided_slice %3 {offsets = [0, 2, 0], sizes = [8, 8, 1], strides = [1, 1, 1]} : vector<11x11x1xf32> to vector<8x8x1xf32>
    %40 = vector.shape_cast %39 : vector<8x8x1xf32> to vector<64x1xf32>
    %c5 = arith.constant 5 : index
    %c0_39 = arith.constant 0 : index
    %c0_40 = arith.constant 0 : index
    %41 = vector.load %arg2[%c5, %c0_39, %c0_40] : memref<49x1x128xf32, #tpu.memory_space<vmem>>, vector<1x1x128xf32>
    %42 = vector.shape_cast %41 : vector<1x1x128xf32> to vector<1x128xf32>
    %cst_41 = arith.constant dense<0.000000e+00> : vector<64x128xf32>
    %43 = tpu.matmul %40, %42, %cst_41 {dimension_numbers = #tpu.dot_dimension_numbers<[1], [0], [0], [1], [0, 0, 1, 1], [], []>} : vector<64x1xf32>, vector<1x128xf32>, vector<64x128xf32> -> vector<64x128xf32>
    %44 = arith.addf %38, %43 : vector<64x128xf32>
    %45 = vector.extract_strided_slice %1 {offsets = [0, 3, 0], sizes = [8, 8, 1], strides = [1, 1, 1]} : vector<11x11x1xf32> to vector<8x8x1xf32>
    %46 = vector.shape_cast %45 : vector<8x8x1xf32> to vector<64x1xf32>
    %c6 = arith.constant 6 : index
    %c0_42 = arith.constant 0 : index
    %c0_43 = arith.constant 0 : index
    %47 = vector.load %arg2[%c6, %c0_42, %c0_43] : memref<49x1x128xf32, #tpu.memory_space<vmem>>, vector<1x1x128xf32>
    %48 = vector.shape_cast %47 : vector<1x1x128xf32> to vector<1x128xf32>
    %cst_44 = arith.constant dense<0.000000e+00> : vector<64x128xf32>
    %49 = tpu.matmul %46, %48, %cst_44 {dimension_numbers = #tpu.dot_dimension_numbers<[1], [0], [0], [1], [0, 0, 1, 1], [], []>} : vector<64x1xf32>, vector<1x128xf32>, vector<64x128xf32> -> vector<64x128xf32>
    %50 = arith.addf %44, %49 : vector<64x128xf32>
    %51 = vector.extract_strided_slice %5 {offsets = [0, 0, 0], sizes = [8, 8, 1], strides = [1, 1, 1]} : vector<11x11x1xf32> to vector<8x8x1xf32>
    %52 = vector.shape_cast %51 : vector<8x8x1xf32> to vector<64x1xf32>
    %c7 = arith.constant 7 : index
    %c0_45 = arith.constant 0 : index
    %c0_46 = arith.constant 0 : index
    %53 = vector.load %arg2[%c7, %c0_45, %c0_46] : memref<49x1x128xf32, #tpu.memory_space<vmem>>, vector<1x1x128xf32>
    %54 = vector.shape_cast %53 : vector<1x1x128xf32> to vector<1x128xf32>
    %cst_47 = arith.constant dense<0.000000e+00> : vector<64x128xf32>
    %55 = tpu.matmul %52, %54, %cst_47 {dimension_numbers = #tpu.dot_dimension_numbers<[1], [0], [0], [1], [0, 0, 1, 1], [], []>} : vector<64x1xf32>, vector<1x128xf32>, vector<64x128xf32> -> vector<64x128xf32>
    %56 = arith.addf %50, %55 : vector<64x128xf32>
    %57 = vector.extract_strided_slice %7 {offsets = [0, 0, 0], sizes = [8, 8, 1], strides = [1, 1, 1]} : vector<11x11x1xf32> to vector<8x8x1xf32>
    %58 = vector.shape_cast %57 : vector<8x8x1xf32> to vector<64x1xf32>
    %c8 = arith.constant 8 : index
    %c0_48 = arith.constant 0 : index
    %c0_49 = arith.constant 0 : index
    %59 = vector.load %arg2[%c8, %c0_48, %c0_49] : memref<49x1x128xf32, #tpu.memory_space<vmem>>, vector<1x1x128xf32>
    %60 = vector.shape_cast %59 : vector<1x1x128xf32> to vector<1x128xf32>
    %cst_50 = arith.constant dense<0.000000e+00> : vector<64x128xf32>
    %61 = tpu.matmul %58, %60, %cst_50 {dimension_numbers = #tpu.dot_dimension_numbers<[1], [0], [0], [1], [0, 0, 1, 1], [], []>} : vector<64x1xf32>, vector<1x128xf32>, vector<64x128xf32> -> vector<64x128xf32>
    %62 = arith.addf %56, %61 : vector<64x128xf32>
    %63 = vector.extract_strided_slice %5 {offsets = [0, 1, 0], sizes = [8, 8, 1], strides = [1, 1, 1]} : vector<11x11x1xf32> to vector<8x8x1xf32>
    %64 = vector.shape_cast %63 : vector<8x8x1xf32> to vector<64x1xf32>
    %c9 = arith.constant 9 : index
    %c0_51 = arith.constant 0 : index
    %c0_52 = arith.constant 0 : index
    %65 = vector.load %arg2[%c9, %c0_51, %c0_52] : memref<49x1x128xf32, #tpu.memory_space<vmem>>, vector<1x1x128xf32>
    %66 = vector.shape_cast %65 : vector<1x1x128xf32> to vector<1x128xf32>
    %cst_53 = arith.constant dense<0.000000e+00> : vector<64x128xf32>
    %67 = tpu.matmul %64, %66, %cst_53 {dimension_numbers = #tpu.dot_dimension_numbers<[1], [0], [0], [1], [0, 0, 1, 1], [], []>} : vector<64x1xf32>, vector<1x128xf32>, vector<64x128xf32> -> vector<64x128xf32>
    %68 = arith.addf %62, %67 : vector<64x128xf32>
    %69 = vector.extract_strided_slice %7 {offsets = [0, 1, 0], sizes = [8, 8, 1], strides = [1, 1, 1]} : vector<11x11x1xf32> to vector<8x8x1xf32>
    %70 = vector.shape_cast %69 : vector<8x8x1xf32> to vector<64x1xf32>
    %c10 = arith.constant 10 : index
    %c0_54 = arith.constant 0 : index
    %c0_55 = arith.constant 0 : index
    %71 = vector.load %arg2[%c10, %c0_54, %c0_55] : memref<49x1x128xf32, #tpu.memory_space<vmem>>, vector<1x1x128xf32>
    %72 = vector.shape_cast %71 : vector<1x1x128xf32> to vector<1x128xf32>
    %cst_56 = arith.constant dense<0.000000e+00> : vector<64x128xf32>
    %73 = tpu.matmul %70, %72, %cst_56 {dimension_numbers = #tpu.dot_dimension_numbers<[1], [0], [0], [1], [0, 0, 1, 1], [], []>} : vector<64x1xf32>, vector<1x128xf32>, vector<64x128xf32> -> vector<64x128xf32>
    %74 = arith.addf %68, %73 : vector<64x128xf32>
    %75 = vector.extract_strided_slice %5 {offsets = [0, 2, 0], sizes = [8, 8, 1], strides = [1, 1, 1]} : vector<11x11x1xf32> to vector<8x8x1xf32>
    %76 = vector.shape_cast %75 : vector<8x8x1xf32> to vector<64x1xf32>
    %c11 = arith.constant 11 : index
    %c0_57 = arith.constant 0 : index
    %c0_58 = arith.constant 0 : index
    %77 = vector.load %arg2[%c11, %c0_57, %c0_58] : memref<49x1x128xf32, #tpu.memory_space<vmem>>, vector<1x1x128xf32>
    %78 = vector.shape_cast %77 : vector<1x1x128xf32> to vector<1x128xf32>
    %cst_59 = arith.constant dense<0.000000e+00> : vector<64x128xf32>
    %79 = tpu.matmul %76, %78, %cst_59 {dimension_numbers = #tpu.dot_dimension_numbers<[1], [0], [0], [1], [0, 0, 1, 1], [], []>} : vector<64x1xf32>, vector<1x128xf32>, vector<64x128xf32> -> vector<64x128xf32>
    %80 = arith.addf %74, %79 : vector<64x128xf32>
    %81 = vector.extract_strided_slice %7 {offsets = [0, 2, 0], sizes = [8, 8, 1], strides = [1, 1, 1]} : vector<11x11x1xf32> to vector<8x8x1xf32>
    %82 = vector.shape_cast %81 : vector<8x8x1xf32> to vector<64x1xf32>
    %c12 = arith.constant 12 : index
    %c0_60 = arith.constant 0 : index
    %c0_61 = arith.constant 0 : index
    %83 = vector.load %arg2[%c12, %c0_60, %c0_61] : memref<49x1x128xf32, #tpu.memory_space<vmem>>, vector<1x1x128xf32>
    %84 = vector.shape_cast %83 : vector<1x1x128xf32> to vector<1x128xf32>
    %cst_62 = arith.constant dense<0.000000e+00> : vector<64x128xf32>
    %85 = tpu.matmul %82, %84, %cst_62 {dimension_numbers = #tpu.dot_dimension_numbers<[1], [0], [0], [1], [0, 0, 1, 1], [], []>} : vector<64x1xf32>, vector<1x128xf32>, vector<64x128xf32> -> vector<64x128xf32>
    %86 = arith.addf %80, %85 : vector<64x128xf32>
    %87 = vector.extract_strided_slice %5 {offsets = [0, 3, 0], sizes = [8, 8, 1], strides = [1, 1, 1]} : vector<11x11x1xf32> to vector<8x8x1xf32>
    %88 = vector.shape_cast %87 : vector<8x8x1xf32> to vector<64x1xf32>
    %c13 = arith.constant 13 : index
    %c0_63 = arith.constant 0 : index
    %c0_64 = arith.constant 0 : index
    %89 = vector.load %arg2[%c13, %c0_63, %c0_64] : memref<49x1x128xf32, #tpu.memory_space<vmem>>, vector<1x1x128xf32>
    %90 = vector.shape_cast %89 : vector<1x1x128xf32> to vector<1x128xf32>
    %cst_65 = arith.constant dense<0.000000e+00> : vector<64x128xf32>
    %91 = tpu.matmul %88, %90, %cst_65 {dimension_numbers = #tpu.dot_dimension_numbers<[1], [0], [0], [1], [0, 0, 1, 1], [], []>} : vector<64x1xf32>, vector<1x128xf32>, vector<64x128xf32> -> vector<64x128xf32>
    %92 = arith.addf %86, %91 : vector<64x128xf32>
    %93 = vector.extract_strided_slice %1 {offsets = [1, 0, 0], sizes = [8, 8, 1], strides = [1, 1, 1]} : vector<11x11x1xf32> to vector<8x8x1xf32>
    %94 = vector.shape_cast %93 : vector<8x8x1xf32> to vector<64x1xf32>
    %c14 = arith.constant 14 : index
    %c0_66 = arith.constant 0 : index
    %c0_67 = arith.constant 0 : index
    %95 = vector.load %arg2[%c14, %c0_66, %c0_67] : memref<49x1x128xf32, #tpu.memory_space<vmem>>, vector<1x1x128xf32>
    %96 = vector.shape_cast %95 : vector<1x1x128xf32> to vector<1x128xf32>
    %cst_68 = arith.constant dense<0.000000e+00> : vector<64x128xf32>
    %97 = tpu.matmul %94, %96, %cst_68 {dimension_numbers = #tpu.dot_dimension_numbers<[1], [0], [0], [1], [0, 0, 1, 1], [], []>} : vector<64x1xf32>, vector<1x128xf32>, vector<64x128xf32> -> vector<64x128xf32>
    %98 = arith.addf %92, %97 : vector<64x128xf32>
    %99 = vector.extract_strided_slice %3 {offsets = [1, 0, 0], sizes = [8, 8, 1], strides = [1, 1, 1]} : vector<11x11x1xf32> to vector<8x8x1xf32>
    %100 = vector.shape_cast %99 : vector<8x8x1xf32> to vector<64x1xf32>
    %c15 = arith.constant 15 : index
    %c0_69 = arith.constant 0 : index
    %c0_70 = arith.constant 0 : index
    %101 = vector.load %arg2[%c15, %c0_69, %c0_70] : memref<49x1x128xf32, #tpu.memory_space<vmem>>, vector<1x1x128xf32>
    %102 = vector.shape_cast %101 : vector<1x1x128xf32> to vector<1x128xf32>
    %cst_71 = arith.constant dense<0.000000e+00> : vector<64x128xf32>
    %103 = tpu.matmul %100, %102, %cst_71 {dimension_numbers = #tpu.dot_dimension_numbers<[1], [0], [0], [1], [0, 0, 1, 1], [], []>} : vector<64x1xf32>, vector<1x128xf32>, vector<64x128xf32> -> vector<64x128xf32>
    %104 = arith.addf %98, %103 : vector<64x128xf32>
    %105 = vector.extract_strided_slice %1 {offsets = [1, 1, 0], sizes = [8, 8, 1], strides = [1, 1, 1]} : vector<11x11x1xf32> to vector<8x8x1xf32>
    %106 = vector.shape_cast %105 : vector<8x8x1xf32> to vector<64x1xf32>
    %c16 = arith.constant 16 : index
    %c0_72 = arith.constant 0 : index
    %c0_73 = arith.constant 0 : index
    %107 = vector.load %arg2[%c16, %c0_72, %c0_73] : memref<49x1x128xf32, #tpu.memory_space<vmem>>, vector<1x1x128xf32>
    %108 = vector.shape_cast %107 : vector<1x1x128xf32> to vector<1x128xf32>
    %cst_74 = arith.constant dense<0.000000e+00> : vector<64x128xf32>
    %109 = tpu.matmul %106, %108, %cst_74 {dimension_numbers = #tpu.dot_dimension_numbers<[1], [0], [0], [1], [0, 0, 1, 1], [], []>} : vector<64x1xf32>, vector<1x128xf32>, vector<64x128xf32> -> vector<64x128xf32>
    %110 = arith.addf %104, %109 : vector<64x128xf32>
    %111 = vector.extract_strided_slice %3 {offsets = [1, 1, 0], sizes = [8, 8, 1], strides = [1, 1, 1]} : vector<11x11x1xf32> to vector<8x8x1xf32>
    %112 = vector.shape_cast %111 : vector<8x8x1xf32> to vector<64x1xf32>
    %c17 = arith.constant 17 : index
    %c0_75 = arith.constant 0 : index
    %c0_76 = arith.constant 0 : index
    %113 = vector.load %arg2[%c17, %c0_75, %c0_76] : memref<49x1x128xf32, #tpu.memory_space<vmem>>, vector<1x1x128xf32>
    %114 = vector.shape_cast %113 : vector<1x1x128xf32> to vector<1x128xf32>
    %cst_77 = arith.constant dense<0.000000e+00> : vector<64x128xf32>
    %115 = tpu.matmul %112, %114, %cst_77 {dimension_numbers = #tpu.dot_dimension_numbers<[1], [0], [0], [1], [0, 0, 1, 1], [], []>} : vector<64x1xf32>, vector<1x128xf32>, vector<64x128xf32> -> vector<64x128xf32>
    %116 = arith.addf %110, %115 : vector<64x128xf32>
    %117 = vector.extract_strided_slice %1 {offsets = [1, 2, 0], sizes = [8, 8, 1], strides = [1, 1, 1]} : vector<11x11x1xf32> to vector<8x8x1xf32>
    %118 = vector.shape_cast %117 : vector<8x8x1xf32> to vector<64x1xf32>
    %c18 = arith.constant 18 : index
    %c0_78 = arith.constant 0 : index
    %c0_79 = arith.constant 0 : index
    %119 = vector.load %arg2[%c18, %c0_78, %c0_79] : memref<49x1x128xf32, #tpu.memory_space<vmem>>, vector<1x1x128xf32>
    %120 = vector.shape_cast %119 : vector<1x1x128xf32> to vector<1x128xf32>
    %cst_80 = arith.constant dense<0.000000e+00> : vector<64x128xf32>
    %121 = tpu.matmul %118, %120, %cst_80 {dimension_numbers = #tpu.dot_dimension_numbers<[1], [0], [0], [1], [0, 0, 1, 1], [], []>} : vector<64x1xf32>, vector<1x128xf32>, vector<64x128xf32> -> vector<64x128xf32>
    %122 = arith.addf %116, %121 : vector<64x128xf32>
    %123 = vector.extract_strided_slice %3 {offsets = [1, 2, 0], sizes = [8, 8, 1], strides = [1, 1, 1]} : vector<11x11x1xf32> to vector<8x8x1xf32>
    %124 = vector.shape_cast %123 : vector<8x8x1xf32> to vector<64x1xf32>
    %c19 = arith.constant 19 : index
    %c0_81 = arith.constant 0 : index
    %c0_82 = arith.constant 0 : index
    %125 = vector.load %arg2[%c19, %c0_81, %c0_82] : memref<49x1x128xf32, #tpu.memory_space<vmem>>, vector<1x1x128xf32>
    %126 = vector.shape_cast %125 : vector<1x1x128xf32> to vector<1x128xf32>
    %cst_83 = arith.constant dense<0.000000e+00> : vector<64x128xf32>
    %127 = tpu.matmul %124, %126, %cst_83 {dimension_numbers = #tpu.dot_dimension_numbers<[1], [0], [0], [1], [0, 0, 1, 1], [], []>} : vector<64x1xf32>, vector<1x128xf32>, vector<64x128xf32> -> vector<64x128xf32>
    %128 = arith.addf %122, %127 : vector<64x128xf32>
    %129 = vector.extract_strided_slice %1 {offsets = [1, 3, 0], sizes = [8, 8, 1], strides = [1, 1, 1]} : vector<11x11x1xf32> to vector<8x8x1xf32>
    %130 = vector.shape_cast %129 : vector<8x8x1xf32> to vector<64x1xf32>
    %c20 = arith.constant 20 : index
    %c0_84 = arith.constant 0 : index
    %c0_85 = arith.constant 0 : index
    %131 = vector.load %arg2[%c20, %c0_84, %c0_85] : memref<49x1x128xf32, #tpu.memory_space<vmem>>, vector<1x1x128xf32>
    %132 = vector.shape_cast %131 : vector<1x1x128xf32> to vector<1x128xf32>
    %cst_86 = arith.constant dense<0.000000e+00> : vector<64x128xf32>
    %133 = tpu.matmul %130, %132, %cst_86 {dimension_numbers = #tpu.dot_dimension_numbers<[1], [0], [0], [1], [0, 0, 1, 1], [], []>} : vector<64x1xf32>, vector<1x128xf32>, vector<64x128xf32> -> vector<64x128xf32>
    %134 = arith.addf %128, %133 : vector<64x128xf32>
    %135 = vector.extract_strided_slice %5 {offsets = [1, 0, 0], sizes = [8, 8, 1], strides = [1, 1, 1]} : vector<11x11x1xf32> to vector<8x8x1xf32>
    %136 = vector.shape_cast %135 : vector<8x8x1xf32> to vector<64x1xf32>
    %c21 = arith.constant 21 : index
    %c0_87 = arith.constant 0 : index
    %c0_88 = arith.constant 0 : index
    %137 = vector.load %arg2[%c21, %c0_87, %c0_88] : memref<49x1x128xf32, #tpu.memory_space<vmem>>, vector<1x1x128xf32>
    %138 = vector.shape_cast %137 : vector<1x1x128xf32> to vector<1x128xf32>
    %cst_89 = arith.constant dense<0.000000e+00> : vector<64x128xf32>
    %139 = tpu.matmul %136, %138, %cst_89 {dimension_numbers = #tpu.dot_dimension_numbers<[1], [0], [0], [1], [0, 0, 1, 1], [], []>} : vector<64x1xf32>, vector<1x128xf32>, vector<64x128xf32> -> vector<64x128xf32>
    %140 = arith.addf %134, %139 : vector<64x128xf32>
    %141 = vector.extract_strided_slice %7 {offsets = [1, 0, 0], sizes = [8, 8, 1], strides = [1, 1, 1]} : vector<11x11x1xf32> to vector<8x8x1xf32>
    %142 = vector.shape_cast %141 : vector<8x8x1xf32> to vector<64x1xf32>
    %c22 = arith.constant 22 : index
    %c0_90 = arith.constant 0 : index
    %c0_91 = arith.constant 0 : index
    %143 = vector.load %arg2[%c22, %c0_90, %c0_91] : memref<49x1x128xf32, #tpu.memory_space<vmem>>, vector<1x1x128xf32>
    %144 = vector.shape_cast %143 : vector<1x1x128xf32> to vector<1x128xf32>
    %cst_92 = arith.constant dense<0.000000e+00> : vector<64x128xf32>
    %145 = tpu.matmul %142, %144, %cst_92 {dimension_numbers = #tpu.dot_dimension_numbers<[1], [0], [0], [1], [0, 0, 1, 1], [], []>} : vector<64x1xf32>, vector<1x128xf32>, vector<64x128xf32> -> vector<64x128xf32>
    %146 = arith.addf %140, %145 : vector<64x128xf32>
    %147 = vector.extract_strided_slice %5 {offsets = [1, 1, 0], sizes = [8, 8, 1], strides = [1, 1, 1]} : vector<11x11x1xf32> to vector<8x8x1xf32>
    %148 = vector.shape_cast %147 : vector<8x8x1xf32> to vector<64x1xf32>
    %c23 = arith.constant 23 : index
    %c0_93 = arith.constant 0 : index
    %c0_94 = arith.constant 0 : index
    %149 = vector.load %arg2[%c23, %c0_93, %c0_94] : memref<49x1x128xf32, #tpu.memory_space<vmem>>, vector<1x1x128xf32>
    %150 = vector.shape_cast %149 : vector<1x1x128xf32> to vector<1x128xf32>
    %cst_95 = arith.constant dense<0.000000e+00> : vector<64x128xf32>
    %151 = tpu.matmul %148, %150, %cst_95 {dimension_numbers = #tpu.dot_dimension_numbers<[1], [0], [0], [1], [0, 0, 1, 1], [], []>} : vector<64x1xf32>, vector<1x128xf32>, vector<64x128xf32> -> vector<64x128xf32>
    %152 = arith.addf %146, %151 : vector<64x128xf32>
    %153 = vector.extract_strided_slice %7 {offsets = [1, 1, 0], sizes = [8, 8, 1], strides = [1, 1, 1]} : vector<11x11x1xf32> to vector<8x8x1xf32>
    %154 = vector.shape_cast %153 : vector<8x8x1xf32> to vector<64x1xf32>
    %c24 = arith.constant 24 : index
    %c0_96 = arith.constant 0 : index
    %c0_97 = arith.constant 0 : index
    %155 = vector.load %arg2[%c24, %c0_96, %c0_97] : memref<49x1x128xf32, #tpu.memory_space<vmem>>, vector<1x1x128xf32>
    %156 = vector.shape_cast %155 : vector<1x1x128xf32> to vector<1x128xf32>
    %cst_98 = arith.constant dense<0.000000e+00> : vector<64x128xf32>
    %157 = tpu.matmul %154, %156, %cst_98 {dimension_numbers = #tpu.dot_dimension_numbers<[1], [0], [0], [1], [0, 0, 1, 1], [], []>} : vector<64x1xf32>, vector<1x128xf32>, vector<64x128xf32> -> vector<64x128xf32>
    %158 = arith.addf %152, %157 : vector<64x128xf32>
    %159 = vector.extract_strided_slice %5 {offsets = [1, 2, 0], sizes = [8, 8, 1], strides = [1, 1, 1]} : vector<11x11x1xf32> to vector<8x8x1xf32>
    %160 = vector.shape_cast %159 : vector<8x8x1xf32> to vector<64x1xf32>
    %c25 = arith.constant 25 : index
    %c0_99 = arith.constant 0 : index
    %c0_100 = arith.constant 0 : index
    %161 = vector.load %arg2[%c25, %c0_99, %c0_100] : memref<49x1x128xf32, #tpu.memory_space<vmem>>, vector<1x1x128xf32>
    %162 = vector.shape_cast %161 : vector<1x1x128xf32> to vector<1x128xf32>
    %cst_101 = arith.constant dense<0.000000e+00> : vector<64x128xf32>
    %163 = tpu.matmul %160, %162, %cst_101 {dimension_numbers = #tpu.dot_dimension_numbers<[1], [0], [0], [1], [0, 0, 1, 1], [], []>} : vector<64x1xf32>, vector<1x128xf32>, vector<64x128xf32> -> vector<64x128xf32>
    %164 = arith.addf %158, %163 : vector<64x128xf32>
    %165 = vector.extract_strided_slice %7 {offsets = [1, 2, 0], sizes = [8, 8, 1], strides = [1, 1, 1]} : vector<11x11x1xf32> to vector<8x8x1xf32>
    %166 = vector.shape_cast %165 : vector<8x8x1xf32> to vector<64x1xf32>
    %c26 = arith.constant 26 : index
    %c0_102 = arith.constant 0 : index
    %c0_103 = arith.constant 0 : index
    %167 = vector.load %arg2[%c26, %c0_102, %c0_103] : memref<49x1x128xf32, #tpu.memory_space<vmem>>, vector<1x1x128xf32>
    %168 = vector.shape_cast %167 : vector<1x1x128xf32> to vector<1x128xf32>
    %cst_104 = arith.constant dense<0.000000e+00> : vector<64x128xf32>
    %169 = tpu.matmul %166, %168, %cst_104 {dimension_numbers = #tpu.dot_dimension_numbers<[1], [0], [0], [1], [0, 0, 1, 1], [], []>} : vector<64x1xf32>, vector<1x128xf32>, vector<64x128xf32> -> vector<64x128xf32>
    %170 = arith.addf %164, %169 : vector<64x128xf32>
    %171 = vector.extract_strided_slice %5 {offsets = [1, 3, 0], sizes = [8, 8, 1], strides = [1, 1, 1]} : vector<11x11x1xf32> to vector<8x8x1xf32>
    %172 = vector.shape_cast %171 : vector<8x8x1xf32> to vector<64x1xf32>
    %c27 = arith.constant 27 : index
    %c0_105 = arith.constant 0 : index
    %c0_106 = arith.constant 0 : index
    %173 = vector.load %arg2[%c27, %c0_105, %c0_106] : memref<49x1x128xf32, #tpu.memory_space<vmem>>, vector<1x1x128xf32>
    %174 = vector.shape_cast %173 : vector<1x1x128xf32> to vector<1x128xf32>
    %cst_107 = arith.constant dense<0.000000e+00> : vector<64x128xf32>
    %175 = tpu.matmul %172, %174, %cst_107 {dimension_numbers = #tpu.dot_dimension_numbers<[1], [0], [0], [1], [0, 0, 1, 1], [], []>} : vector<64x1xf32>, vector<1x128xf32>, vector<64x128xf32> -> vector<64x128xf32>
    %176 = arith.addf %170, %175 : vector<64x128xf32>
    %177 = vector.extract_strided_slice %1 {offsets = [2, 0, 0], sizes = [8, 8, 1], strides = [1, 1, 1]} : vector<11x11x1xf32> to vector<8x8x1xf32>
    %178 = vector.shape_cast %177 : vector<8x8x1xf32> to vector<64x1xf32>
    %c28 = arith.constant 28 : index
    %c0_108 = arith.constant 0 : index
    %c0_109 = arith.constant 0 : index
    %179 = vector.load %arg2[%c28, %c0_108, %c0_109] : memref<49x1x128xf32, #tpu.memory_space<vmem>>, vector<1x1x128xf32>
    %180 = vector.shape_cast %179 : vector<1x1x128xf32> to vector<1x128xf32>
    %cst_110 = arith.constant dense<0.000000e+00> : vector<64x128xf32>
    %181 = tpu.matmul %178, %180, %cst_110 {dimension_numbers = #tpu.dot_dimension_numbers<[1], [0], [0], [1], [0, 0, 1, 1], [], []>} : vector<64x1xf32>, vector<1x128xf32>, vector<64x128xf32> -> vector<64x128xf32>
    %182 = arith.addf %176, %181 : vector<64x128xf32>
    %183 = vector.extract_strided_slice %3 {offsets = [2, 0, 0], sizes = [8, 8, 1], strides = [1, 1, 1]} : vector<11x11x1xf32> to vector<8x8x1xf32>
    %184 = vector.shape_cast %183 : vector<8x8x1xf32> to vector<64x1xf32>
    %c29 = arith.constant 29 : index
    %c0_111 = arith.constant 0 : index
    %c0_112 = arith.constant 0 : index
    %185 = vector.load %arg2[%c29, %c0_111, %c0_112] : memref<49x1x128xf32, #tpu.memory_space<vmem>>, vector<1x1x128xf32>
    %186 = vector.shape_cast %185 : vector<1x1x128xf32> to vector<1x128xf32>
    %cst_113 = arith.constant dense<0.000000e+00> : vector<64x128xf32>
    %187 = tpu.matmul %184, %186, %cst_113 {dimension_numbers = #tpu.dot_dimension_numbers<[1], [0], [0], [1], [0, 0, 1, 1], [], []>} : vector<64x1xf32>, vector<1x128xf32>, vector<64x128xf32> -> vector<64x128xf32>
    %188 = arith.addf %182, %187 : vector<64x128xf32>
    %189 = vector.extract_strided_slice %1 {offsets = [2, 1, 0], sizes = [8, 8, 1], strides = [1, 1, 1]} : vector<11x11x1xf32> to vector<8x8x1xf32>
    %190 = vector.shape_cast %189 : vector<8x8x1xf32> to vector<64x1xf32>
    %c30 = arith.constant 30 : index
    %c0_114 = arith.constant 0 : index
    %c0_115 = arith.constant 0 : index
    %191 = vector.load %arg2[%c30, %c0_114, %c0_115] : memref<49x1x128xf32, #tpu.memory_space<vmem>>, vector<1x1x128xf32>
    %192 = vector.shape_cast %191 : vector<1x1x128xf32> to vector<1x128xf32>
    %cst_116 = arith.constant dense<0.000000e+00> : vector<64x128xf32>
    %193 = tpu.matmul %190, %192, %cst_116 {dimension_numbers = #tpu.dot_dimension_numbers<[1], [0], [0], [1], [0, 0, 1, 1], [], []>} : vector<64x1xf32>, vector<1x128xf32>, vector<64x128xf32> -> vector<64x128xf32>
    %194 = arith.addf %188, %193 : vector<64x128xf32>
    %195 = vector.extract_strided_slice %3 {offsets = [2, 1, 0], sizes = [8, 8, 1], strides = [1, 1, 1]} : vector<11x11x1xf32> to vector<8x8x1xf32>
    %196 = vector.shape_cast %195 : vector<8x8x1xf32> to vector<64x1xf32>
    %c31 = arith.constant 31 : index
    %c0_117 = arith.constant 0 : index
    %c0_118 = arith.constant 0 : index
    %197 = vector.load %arg2[%c31, %c0_117, %c0_118] : memref<49x1x128xf32, #tpu.memory_space<vmem>>, vector<1x1x128xf32>
    %198 = vector.shape_cast %197 : vector<1x1x128xf32> to vector<1x128xf32>
    %cst_119 = arith.constant dense<0.000000e+00> : vector<64x128xf32>
    %199 = tpu.matmul %196, %198, %cst_119 {dimension_numbers = #tpu.dot_dimension_numbers<[1], [0], [0], [1], [0, 0, 1, 1], [], []>} : vector<64x1xf32>, vector<1x128xf32>, vector<64x128xf32> -> vector<64x128xf32>
    %200 = arith.addf %194, %199 : vector<64x128xf32>
    %201 = vector.extract_strided_slice %1 {offsets = [2, 2, 0], sizes = [8, 8, 1], strides = [1, 1, 1]} : vector<11x11x1xf32> to vector<8x8x1xf32>
    %202 = vector.shape_cast %201 : vector<8x8x1xf32> to vector<64x1xf32>
    %c32 = arith.constant 32 : index
    %c0_120 = arith.constant 0 : index
    %c0_121 = arith.constant 0 : index
    %203 = vector.load %arg2[%c32, %c0_120, %c0_121] : memref<49x1x128xf32, #tpu.memory_space<vmem>>, vector<1x1x128xf32>
    %204 = vector.shape_cast %203 : vector<1x1x128xf32> to vector<1x128xf32>
    %cst_122 = arith.constant dense<0.000000e+00> : vector<64x128xf32>
    %205 = tpu.matmul %202, %204, %cst_122 {dimension_numbers = #tpu.dot_dimension_numbers<[1], [0], [0], [1], [0, 0, 1, 1], [], []>} : vector<64x1xf32>, vector<1x128xf32>, vector<64x128xf32> -> vector<64x128xf32>
    %206 = arith.addf %200, %205 : vector<64x128xf32>
    %207 = vector.extract_strided_slice %3 {offsets = [2, 2, 0], sizes = [8, 8, 1], strides = [1, 1, 1]} : vector<11x11x1xf32> to vector<8x8x1xf32>
    %208 = vector.shape_cast %207 : vector<8x8x1xf32> to vector<64x1xf32>
    %c33 = arith.constant 33 : index
    %c0_123 = arith.constant 0 : index
    %c0_124 = arith.constant 0 : index
    %209 = vector.load %arg2[%c33, %c0_123, %c0_124] : memref<49x1x128xf32, #tpu.memory_space<vmem>>, vector<1x1x128xf32>
    %210 = vector.shape_cast %209 : vector<1x1x128xf32> to vector<1x128xf32>
    %cst_125 = arith.constant dense<0.000000e+00> : vector<64x128xf32>
    %211 = tpu.matmul %208, %210, %cst_125 {dimension_numbers = #tpu.dot_dimension_numbers<[1], [0], [0], [1], [0, 0, 1, 1], [], []>} : vector<64x1xf32>, vector<1x128xf32>, vector<64x128xf32> -> vector<64x128xf32>
    %212 = arith.addf %206, %211 : vector<64x128xf32>
    %213 = vector.extract_strided_slice %1 {offsets = [2, 3, 0], sizes = [8, 8, 1], strides = [1, 1, 1]} : vector<11x11x1xf32> to vector<8x8x1xf32>
    %214 = vector.shape_cast %213 : vector<8x8x1xf32> to vector<64x1xf32>
    %c34 = arith.constant 34 : index
    %c0_126 = arith.constant 0 : index
    %c0_127 = arith.constant 0 : index
    %215 = vector.load %arg2[%c34, %c0_126, %c0_127] : memref<49x1x128xf32, #tpu.memory_space<vmem>>, vector<1x1x128xf32>
    %216 = vector.shape_cast %215 : vector<1x1x128xf32> to vector<1x128xf32>
    %cst_128 = arith.constant dense<0.000000e+00> : vector<64x128xf32>
    %217 = tpu.matmul %214, %216, %cst_128 {dimension_numbers = #tpu.dot_dimension_numbers<[1], [0], [0], [1], [0, 0, 1, 1], [], []>} : vector<64x1xf32>, vector<1x128xf32>, vector<64x128xf32> -> vector<64x128xf32>
    %218 = arith.addf %212, %217 : vector<64x128xf32>
    %219 = vector.extract_strided_slice %5 {offsets = [2, 0, 0], sizes = [8, 8, 1], strides = [1, 1, 1]} : vector<11x11x1xf32> to vector<8x8x1xf32>
    %220 = vector.shape_cast %219 : vector<8x8x1xf32> to vector<64x1xf32>
    %c35 = arith.constant 35 : index
    %c0_129 = arith.constant 0 : index
    %c0_130 = arith.constant 0 : index
    %221 = vector.load %arg2[%c35, %c0_129, %c0_130] : memref<49x1x128xf32, #tpu.memory_space<vmem>>, vector<1x1x128xf32>
    %222 = vector.shape_cast %221 : vector<1x1x128xf32> to vector<1x128xf32>
    %cst_131 = arith.constant dense<0.000000e+00> : vector<64x128xf32>
    %223 = tpu.matmul %220, %222, %cst_131 {dimension_numbers = #tpu.dot_dimension_numbers<[1], [0], [0], [1], [0, 0, 1, 1], [], []>} : vector<64x1xf32>, vector<1x128xf32>, vector<64x128xf32> -> vector<64x128xf32>
    %224 = arith.addf %218, %223 : vector<64x128xf32>
    %225 = vector.extract_strided_slice %7 {offsets = [2, 0, 0], sizes = [8, 8, 1], strides = [1, 1, 1]} : vector<11x11x1xf32> to vector<8x8x1xf32>
    %226 = vector.shape_cast %225 : vector<8x8x1xf32> to vector<64x1xf32>
    %c36 = arith.constant 36 : index
    %c0_132 = arith.constant 0 : index
    %c0_133 = arith.constant 0 : index
    %227 = vector.load %arg2[%c36, %c0_132, %c0_133] : memref<49x1x128xf32, #tpu.memory_space<vmem>>, vector<1x1x128xf32>
    %228 = vector.shape_cast %227 : vector<1x1x128xf32> to vector<1x128xf32>
    %cst_134 = arith.constant dense<0.000000e+00> : vector<64x128xf32>
    %229 = tpu.matmul %226, %228, %cst_134 {dimension_numbers = #tpu.dot_dimension_numbers<[1], [0], [0], [1], [0, 0, 1, 1], [], []>} : vector<64x1xf32>, vector<1x128xf32>, vector<64x128xf32> -> vector<64x128xf32>
    %230 = arith.addf %224, %229 : vector<64x128xf32>
    %231 = vector.extract_strided_slice %5 {offsets = [2, 1, 0], sizes = [8, 8, 1], strides = [1, 1, 1]} : vector<11x11x1xf32> to vector<8x8x1xf32>
    %232 = vector.shape_cast %231 : vector<8x8x1xf32> to vector<64x1xf32>
    %c37 = arith.constant 37 : index
    %c0_135 = arith.constant 0 : index
    %c0_136 = arith.constant 0 : index
    %233 = vector.load %arg2[%c37, %c0_135, %c0_136] : memref<49x1x128xf32, #tpu.memory_space<vmem>>, vector<1x1x128xf32>
    %234 = vector.shape_cast %233 : vector<1x1x128xf32> to vector<1x128xf32>
    %cst_137 = arith.constant dense<0.000000e+00> : vector<64x128xf32>
    %235 = tpu.matmul %232, %234, %cst_137 {dimension_numbers = #tpu.dot_dimension_numbers<[1], [0], [0], [1], [0, 0, 1, 1], [], []>} : vector<64x1xf32>, vector<1x128xf32>, vector<64x128xf32> -> vector<64x128xf32>
    %236 = arith.addf %230, %235 : vector<64x128xf32>
    %237 = vector.extract_strided_slice %7 {offsets = [2, 1, 0], sizes = [8, 8, 1], strides = [1, 1, 1]} : vector<11x11x1xf32> to vector<8x8x1xf32>
    %238 = vector.shape_cast %237 : vector<8x8x1xf32> to vector<64x1xf32>
    %c38 = arith.constant 38 : index
    %c0_138 = arith.constant 0 : index
    %c0_139 = arith.constant 0 : index
    %239 = vector.load %arg2[%c38, %c0_138, %c0_139] : memref<49x1x128xf32, #tpu.memory_space<vmem>>, vector<1x1x128xf32>
    %240 = vector.shape_cast %239 : vector<1x1x128xf32> to vector<1x128xf32>
    %cst_140 = arith.constant dense<0.000000e+00> : vector<64x128xf32>
    %241 = tpu.matmul %238, %240, %cst_140 {dimension_numbers = #tpu.dot_dimension_numbers<[1], [0], [0], [1], [0, 0, 1, 1], [], []>} : vector<64x1xf32>, vector<1x128xf32>, vector<64x128xf32> -> vector<64x128xf32>
    %242 = arith.addf %236, %241 : vector<64x128xf32>
    %243 = vector.extract_strided_slice %5 {offsets = [2, 2, 0], sizes = [8, 8, 1], strides = [1, 1, 1]} : vector<11x11x1xf32> to vector<8x8x1xf32>
    %244 = vector.shape_cast %243 : vector<8x8x1xf32> to vector<64x1xf32>
    %c39 = arith.constant 39 : index
    %c0_141 = arith.constant 0 : index
    %c0_142 = arith.constant 0 : index
    %245 = vector.load %arg2[%c39, %c0_141, %c0_142] : memref<49x1x128xf32, #tpu.memory_space<vmem>>, vector<1x1x128xf32>
    %246 = vector.shape_cast %245 : vector<1x1x128xf32> to vector<1x128xf32>
    %cst_143 = arith.constant dense<0.000000e+00> : vector<64x128xf32>
    %247 = tpu.matmul %244, %246, %cst_143 {dimension_numbers = #tpu.dot_dimension_numbers<[1], [0], [0], [1], [0, 0, 1, 1], [], []>} : vector<64x1xf32>, vector<1x128xf32>, vector<64x128xf32> -> vector<64x128xf32>
    %248 = arith.addf %242, %247 : vector<64x128xf32>
    %249 = vector.extract_strided_slice %7 {offsets = [2, 2, 0], sizes = [8, 8, 1], strides = [1, 1, 1]} : vector<11x11x1xf32> to vector<8x8x1xf32>
    %250 = vector.shape_cast %249 : vector<8x8x1xf32> to vector<64x1xf32>
    %c40 = arith.constant 40 : index
    %c0_144 = arith.constant 0 : index
    %c0_145 = arith.constant 0 : index
    %251 = vector.load %arg2[%c40, %c0_144, %c0_145] : memref<49x1x128xf32, #tpu.memory_space<vmem>>, vector<1x1x128xf32>
    %252 = vector.shape_cast %251 : vector<1x1x128xf32> to vector<1x128xf32>
    %cst_146 = arith.constant dense<0.000000e+00> : vector<64x128xf32>
    %253 = tpu.matmul %250, %252, %cst_146 {dimension_numbers = #tpu.dot_dimension_numbers<[1], [0], [0], [1], [0, 0, 1, 1], [], []>} : vector<64x1xf32>, vector<1x128xf32>, vector<64x128xf32> -> vector<64x128xf32>
    %254 = arith.addf %248, %253 : vector<64x128xf32>
    %255 = vector.extract_strided_slice %5 {offsets = [2, 3, 0], sizes = [8, 8, 1], strides = [1, 1, 1]} : vector<11x11x1xf32> to vector<8x8x1xf32>
    %256 = vector.shape_cast %255 : vector<8x8x1xf32> to vector<64x1xf32>
    %c41 = arith.constant 41 : index
    %c0_147 = arith.constant 0 : index
    %c0_148 = arith.constant 0 : index
    %257 = vector.load %arg2[%c41, %c0_147, %c0_148] : memref<49x1x128xf32, #tpu.memory_space<vmem>>, vector<1x1x128xf32>
    %258 = vector.shape_cast %257 : vector<1x1x128xf32> to vector<1x128xf32>
    %cst_149 = arith.constant dense<0.000000e+00> : vector<64x128xf32>
    %259 = tpu.matmul %256, %258, %cst_149 {dimension_numbers = #tpu.dot_dimension_numbers<[1], [0], [0], [1], [0, 0, 1, 1], [], []>} : vector<64x1xf32>, vector<1x128xf32>, vector<64x128xf32> -> vector<64x128xf32>
    %260 = arith.addf %254, %259 : vector<64x128xf32>
    %261 = vector.extract_strided_slice %1 {offsets = [3, 0, 0], sizes = [8, 8, 1], strides = [1, 1, 1]} : vector<11x11x1xf32> to vector<8x8x1xf32>
    %262 = vector.shape_cast %261 : vector<8x8x1xf32> to vector<64x1xf32>
    %c42 = arith.constant 42 : index
    %c0_150 = arith.constant 0 : index
    %c0_151 = arith.constant 0 : index
    %263 = vector.load %arg2[%c42, %c0_150, %c0_151] : memref<49x1x128xf32, #tpu.memory_space<vmem>>, vector<1x1x128xf32>
    %264 = vector.shape_cast %263 : vector<1x1x128xf32> to vector<1x128xf32>
    %cst_152 = arith.constant dense<0.000000e+00> : vector<64x128xf32>
    %265 = tpu.matmul %262, %264, %cst_152 {dimension_numbers = #tpu.dot_dimension_numbers<[1], [0], [0], [1], [0, 0, 1, 1], [], []>} : vector<64x1xf32>, vector<1x128xf32>, vector<64x128xf32> -> vector<64x128xf32>
    %266 = arith.addf %260, %265 : vector<64x128xf32>
    %267 = vector.extract_strided_slice %3 {offsets = [3, 0, 0], sizes = [8, 8, 1], strides = [1, 1, 1]} : vector<11x11x1xf32> to vector<8x8x1xf32>
    %268 = vector.shape_cast %267 : vector<8x8x1xf32> to vector<64x1xf32>
    %c43 = arith.constant 43 : index
    %c0_153 = arith.constant 0 : index
    %c0_154 = arith.constant 0 : index
    %269 = vector.load %arg2[%c43, %c0_153, %c0_154] : memref<49x1x128xf32, #tpu.memory_space<vmem>>, vector<1x1x128xf32>
    %270 = vector.shape_cast %269 : vector<1x1x128xf32> to vector<1x128xf32>
    %cst_155 = arith.constant dense<0.000000e+00> : vector<64x128xf32>
    %271 = tpu.matmul %268, %270, %cst_155 {dimension_numbers = #tpu.dot_dimension_numbers<[1], [0], [0], [1], [0, 0, 1, 1], [], []>} : vector<64x1xf32>, vector<1x128xf32>, vector<64x128xf32> -> vector<64x128xf32>
    %272 = arith.addf %266, %271 : vector<64x128xf32>
    %273 = vector.extract_strided_slice %1 {offsets = [3, 1, 0], sizes = [8, 8, 1], strides = [1, 1, 1]} : vector<11x11x1xf32> to vector<8x8x1xf32>
    %274 = vector.shape_cast %273 : vector<8x8x1xf32> to vector<64x1xf32>
    %c44 = arith.constant 44 : index
    %c0_156 = arith.constant 0 : index
    %c0_157 = arith.constant 0 : index
    %275 = vector.load %arg2[%c44, %c0_156, %c0_157] : memref<49x1x128xf32, #tpu.memory_space<vmem>>, vector<1x1x128xf32>
    %276 = vector.shape_cast %275 : vector<1x1x128xf32> to vector<1x128xf32>
    %cst_158 = arith.constant dense<0.000000e+00> : vector<64x128xf32>
    %277 = tpu.matmul %274, %276, %cst_158 {dimension_numbers = #tpu.dot_dimension_numbers<[1], [0], [0], [1], [0, 0, 1, 1], [], []>} : vector<64x1xf32>, vector<1x128xf32>, vector<64x128xf32> -> vector<64x128xf32>
    %278 = arith.addf %272, %277 : vector<64x128xf32>
    %279 = vector.extract_strided_slice %3 {offsets = [3, 1, 0], sizes = [8, 8, 1], strides = [1, 1, 1]} : vector<11x11x1xf32> to vector<8x8x1xf32>
    %280 = vector.shape_cast %279 : vector<8x8x1xf32> to vector<64x1xf32>
    %c45 = arith.constant 45 : index
    %c0_159 = arith.constant 0 : index
    %c0_160 = arith.constant 0 : index
    %281 = vector.load %arg2[%c45, %c0_159, %c0_160] : memref<49x1x128xf32, #tpu.memory_space<vmem>>, vector<1x1x128xf32>
    %282 = vector.shape_cast %281 : vector<1x1x128xf32> to vector<1x128xf32>
    %cst_161 = arith.constant dense<0.000000e+00> : vector<64x128xf32>
    %283 = tpu.matmul %280, %282, %cst_161 {dimension_numbers = #tpu.dot_dimension_numbers<[1], [0], [0], [1], [0, 0, 1, 1], [], []>} : vector<64x1xf32>, vector<1x128xf32>, vector<64x128xf32> -> vector<64x128xf32>
    %284 = arith.addf %278, %283 : vector<64x128xf32>
    %285 = vector.extract_strided_slice %1 {offsets = [3, 2, 0], sizes = [8, 8, 1], strides = [1, 1, 1]} : vector<11x11x1xf32> to vector<8x8x1xf32>
    %286 = vector.shape_cast %285 : vector<8x8x1xf32> to vector<64x1xf32>
    %c46 = arith.constant 46 : index
    %c0_162 = arith.constant 0 : index
    %c0_163 = arith.constant 0 : index
    %287 = vector.load %arg2[%c46, %c0_162, %c0_163] : memref<49x1x128xf32, #tpu.memory_space<vmem>>, vector<1x1x128xf32>
    %288 = vector.shape_cast %287 : vector<1x1x128xf32> to vector<1x128xf32>
    %cst_164 = arith.constant dense<0.000000e+00> : vector<64x128xf32>
    %289 = tpu.matmul %286, %288, %cst_164 {dimension_numbers = #tpu.dot_dimension_numbers<[1], [0], [0], [1], [0, 0, 1, 1], [], []>} : vector<64x1xf32>, vector<1x128xf32>, vector<64x128xf32> -> vector<64x128xf32>
    %290 = arith.addf %284, %289 : vector<64x128xf32>
    %291 = vector.extract_strided_slice %3 {offsets = [3, 2, 0], sizes = [8, 8, 1], strides = [1, 1, 1]} : vector<11x11x1xf32> to vector<8x8x1xf32>
    %292 = vector.shape_cast %291 : vector<8x8x1xf32> to vector<64x1xf32>
    %c47 = arith.constant 47 : index
    %c0_165 = arith.constant 0 : index
    %c0_166 = arith.constant 0 : index
    %293 = vector.load %arg2[%c47, %c0_165, %c0_166] : memref<49x1x128xf32, #tpu.memory_space<vmem>>, vector<1x1x128xf32>
    %294 = vector.shape_cast %293 : vector<1x1x128xf32> to vector<1x128xf32>
    %cst_167 = arith.constant dense<0.000000e+00> : vector<64x128xf32>
    %295 = tpu.matmul %292, %294, %cst_167 {dimension_numbers = #tpu.dot_dimension_numbers<[1], [0], [0], [1], [0, 0, 1, 1], [], []>} : vector<64x1xf32>, vector<1x128xf32>, vector<64x128xf32> -> vector<64x128xf32>
    %296 = arith.addf %290, %295 : vector<64x128xf32>
    %297 = vector.extract_strided_slice %1 {offsets = [3, 3, 0], sizes = [8, 8, 1], strides = [1, 1, 1]} : vector<11x11x1xf32> to vector<8x8x1xf32>
    %298 = vector.shape_cast %297 : vector<8x8x1xf32> to vector<64x1xf32>
    %c48 = arith.constant 48 : index
    %c0_168 = arith.constant 0 : index
    %c0_169 = arith.constant 0 : index
    %299 = vector.load %arg2[%c48, %c0_168, %c0_169] : memref<49x1x128xf32, #tpu.memory_space<vmem>>, vector<1x1x128xf32>
    %300 = vector.shape_cast %299 : vector<1x1x128xf32> to vector<1x128xf32>
    %cst_170 = arith.constant dense<0.000000e+00> : vector<64x128xf32>
    %301 = tpu.matmul %298, %300, %cst_170 {dimension_numbers = #tpu.dot_dimension_numbers<[1], [0], [0], [1], [0, 0, 1, 1], [], []>} : vector<64x1xf32>, vector<1x128xf32>, vector<64x128xf32> -> vector<64x128xf32>
    %302 = arith.addf %296, %301 : vector<64x128xf32>
    %c0_171 = arith.constant 0 : index
    %c0_172 = arith.constant 0 : index
    %303 = vector.load %arg3[%c0_171, %c0_172] : memref<1x128xf32, #tpu.memory_space<vmem>>, vector<1x128xf32>
    %304 = vector.broadcast %303 : vector<1x128xf32> to vector<64x128xf32>
    %305 = arith.addf %302, %304 : vector<64x128xf32>
    %c0_173 = arith.constant 0 : index
    %c0_174 = arith.constant 0 : index
    %c0_175 = arith.constant 0 : index
    %306 = vector.load %arg4[%c0_173, %c0_174, %c0_175] : memref<1x64x128xf32, #tpu.memory_space<vmem>>, vector<1x64x128xf32>
    %307 = vector.shape_cast %306 : vector<1x64x128xf32> to vector<64x128xf32>
    %308 = vector.shape_cast %305 : vector<64x128xf32> to vector<1x64x128xf32>
    tpu.vector_store %arg4[%c0_173, %c0_174, %c0_175], %308 {strides = array<i32>} : memref<1x64x128xf32, #tpu.memory_space<vmem>>, vector<1x64x128xf32>,
    return
  }
  func.func @transform_0(%arg0: i32) -> (i32, i32, i32, i32, i32, i32) {
    %c0_i32 = arith.constant 0 : i32
    %c0_i32_0 = arith.constant 0 : i32
    %c0_i32_1 = arith.constant 0 : i32
    %c0_i32_2 = arith.constant 0 : i32
    %c0_i32_3 = arith.constant 0 : i32
    %c0_i32_4 = arith.constant 0 : i32
    return %c0_i32, %c0_i32_0, %arg0, %c0_i32_1, %c0_i32_2, %c0_i32_3 : i32, i32, i32, i32, i32, i32
  }
  func.func @transform_1(%arg0: i32) -> (i32, i32, i32) {
    %c0_i32 = arith.constant 0 : i32
    %c0_i32_0 = arith.constant 0 : i32
    %c0_i32_1 = arith.constant 0 : i32
    %c0_i32_2 = arith.constant 0 : i32
    return %c0_i32, %c0_i32_0, %c0_i32_1 : i32, i32, i32
  }
  func.func @transform_2(%arg0: i32) -> (i32, i32) {
    %c0_i32 = arith.constant 0 : i32
    %c0_i32_0 = arith.constant 0 : i32
    %c0_i32_1 = arith.constant 0 : i32
    return %c0_i32, %c0_i32_0 : i32, i32
  }
  func.func @transform_3(%arg0: i32) -> (i32, i32, i32) {
    %c0_i32 = arith.constant 0 : i32
    %c0_i32_0 = arith.constant 0 : i32
    %c0_i32_1 = arith.constant 0 : i32
    return %arg0, %c0_i32, %c0_i32_0 : i32, i32, i32
  }
}

module attributes {stable_mosaic.version = 11 : i64} {
  func.func @_conv1x1_maxpool_kernel(%arg0: i32, %arg1: memref<4x2x4x128xf32, #tpu.memory_space<vmem>>, %arg2: memref<128x128xf32, #tpu.memory_space<vmem>>, %arg3: memref<1x128xf32, #tpu.memory_space<vmem>>, %arg4: memref<4x2x128xf32, #tpu.memory_space<vmem>>) attributes {dimension_semantics = [#tpu.dimension_semantics<parallel>], iteration_bounds = array<i64: 1>, scalar_prefetch = 0 : i64, scratch_operands = 0 : i64, tpu.core_type = #tpu.core_type<tc>, window_params = [{transform_indices = @transform_0, window_bounds = array<i64: 4, 2, 4, 128>}, {pipeline_mode = #tpu.pipeline_mode<synchronous>, transform_indices = @transform_1, window_bounds = array<i64: 128, 128>}, {pipeline_mode = #tpu.pipeline_mode<synchronous>, transform_indices = @transform_2, window_bounds = array<i64: 1, 128>}, {transform_indices = @transform_3, window_bounds = array<i64: 4, 2, 128>}]} {
    %c0 = arith.constant 0 : index
    %c0_0 = arith.constant 0 : index
    %c0_1 = arith.constant 0 : index
    %c0_2 = arith.constant 0 : index
    %0 = vector.load %arg1[%c0, %c0_0, %c0_1, %c0_2] : memref<4x2x4x128xf32, #tpu.memory_space<vmem>>, vector<4x2x4x128xf32>
    %1 = vector.shape_cast %0 : vector<4x2x4x128xf32> to vector<32x128xf32>
    %c0_3 = arith.constant 0 : index
    %c0_4 = arith.constant 0 : index
    %2 = vector.load %arg2[%c0_3, %c0_4] : memref<128x128xf32, #tpu.memory_space<vmem>>, vector<128x128xf32>
    %cst = arith.constant dense<0.000000e+00> : vector<32x128xf32>
    %3 = tpu.matmul %1, %2, %cst {dimension_numbers = #tpu.dot_dimension_numbers<[1], [0], [0], [1], [0, 0, 1, 1], [], []>} : vector<32x128xf32>, vector<128x128xf32>, vector<32x128xf32> -> vector<32x128xf32>
    %c0_5 = arith.constant 0 : index
    %c0_6 = arith.constant 0 : index
    %4 = vector.load %arg3[%c0_5, %c0_6] : memref<1x128xf32, #tpu.memory_space<vmem>>, vector<1x128xf32>
    %5 = vector.broadcast %4 : vector<1x128xf32> to vector<32x128xf32>
    %6 = arith.addf %3, %5 : vector<32x128xf32>
    %7 = vector.shape_cast %6 : vector<32x128xf32> to vector<4x2x2x2x128xf32>
    %cst_7 = arith.constant dense<0xFF800000> : vector<4x2x2x128xf32>
    %8 = vector.multi_reduction <maximumf>, %7, %cst_7 [3] : vector<4x2x2x2x128xf32> to vector<4x2x2x128xf32>
    %cst_8 = arith.constant dense<0xFF800000> : vector<4x2x128xf32>
    %9 = vector.multi_reduction <maximumf>, %8, %cst_8 [1] : vector<4x2x2x128xf32> to vector<4x2x128xf32>
    %c0_9 = arith.constant 0 : index
    %c0_10 = arith.constant 0 : index
    %c0_11 = arith.constant 0 : index
    %10 = vector.load %arg4[%c0_9, %c0_10, %c0_11] : memref<4x2x128xf32, #tpu.memory_space<vmem>>, vector<4x2x128xf32>
    tpu.vector_store %arg4[%c0_9, %c0_10, %c0_11], %9 {strides = array<i32>} : memref<4x2x128xf32, #tpu.memory_space<vmem>>, vector<4x2x128xf32>,
    return
  }
  func.func @transform_0(%arg0: i32) -> (i32, i32, i32, i32) {
    %c0_i32 = arith.constant 0 : i32
    %c0_i32_0 = arith.constant 0 : i32
    %c0_i32_1 = arith.constant 0 : i32
    %c0_i32_2 = arith.constant 0 : i32
    return %arg0, %c0_i32, %c0_i32_0, %c0_i32_1 : i32, i32, i32, i32
  }
  func.func @transform_1(%arg0: i32) -> (i32, i32) {
    %c0_i32 = arith.constant 0 : i32
    %c0_i32_0 = arith.constant 0 : i32
    %c0_i32_1 = arith.constant 0 : i32
    return %c0_i32, %c0_i32_0 : i32, i32
  }
  func.func @transform_2(%arg0: i32) -> (i32, i32) {
    %c0_i32 = arith.constant 0 : i32
    %c0_i32_0 = arith.constant 0 : i32
    %c0_i32_1 = arith.constant 0 : i32
    return %c0_i32, %c0_i32_0 : i32, i32
  }
  func.func @transform_3(%arg0: i32) -> (i32, i32, i32) {
    %c0_i32 = arith.constant 0 : i32
    %c0_i32_0 = arith.constant 0 : i32
    %c0_i32_1 = arith.constant 0 : i32
    return %arg0, %c0_i32, %c0_i32_0 : i32, i32, i32
  }
}

module attributes {stable_mosaic.version = 11 : i64} {
  func.func @_conv1x1_maxpool_kernel(%arg0: i32, %arg1: memref<8x2x8x128xf32, #tpu.memory_space<vmem>>, %arg2: memref<128x128xf32, #tpu.memory_space<vmem>>, %arg3: memref<1x128xf32, #tpu.memory_space<vmem>>, %arg4: memref<8x4x128xf32, #tpu.memory_space<vmem>>) attributes {dimension_semantics = [#tpu.dimension_semantics<parallel>], iteration_bounds = array<i64: 1>, scalar_prefetch = 0 : i64, scratch_operands = 0 : i64, tpu.core_type = #tpu.core_type<tc>, window_params = [{transform_indices = @transform_0, window_bounds = array<i64: 8, 2, 8, 128>}, {pipeline_mode = #tpu.pipeline_mode<synchronous>, transform_indices = @transform_1, window_bounds = array<i64: 128, 128>}, {pipeline_mode = #tpu.pipeline_mode<synchronous>, transform_indices = @transform_2, window_bounds = array<i64: 1, 128>}, {transform_indices = @transform_3, window_bounds = array<i64: 8, 4, 128>}]} {
    %c0 = arith.constant 0 : index
    %c0_0 = arith.constant 0 : index
    %c0_1 = arith.constant 0 : index
    %c0_2 = arith.constant 0 : index
    %0 = vector.load %arg1[%c0, %c0_0, %c0_1, %c0_2] : memref<8x2x8x128xf32, #tpu.memory_space<vmem>>, vector<8x2x8x128xf32>
    %1 = vector.shape_cast %0 : vector<8x2x8x128xf32> to vector<128x128xf32>
    %c0_3 = arith.constant 0 : index
    %c0_4 = arith.constant 0 : index
    %2 = vector.load %arg2[%c0_3, %c0_4] : memref<128x128xf32, #tpu.memory_space<vmem>>, vector<128x128xf32>
    %cst = arith.constant dense<0.000000e+00> : vector<128x128xf32>
    %3 = tpu.matmul %1, %2, %cst {dimension_numbers = #tpu.dot_dimension_numbers<[1], [0], [0], [1], [0, 0, 1, 1], [], []>} : vector<128x128xf32>, vector<128x128xf32>, vector<128x128xf32> -> vector<128x128xf32>
    %c0_5 = arith.constant 0 : index
    %c0_6 = arith.constant 0 : index
    %4 = vector.load %arg3[%c0_5, %c0_6] : memref<1x128xf32, #tpu.memory_space<vmem>>, vector<1x128xf32>
    %5 = vector.broadcast %4 : vector<1x128xf32> to vector<128x128xf32>
    %6 = arith.addf %3, %5 : vector<128x128xf32>
    %7 = vector.shape_cast %6 : vector<128x128xf32> to vector<8x2x4x2x128xf32>
    %cst_7 = arith.constant dense<0xFF800000> : vector<8x2x4x128xf32>
    %8 = vector.multi_reduction <maximumf>, %7, %cst_7 [3] : vector<8x2x4x2x128xf32> to vector<8x2x4x128xf32>
    %cst_8 = arith.constant dense<0xFF800000> : vector<8x4x128xf32>
    %9 = vector.multi_reduction <maximumf>, %8, %cst_8 [1] : vector<8x2x4x128xf32> to vector<8x4x128xf32>
    %c0_9 = arith.constant 0 : index
    %c0_10 = arith.constant 0 : index
    %c0_11 = arith.constant 0 : index
    %10 = vector.load %arg4[%c0_9, %c0_10, %c0_11] : memref<8x4x128xf32, #tpu.memory_space<vmem>>, vector<8x4x128xf32>
    tpu.vector_store %arg4[%c0_9, %c0_10, %c0_11], %9 {strides = array<i32>} : memref<8x4x128xf32, #tpu.memory_space<vmem>>, vector<8x4x128xf32>,
    return
  }
  func.func @transform_0(%arg0: i32) -> (i32, i32, i32, i32) {
    %c0_i32 = arith.constant 0 : i32
    %c0_i32_0 = arith.constant 0 : i32
    %c0_i32_1 = arith.constant 0 : i32
    %c0_i32_2 = arith.constant 0 : i32
    return %arg0, %c0_i32, %c0_i32_0, %c0_i32_1 : i32, i32, i32, i32
  }
  func.func @transform_1(%arg0: i32) -> (i32, i32) {
    %c0_i32 = arith.constant 0 : i32
    %c0_i32_0 = arith.constant 0 : i32
    %c0_i32_1 = arith.constant 0 : i32
    return %c0_i32, %c0_i32_0 : i32, i32
  }
  func.func @transform_2(%arg0: i32) -> (i32, i32) {
    %c0_i32 = arith.constant 0 : i32
    %c0_i32_0 = arith.constant 0 : i32
    %c0_i32_1 = arith.constant 0 : i32
    return %c0_i32, %c0_i32_0 : i32, i32
  }
  func.func @transform_3(%arg0: i32) -> (i32, i32, i32) {
    %c0_i32 = arith.constant 0 : i32
    %c0_i32_0 = arith.constant 0 : i32
    %c0_i32_1 = arith.constant 0 : i32
    return %arg0, %c0_i32, %c0_i32_0 : i32, i32, i32
  }
}

</mosaic_0001>

<llo_original>
// kernel: _lambda_.5
$region0: #{_lambda_.5}
  #allocation0 [shape = 'u32[]', space=smem, size = 0x4, offset = 0x4, fixed_abs, tag = 'smem constant byte address 0x4 - core index']
  #allocation1 [shape = 'u32[72,128]{1,0:T(1,128)}', space=vmem, size = 0x9000, scoped, tag = 'internal scratch']
  %s0 = inlined_call_operand.vmem [shape: f32[4,2,4,128], index: 0, kind: input, shape index: {}]
  %s1 = inlined_call_operand.vmem [shape: f32[128,128], index: 1, kind: input, shape index: {}]
  %s2 = inlined_call_operand.vmem [shape: f32[1,128], index: 2, kind: input, shape index: {}]
  %s3 = inlined_call_operand.vmem [shape: f32[4,2,128], index: 3, kind: output, shape index: {}]
  %s4 = sld [smem:[#allocation0]]
  $region22: #{_lambda_.5} parent=0
    _
  %s6 = ssub.s32 1, %s4
  %s7 = scalar_select 0, %s6, %s4
  // Predicated region
  $region2: #{_lambda_.5} parent=0 // pred_check
    _
  $region3: #{_lambda_.5} parent=0 // pred_check_branch
    %9 = sbr.rel (0) target = $region5
  $region4: #{_lambda_.5} parent=0 // pred_region
    _
  $region5: #{_lambda_.5} parent=0 // pred_fallthru
    _
  // Predicated region
  $region6: #{_lambda_.5} parent=0 // pred_check
    _
  $region7: #{_lambda_.5} parent=0 // pred_check_branch
    %11 = sbr.rel (0) target = $region9
  $region8: #{_lambda_.5} parent=0 // pred_region
    _
  $region9: #{_lambda_.5} parent=0 // pred_fallthru
    _
  // Predicated region
  $region10: #{_lambda_.5} parent=0 // pred_check
    _
  $region11: #{_lambda_.5} parent=0 // pred_check_branch
    %13 = sbr.rel (0) target = $region13
  $region12: #{_lambda_.5} parent=0 // pred_region
    _
  $region13: #{_lambda_.5} parent=0 // pred_fallthru
    _
  %v14 = vld [vmem:[%s0] sm:$0xf]
  %v15 = vld [vmem:[%s0 + $0x4] sm:$0xf]
  %v16 = vld [vmem:[%s0 + $0x8] sm:$0xf]
  %v17 = vld [vmem:[%s0 + $0xc] sm:$0xf]
  %v18 = vld [vmem:[%s0 + $0x10] sm:$0xf]
  %v19 = vld [vmem:[%s0 + $0x14] sm:$0xf]
  %v20 = vld [vmem:[%s0 + $0x18] sm:$0xf]
  %v21 = vld [vmem:[%s0 + $0x1c] sm:$0xf]
  %v22 = vld [vmem:[%s1] sm:$0xff]
  %v23 = vld [vmem:[%s1 + $0x8] sm:$0xff]
  %v24 = vld [vmem:[%s1 + $0x10] sm:$0xff]
  %v25 = vld [vmem:[%s1 + $0x18] sm:$0xff]
  %v26 = vld [vmem:[%s1 + $0x20] sm:$0xff]
  %v27 = vld [vmem:[%s1 + $0x28] sm:$0xff]
  %v28 = vld [vmem:[%s1 + $0x30] sm:$0xff]
  %v29 = vld [vmem:[%s1 + $0x38] sm:$0xff]
  %v30 = vld [vmem:[%s1 + $0x40] sm:$0xff]
  %v31 = vld [vmem:[%s1 + $0x48] sm:$0xff]
  %v32 = vld [vmem:[%s1 + $0x50] sm:$0xff]
  %v33 = vld [vmem:[%s1 + $0x58] sm:$0xff]
  %v34 = vld [vmem:[%s1 + $0x60] sm:$0xff]
  %v35 = vld [vmem:[%s1 + $0x68] sm:$0xff]
  %v36 = vld [vmem:[%s1 + $0x70] sm:$0xff]
  %v37 = vld [vmem:[%s1 + $0x78] sm:$0xff]
  %v38 = vld [vmem:[%s2] sm:$0x1]
  %v40 = vperm.slane %v38, 0
  %50 = vst [vmem:[#allocation1] ss:$2 sm:$0xff] %v14
  %s51 = scalar_lea.vmem [#allocation1], 1
  %52 = vst [vmem:[%s51] ss:$2 sm:$0xff] %v15
  %s53 = scalar_lea.vmem [#allocation1], 16
  %54 = vst [vmem:[%s53] ss:$2 sm:$0xff] %v16
  %s55 = scalar_lea.vmem [#allocation1], 17
  %56 = vst [vmem:[%s55] ss:$2 sm:$0xff] %v17
  %s57 = scalar_lea.vmem [#allocation1], 32
  %58 = vst [vmem:[%s57] ss:$2 sm:$0xff] %v18
  %s59 = scalar_lea.vmem [#allocation1], 33
  %60 = vst [vmem:[%s59] ss:$2 sm:$0xff] %v19
  %s61 = scalar_lea.vmem [#allocation1], 48
  %62 = vst [vmem:[%s61] ss:$2 sm:$0xff] %v20
  %s63 = scalar_lea.vmem [#allocation1], 49
  %64 = vst [vmem:[%s63] ss:$2 sm:$0xff] %v21
  %v65 = vld.sshfl [vmem:[#allocation1] sm:$0xff pattern:$0x75316420]
  %v66 = vld.sshfl [vmem:[#allocation1 + $0x10] sm:$0xff pattern:$0x75316420]
  %v67 = vld.sshfl [vmem:[#allocation1 + $0x20] sm:$0xff pattern:$0x75316420]
  %v68 = vld.sshfl [vmem:[#allocation1 + $0x30] sm:$0xff pattern:$0x75316420]
  %73 = vmatpush.msra.mxu0 %v37
  %74 = vmatpush.msra.mxu0 %v36
  %75 = vmatpush.msra.mxu0 %v35
  %76 = vmatpush.msra.mxu0 %v34
  %77 = vmatpush.msra.mxu0 %v33
  %78 = vmatpush.msra.mxu0 %v32
  %79 = vmatpush.msra.mxu0 %v31
  %80 = vmatpush.msra.mxu0 %v30
  %81 = vmatpush.msra.mxu0 %v29
  %82 = vmatpush.msra.mxu0 %v28
  %83 = vmatpush.msra.mxu0 %v27
  %84 = vmatpush.msra.mxu0 %v26
  %85 = vmatpush.msra.mxu0 %v25
  %86 = vmatpush.msra.mxu0 %v24
  %87 = vmatpush.msra.mxu0 %v23
  %88 = vmatpush.msra.mxu0 %v22
  %89 = vmatmul.f32.gmra.mxu0 %v65
  %v90 = vpop.f32.mrf.mxu0
  %v91 = vadd.f32 %v40, %v90
  %92 = vmatmul.f32.gmra.mxu0 %v66
  %v93 = vpop.f32.mrf.mxu0
  %v94 = vadd.f32 %v40, %v93
  %95 = vmatmul.f32.gmra.mxu0 %v67
  %v96 = vpop.f32.mrf.mxu0
  %v97 = vadd.f32 %v40, %v96
  %98 = vmatmul.f32.gmra.mxu0 %v68
  %v99 = vpop.f32.mrf.mxu0
  %v100 = vadd.f32 %v40, %v99
  %101 = vdwg.mxu0
  %v106 = vrot.slane %v91, 2
  %v107 = vrot.slane %v91, 4
  %v108 = vrot.slane %v91, 6
  %v109 = vrot.slane %v94, 2
  %v110 = vrot.slane %v94, 4
  %v111 = vrot.slane %v94, 6
  %v112 = vrot.slane %v97, 2
  %v113 = vrot.slane %v97, 4
  %v114 = vrot.slane %v97, 6
  %v115 = vrot.slane %v100, 2
  %v116 = vrot.slane %v100, 4
  %v117 = vrot.slane %v100, 6
  %vm130 = vcmask 1041408
  %v131 = vsel %vm130, %v91, -inf
  %v132 = vrot.slane %v131, 4
  %v133 = vmax.f32 %v131, %v132
  %v134 = vrot.slane %v133, 2
  %v135 = vmax.f32 %v133, %v134
  %v136 = vrot.slane %v135, 1
  %v137 = vmax.f32 %v135, %v136
  %v138 = vsel %vm130, %v106, -inf
  %v139 = vrot.slane %v138, 4
  %v140 = vmax.f32 %v138, %v139
  %v141 = vrot.slane %v140, 2
  %v142 = vmax.f32 %v140, %v141
  %v143 = vrot.slane %v142, 1
  %v144 = vmax.f32 %v142, %v143
  %v145 = vsel %vm130, %v107, -inf
  %v146 = vrot.slane %v145, 4
  %v147 = vmax.f32 %v145, %v146
  %v148 = vrot.slane %v147, 2
  %v149 = vmax.f32 %v147, %v148
  %v150 = vrot.slane %v149, 1
  %v151 = vmax.f32 %v149, %v150
  %v152 = vsel %vm130, %v108, -inf
  %v153 = vrot.slane %v152, 4
  %v154 = vmax.f32 %v152, %v153
  %v155 = vrot.slane %v154, 2
  %v156 = vmax.f32 %v154, %v155
  %v157 = vrot.slane %v156, 1
  %v158 = vmax.f32 %v156, %v157
  %v159 = vsel %vm130, %v94, -inf
  %v160 = vrot.slane %v159, 4
  %v161 = vmax.f32 %v159, %v160
  %v162 = vrot.slane %v161, 2
  %v163 = vmax.f32 %v161, %v162
  %v164 = vrot.slane %v163, 1
  %v165 = vmax.f32 %v163, %v164
  %v166 = vsel %vm130, %v109, -inf
  %v167 = vrot.slane %v166, 4
  %v168 = vmax.f32 %v166, %v167
  %v169 = vrot.slane %v168, 2
  %v170 = vmax.f32 %v168, %v169
  %v171 = vrot.slane %v170, 1
  %v172 = vmax.f32 %v170, %v171
  %v173 = vsel %vm130, %v110, -inf
  %v174 = vrot.slane %v173, 4
  %v175 = vmax.f32 %v173, %v174
  %v176 = vrot.slane %v175, 2
  %v177 = vmax.f32 %v175, %v176
  %v178 = vrot.slane %v177, 1
  %v179 = vmax.f32 %v177, %v178
  %v180 = vsel %vm130, %v111, -inf
  %v181 = vrot.slane %v180, 4
  %v182 = vmax.f32 %v180, %v181
  %v183 = vrot.slane %v182, 2
  %v184 = vmax.f32 %v182, %v183
  %v185 = vrot.slane %v184, 1
  %v186 = vmax.f32 %v184, %v185
  %v187 = vsel %vm130, %v97, -inf
  %v188 = vrot.slane %v187, 4
  %v189 = vmax.f32 %v187, %v188
  %v190 = vrot.slane %v189, 2
  %v191 = vmax.f32 %v189, %v190
  %v192 = vrot.slane %v191, 1
  %v193 = vmax.f32 %v191, %v192
  %v194 = vsel %vm130, %v112, -inf
  %v195 = vrot.slane %v194, 4
  %v196 = vmax.f32 %v194, %v195
  %v197 = vrot.slane %v196, 2
  %v198 = vmax.f32 %v196, %v197
  %v199 = vrot.slane %v198, 1
  %v200 = vmax.f32 %v198, %v199
  %v201 = vsel %vm130, %v113, -inf
  %v202 = vrot.slane %v201, 4
  %v203 = vmax.f32 %v201, %v202
  %v204 = vrot.slane %v203, 2
  %v205 = vmax.f32 %v203, %v204
  %v206 = vrot.slane %v205, 1
  %v207 = vmax.f32 %v205, %v206
  %v208 = vsel %vm130, %v114, -inf
  %v209 = vrot.slane %v208, 4
  %v210 = vmax.f32 %v208, %v209
  %v211 = vrot.slane %v210, 2
  %v212 = vmax.f32 %v210, %v211
  %v213 = vrot.slane %v212, 1
  %v214 = vmax.f32 %v212, %v213
  %v215 = vsel %vm130, %v100, -inf
  %v216 = vrot.slane %v215, 4
  %v217 = vmax.f32 %v215, %v216
  %v218 = vrot.slane %v217, 2
  %v219 = vmax.f32 %v217, %v218
  %v220 = vrot.slane %v219, 1
  %v221 = vmax.f32 %v219, %v220
  %v222 = vsel %vm130, %v115, -inf
  %v223 = vrot.slane %v222, 4
  %v224 = vmax.f32 %v222, %v223
  %v225 = vrot.slane %v224, 2
  %v226 = vmax.f32 %v224, %v225
  %v227 = vrot.slane %v226, 1
  %v228 = vmax.f32 %v226, %v227
  %v229 = vsel %vm130, %v116, -inf
  %v230 = vrot.slane %v229, 4
  %v231 = vmax.f32 %v229, %v230
  %v232 = vrot.slane %v231, 2
  %v233 = vmax.f32 %v231, %v232
  %v234 = vrot.slane %v233, 1
  %v235 = vmax.f32 %v233, %v234
  %v236 = vsel %vm130, %v117, -inf
  %v237 = vrot.slane %v236, 4
  %v238 = vmax.f32 %v236, %v237
  %v239 = vrot.slane %v238, 2
  %v240 = vmax.f32 %v238, %v239
  %v241 = vrot.slane %v240, 1
  %v242 = vmax.f32 %v240, %v241
  %v243 = vmax.f32 %v137, %v151
  %v244 = vmax.f32 %v144, %v158
  %v245 = vmax.f32 %v165, %v179
  %v246 = vmax.f32 %v172, %v186
  %v247 = vmax.f32 %v193, %v207
  %v248 = vmax.f32 %v200, %v214
  %v249 = vmax.f32 %v221, %v235
  %v250 = vmax.f32 %v228, %v242
  %vm259 = vcmask 1041409
  %v260 = vsel %vm259, %v244, %v243
  %v261 = vsel %vm259, %v246, %v245
  %v262 = vsel %vm259, %v248, %v247
  %v263 = vsel %vm259, %v250, %v249
  %268 = vst [vmem:[%s3] sm:$0x3] %v260
  %269 = vst [vmem:[%s3 + $0x2] sm:$0x3] %v261
  %270 = vst [vmem:[%s3 + $0x4] sm:$0x3] %v262
  %271 = vst [vmem:[%s3 + $0x6] sm:$0x3] %v263
  // Predicated region
  $region14: #{_lambda_.5} parent=0 // pred_check
    _
  $region15: #{_lambda_.5} parent=0 // pred_check_branch
    %273 = sbr.rel (0) target = $region17
  $region16: #{_lambda_.5} parent=0 // pred_region
    _
  $region17: #{_lambda_.5} parent=0 // pred_fallthru
    _
  // Predicated region
  $region18: #{_lambda_.5} parent=0 // pred_check
    _
  $region19: #{_lambda_.5} parent=0 // pred_check_branch
    %275 = sbr.rel (0) target = $region21
  $region20: #{_lambda_.5} parent=0 // pred_region
    _
  $region21: #{_lambda_.5} parent=0 // pred_fallthru
    _

// kernel: _lambda_.4
$region0: #{_lambda_.4}
  #allocation0 [shape = 'u32[]', space=smem, size = 0x4, offset = 0x4, fixed_abs, tag = 'smem constant byte address 0x4 - core index']
  #allocation1 [shape = 'u32[72,128]{1,0:T(1,128)}', space=vmem, size = 0x9000, scoped, tag = 'internal scratch']
  %s0 = inlined_call_operand.vmem [shape: f32[8,2,8,128], index: 0, kind: input, shape index: {}]
  %s1 = inlined_call_operand.vmem [shape: f32[128,128], index: 1, kind: input, shape index: {}]
  %s2 = inlined_call_operand.vmem [shape: f32[1,128], index: 2, kind: input, shape index: {}]
  %s3 = inlined_call_operand.vmem [shape: f32[8,4,128], index: 3, kind: output, shape index: {}]
  %s4 = sld [smem:[#allocation0]]
  $region22: #{_lambda_.4} parent=0
    _
  %s6 = ssub.s32 1, %s4
  %s7 = scalar_select 0, %s6, %s4
  // Predicated region
  $region2: #{_lambda_.4} parent=0 // pred_check
    _
  $region3: #{_lambda_.4} parent=0 // pred_check_branch
    %9 = sbr.rel (0) target = $region5
  $region4: #{_lambda_.4} parent=0 // pred_region
    _
  $region5: #{_lambda_.4} parent=0 // pred_fallthru
    _
  // Predicated region
  $region6: #{_lambda_.4} parent=0 // pred_check
    _
  $region7: #{_lambda_.4} parent=0 // pred_check_branch
    %11 = sbr.rel (0) target = $region9
  $region8: #{_lambda_.4} parent=0 // pred_region
    _
  $region9: #{_lambda_.4} parent=0 // pred_fallthru
    _
  // Predicated region
  $region10: #{_lambda_.4} parent=0 // pred_check
    _
  $region11: #{_lambda_.4} parent=0 // pred_check_branch
    %13 = sbr.rel (0) target = $region13
  $region12: #{_lambda_.4} parent=0 // pred_region
    _
  $region13: #{_lambda_.4} parent=0 // pred_fallthru
    _
  %v14 = vld [vmem:[%s0] sm:$0xff]
  %v15 = vld [vmem:[%s0 + $0x8] sm:$0xff]
  %v16 = vld [vmem:[%s0 + $0x10] sm:$0xff]
  %v17 = vld [vmem:[%s0 + $0x18] sm:$0xff]
  %v18 = vld [vmem:[%s0 + $0x20] sm:$0xff]
  %v19 = vld [vmem:[%s0 + $0x28] sm:$0xff]
  %v20 = vld [vmem:[%s0 + $0x30] sm:$0xff]
  %v21 = vld [vmem:[%s0 + $0x38] sm:$0xff]
  %v22 = vld [vmem:[%s0 + $0x40] sm:$0xff]
  %v23 = vld [vmem:[%s0 + $0x48] sm:$0xff]
  %v24 = vld [vmem:[%s0 + $0x50] sm:$0xff]
  %v25 = vld [vmem:[%s0 + $0x58] sm:$0xff]
  %v26 = vld [vmem:[%s0 + $0x60] sm:$0xff]
  %v27 = vld [vmem:[%s0 + $0x68] sm:$0xff]
  %v28 = vld [vmem:[%s0 + $0x70] sm:$0xff]
  %v29 = vld [vmem:[%s0 + $0x78] sm:$0xff]
  %v30 = vld [vmem:[%s1] sm:$0xff]
  %v31 = vld [vmem:[%s1 + $0x8] sm:$0xff]
  %v32 = vld [vmem:[%s1 + $0x10] sm:$0xff]
  %v33 = vld [vmem:[%s1 + $0x18] sm:$0xff]
  %v34 = vld [vmem:[%s1 + $0x20] sm:$0xff]
  %v35 = vld [vmem:[%s1 + $0x28] sm:$0xff]
  %v36 = vld [vmem:[%s1 + $0x30] sm:$0xff]
  %v37 = vld [vmem:[%s1 + $0x38] sm:$0xff]
  %v38 = vld [vmem:[%s1 + $0x40] sm:$0xff]
  %v39 = vld [vmem:[%s1 + $0x48] sm:$0xff]
  %v40 = vld [vmem:[%s1 + $0x50] sm:$0xff]
  %v41 = vld [vmem:[%s1 + $0x58] sm:$0xff]
  %v42 = vld [vmem:[%s1 + $0x60] sm:$0xff]
  %v43 = vld [vmem:[%s1 + $0x68] sm:$0xff]
  %v44 = vld [vmem:[%s1 + $0x70] sm:$0xff]
  %v45 = vld [vmem:[%s1 + $0x78] sm:$0xff]
  %v46 = vld [vmem:[%s2] sm:$0x1]
  %v48 = vperm.slane %v46, 0
  %50 = vmatpush.msra.mxu0 %v45
  %51 = vmatpush.msra.mxu0 %v44
  %52 = vmatpush.msra.mxu0 %v43
  %53 = vmatpush.msra.mxu0 %v42
  %54 = vmatpush.msra.mxu0 %v41
  %55 = vmatpush.msra.mxu0 %v40
  %56 = vmatpush.msra.mxu0 %v39
  %57 = vmatpush.msra.mxu0 %v38
  %58 = vmatpush.msra.mxu0 %v37
  %59 = vmatpush.msra.mxu0 %v36
  %60 = vmatpush.msra.mxu0 %v35
  %61 = vmatpush.msra.mxu0 %v34
  %62 = vmatpush.msra.mxu0 %v33
  %63 = vmatpush.msra.mxu0 %v32
  %64 = vmatpush.msra.mxu0 %v31
  %65 = vmatpush.msra.mxu0 %v30
  %66 = vmatmul.f32.gmra.mxu0 %v14
  %v67 = vpop.f32.mrf.mxu0
  %v68 = vadd.f32 %v48, %v67
  %69 = vmatmul.f32.gmra.mxu0 %v15
  %v70 = vpop.f32.mrf.mxu0
  %v71 = vadd.f32 %v48, %v70
  %72 = vmatmul.f32.gmra.mxu0 %v16
  %v73 = vpop.f32.mrf.mxu0
  %v74 = vadd.f32 %v48, %v73
  %75 = vmatmul.f32.gmra.mxu0 %v17
  %v76 = vpop.f32.mrf.mxu0
  %v77 = vadd.f32 %v48, %v76
  %78 = vmatmul.f32.gmra.mxu0 %v18
  %v79 = vpop.f32.mrf.mxu0
  %v80 = vadd.f32 %v48, %v79
  %81 = vmatmul.f32.gmra.mxu0 %v19
  %v82 = vpop.f32.mrf.mxu0
  %v83 = vadd.f32 %v48, %v82
  %84 = vmatmul.f32.gmra.mxu0 %v20
  %v85 = vpop.f32.mrf.mxu0
  %v86 = vadd.f32 %v48, %v85
  %87 = vmatmul.f32.gmra.mxu0 %v21
  %v88 = vpop.f32.mrf.mxu0
  %v89 = vadd.f32 %v48, %v88
  %90 = vmatmul.f32.gmra.mxu0 %v22
  %v91 = vpop.f32.mrf.mxu0
  %v92 = vadd.f32 %v48, %v91
  %93 = vmatmul.f32.gmra.mxu0 %v23
  %v94 = vpop.f32.mrf.mxu0
  %v95 = vadd.f32 %v48, %v94
  %96 = vmatmul.f32.gmra.mxu0 %v24
  %v97 = vpop.f32.mrf.mxu0
  %v98 = vadd.f32 %v48, %v97
  %99 = vmatmul.f32.gmra.mxu0 %v25
  %v100 = vpop.f32.mrf.mxu0
  %v101 = vadd.f32 %v48, %v100
  %102 = vmatmul.f32.gmra.mxu0 %v26
  %v103 = vpop.f32.mrf.mxu0
  %v104 = vadd.f32 %v48, %v103
  %105 = vmatmul.f32.gmra.mxu0 %v27
  %v106 = vpop.f32.mrf.mxu0
  %v107 = vadd.f32 %v48, %v106
  %108 = vmatmul.f32.gmra.mxu0 %v28
  %v109 = vpop.f32.mrf.mxu0
  %v110 = vadd.f32 %v48, %v109
  %111 = vmatmul.f32.gmra.mxu0 %v29
  %v112 = vpop.f32.mrf.mxu0
  %v113 = vadd.f32 %v48, %v112
  %114 = vdwg.mxu0
  %v131 = vrot.slane %v68, 2
  %v132 = vrot.slane %v68, 4
  %v133 = vrot.slane %v68, 6
  %v134 = vrot.slane %v71, 2
  %v135 = vrot.slane %v71, 4
  %v136 = vrot.slane %v71, 6
  %v137 = vrot.slane %v74, 2
  %v138 = vrot.slane %v74, 4
  %v139 = vrot.slane %v74, 6
  %v140 = vrot.slane %v77, 2
  %v141 = vrot.slane %v77, 4
  %v142 = vrot.slane %v77, 6
  %v143 = vrot.slane %v80, 2
  %v144 = vrot.slane %v80, 4
  %v145 = vrot.slane %v80, 6
  %v146 = vrot.slane %v83, 2
  %v147 = vrot.slane %v83, 4
  %v148 = vrot.slane %v83, 6
  %v149 = vrot.slane %v86, 2
  %v150 = vrot.slane %v86, 4
  %v151 = vrot.slane %v86, 6
  %v152 = vrot.slane %v89, 2
  %v153 = vrot.slane %v89, 4
  %v154 = vrot.slane %v89, 6
  %v155 = vrot.slane %v92, 2
  %v156 = vrot.slane %v92, 4
  %v157 = vrot.slane %v92, 6
  %v158 = vrot.slane %v95, 2
  %v159 = vrot.slane %v95, 4
  %v160 = vrot.slane %v95, 6
  %v161 = vrot.slane %v98, 2
  %v162 = vrot.slane %v98, 4
  %v163 = vrot.slane %v98, 6
  %v164 = vrot.slane %v101, 2
  %v165 = vrot.slane %v101, 4
  %v166 = vrot.slane %v101, 6
  %v167 = vrot.slane %v104, 2
  %v168 = vrot.slane %v104, 4
  %v169 = vrot.slane %v104, 6
  %v170 = vrot.slane %v107, 2
  %v171 = vrot.slane %v107, 4
  %v172 = vrot.slane %v107, 6
  %v173 = vrot.slane %v110, 2
  %v174 = vrot.slane %v110, 4
  %v175 = vrot.slane %v110, 6
  %v176 = vrot.slane %v113, 2
  %v177 = vrot.slane %v113, 4
  %v178 = vrot.slane %v113, 6
  %vm227 = vcmask 1041408
  %v228 = vsel %vm227, %v68, -inf
  %v229 = vrot.slane %v228, 4
  %v230 = vmax.f32 %v228, %v229
  %v231 = vrot.slane %v230, 2
  %v232 = vmax.f32 %v230, %v231
  %v233 = vrot.slane %v232, 1
  %v234 = vmax.f32 %v232, %v233
  %v235 = vsel %vm227, %v131, -inf
  %v236 = vrot.slane %v235, 4
  %v237 = vmax.f32 %v235, %v236
  %v238 = vrot.slane %v237, 2
  %v239 = vmax.f32 %v237, %v238
  %v240 = vrot.slane %v239, 1
  %v241 = vmax.f32 %v239, %v240
  %v242 = vsel %vm227, %v132, -inf
  %v243 = vrot.slane %v242, 4
  %v244 = vmax.f32 %v242, %v243
  %v245 = vrot.slane %v244, 2
  %v246 = vmax.f32 %v244, %v245
  %v247 = vrot.slane %v246, 1
  %v248 = vmax.f32 %v246, %v247
  %v249 = vsel %vm227, %v133, -inf
  %v250 = vrot.slane %v249, 4
  %v251 = vmax.f32 %v249, %v250
  %v252 = vrot.slane %v251, 2
  %v253 = vmax.f32 %v251, %v252
  %v254 = vrot.slane %v253, 1
  %v255 = vmax.f32 %v253, %v254
  %v256 = vsel %vm227, %v71, -inf
  %v257 = vrot.slane %v256, 4
  %v258 = vmax.f32 %v256, %v257
  %v259 = vrot.slane %v258, 2
  %v260 = vmax.f32 %v258, %v259
  %v261 = vrot.slane %v260, 1
  %v262 = vmax.f32 %v260, %v261
  %v263 = vsel %vm227, %v134, -inf
  %v264 = vrot.slane %v263, 4
  %v265 = vmax.f32 %v263, %v264
  %v266 = vrot.slane %v265, 2
  %v267 = vmax.f32 %v265, %v266
  %v268 = vrot.slane %v267, 1
  %v269 = vmax.f32 %v267, %v268
  %v270 = vsel %vm227, %v135, -inf
  %v271 = vrot.slane %v270, 4
  %v272 = vmax.f32 %v270, %v271
  %v273 = vrot.slane %v272, 2
  %v274 = vmax.f32 %v272, %v273
  %v275 = vrot.slane %v274, 1
  %v276 = vmax.f32 %v274, %v275
  %v277 = vsel %vm227, %v136, -inf
  %v278 = vrot.slane %v277, 4
  %v279 = vmax.f32 %v277, %v278
  %v280 = vrot.slane %v279, 2
  %v281 = vmax.f32 %v279, %v280
  %v282 = vrot.slane %v281, 1
  %v283 = vmax.f32 %v281, %v282
  %v284 = vsel %vm227, %v74, -inf
  %v285 = vrot.slane %v284, 4
  %v286 = vmax.f32 %v284, %v285
  %v287 = vrot.slane %v286, 2
  %v288 = vmax.f32 %v286, %v287
  %v289 = vrot.slane %v288, 1
  %v290 = vmax.f32 %v288, %v289
  %v291 = vsel %vm227, %v137, -inf
  %v292 = vrot.slane %v291, 4
  %v293 = vmax.f32 %v291, %v292
  %v294 = vrot.slane %v293, 2
  %v295 = vmax.f32 %v293, %v294
  %v296 = vrot.slane %v295, 1
  %v297 = vmax.f32 %v295, %v296
  %v298 = vsel %vm227, %v138, -inf
  %v299 = vrot.slane %v298, 4
  %v300 = vmax.f32 %v298, %v299
  %v301 = vrot.slane %v300, 2
  %v302 = vmax.f32 %v300, %v301
  %v303 = vrot.slane %v302, 1
  %v304 = vmax.f32 %v302, %v303
  %v305 = vsel %vm227, %v139, -inf
  %v306 = vrot.slane %v305, 4
  %v307 = vmax.f32 %v305, %v306
  %v308 = vrot.slane %v307, 2
  %v309 = vmax.f32 %v307, %v308
  %v310 = vrot.slane %v309, 1
  %v311 = vmax.f32 %v309, %v310
  %v312 = vsel %vm227, %v77, -inf
  %v313 = vrot.slane %v312, 4
  %v314 = vmax.f32 %v312, %v313
  %v315 = vrot.slane %v314, 2
  %v316 = vmax.f32 %v314, %v315
  %v317 = vrot.slane %v316, 1
  %v318 = vmax.f32 %v316, %v317
  %v319 = vsel %vm227, %v140, -inf
  %v320 = vrot.slane %v319, 4
  %v321 = vmax.f32 %v319, %v320
  %v322 = vrot.slane %v321, 2
  %v323 = vmax.f32 %v321, %v322
  %v324 = vrot.slane %v323, 1
  %v325 = vmax.f32 %v323, %v324
  %v326 = vsel %vm227, %v141, -inf
  %v327 = vrot.slane %v326, 4
  %v328 = vmax.f32 %v326, %v327
  %v329 = vrot.slane %v328, 2
  %v330 = vmax.f32 %v328, %v329
  %v331 = vrot.slane %v330, 1
  %v332 = vmax.f32 %v330, %v331
  %v333 = vsel %vm227, %v142, -inf
  %v334 = vrot.slane %v333, 4
  %v335 = vmax.f32 %v333, %v334
  %v336 = vrot.slane %v335, 2
  %v337 = vmax.f32 %v335, %v336
  %v338 = vrot.slane %v337, 1
  %v339 = vmax.f32 %v337, %v338
  %v340 = vsel %vm227, %v80, -inf
  %v341 = vrot.slane %v340, 4
  %v342 = vmax.f32 %v340, %v341
  %v343 = vrot.slane %v342, 2
  %v344 = vmax.f32 %v342, %v343
  %v345 = vrot.slane %v344, 1
  %v346 = vmax.f32 %v344, %v345
  %v347 = vsel %vm227, %v143, -inf
  %v348 = vrot.slane %v347, 4
  %v349 = vmax.f32 %v347, %v348
  %v350 = vrot.slane %v349, 2
  %v351 = vmax.f32 %v349, %v350
  %v352 = vrot.slane %v351, 1
  %v353 = vmax.f32 %v351, %v352
  %v354 = vsel %vm227, %v144, -inf
  %v355 = vrot.slane %v354, 4
  %v356 = vmax.f32 %v354, %v355
  %v357 = vrot.slane %v356, 2
  %v358 = vmax.f32 %v356, %v357
  %v359 = vrot.slane %v358, 1
  %v360 = vmax.f32 %v358, %v359
  %v361 = vsel %vm227, %v145, -inf
  %v362 = vrot.slane %v361, 4
  %v363 = vmax.f32 %v361, %v362
  %v364 = vrot.slane %v363, 2
  %v365 = vmax.f32 %v363, %v364
  %v366 = vrot.slane %v365, 1
  %v367 = vmax.f32 %v365, %v366
  %v368 = vsel %vm227, %v83, -inf
  %v369 = vrot.slane %v368, 4
  %v370 = vmax.f32 %v368, %v369
  %v371 = vrot.slane %v370, 2
  %v372 = vmax.f32 %v370, %v371
  %v373 = vrot.slane %v372, 1
  %v374 = vmax.f32 %v372, %v373
  %v375 = vsel %vm227, %v146, -inf
  %v376 = vrot.slane %v375, 4
  %v377 = vmax.f32 %v375, %v376
  %v378 = vrot.slane %v377, 2
  %v379 = vmax.f32 %v377, %v378
  %v380 = vrot.slane %v379, 1
  %v381 = vmax.f32 %v379, %v380
  %v382 = vsel %vm227, %v147, -inf
  %v383 = vrot.slane %v382, 4
  %v384 = vmax.f32 %v382, %v383
  %v385 = vrot.slane %v384, 2
  %v386 = vmax.f32 %v384, %v385
  %v387 = vrot.slane %v386, 1
  %v388 = vmax.f32 %v386, %v387
  %v389 = vsel %vm227, %v148, -inf
  %v390 = vrot.slane %v389, 4
  %v391 = vmax.f32 %v389, %v390
  %v392 = vrot.slane %v391, 2
  %v393 = vmax.f32 %v391, %v392
  %v394 = vrot.slane %v393, 1
  %v395 = vmax.f32 %v393, %v394
  %v396 = vsel %vm227, %v86, -inf
  %v397 = vrot.slane %v396, 4
  %v398 = vmax.f32 %v396, %v397
  %v399 = vrot.slane %v398, 2
  %v400 = vmax.f32 %v398, %v399
  %v401 = vrot.slane %v400, 1
  %v402 = vmax.f32 %v400, %v401
  %v403 = vsel %vm227, %v149, -inf
  %v404 = vrot.slane %v403, 4
  %v405 = vmax.f32 %v403, %v404
  %v406 = vrot.slane %v405, 2
  %v407 = vmax.f32 %v405, %v406
  %v408 = vrot.slane %v407, 1
  %v409 = vmax.f32 %v407, %v408
  %v410 = vsel %vm227, %v150, -inf
  %v411 = vrot.slane %v410, 4
  %v412 = vmax.f32 %v410, %v411
  %v413 = vrot.slane %v412, 2
  %v414 = vmax.f32 %v412, %v413
  %v415 = vrot.slane %v414, 1
  %v416 = vmax.f32 %v414, %v415
  %v417 = vsel %vm227, %v151, -inf
  %v418 = vrot.slane %v417, 4
  %v419 = vmax.f32 %v417, %v418
  %v420 = vrot.slane %v419, 2
  %v421 = vmax.f32 %v419, %v420
  %v422 = vrot.slane %v421, 1
  %v423 = vmax.f32 %v421, %v422
  %v424 = vsel %vm227, %v89, -inf
  %v425 = vrot.slane %v424, 4
  %v426 = vmax.f32 %v424, %v425
  %v427 = vrot.slane %v426, 2
  %v428 = vmax.f32 %v426, %v427
  %v429 = vrot.slane %v428, 1
  %v430 = vmax.f32 %v428, %v429
  %v431 = vsel %vm227, %v152, -inf
  %v432 = vrot.slane %v431, 4
  %v433 = vmax.f32 %v431, %v432
  %v434 = vrot.slane %v433, 2
  %v435 = vmax.f32 %v433, %v434
  %v436 = vrot.slane %v435, 1
  %v437 = vmax.f32 %v435, %v436
  %v438 = vsel %vm227, %v153, -inf
  %v439 = vrot.slane %v438, 4
  %v440 = vmax.f32 %v438, %v439
  %v441 = vrot.slane %v440, 2
  %v442 = vmax.f32 %v440, %v441
  %v443 = vrot.slane %v442, 1
  %v444 = vmax.f32 %v442, %v443
  %v445 = vsel %vm227, %v154, -inf
  %v446 = vrot.slane %v445, 4
  %v447 = vmax.f32 %v445, %v446
  %v448 = vrot.slane %v447, 2
  %v449 = vmax.f32 %v447, %v448
  %v450 = vrot.slane %v449, 1
  %v451 = vmax.f32 %v449, %v450
  %v452 = vsel %vm227, %v92, -inf
  %v453 = vrot.slane %v452, 4
  %v454 = vmax.f32 %v452, %v453
  %v455 = vrot.slane %v454, 2
  %v456 = vmax.f32 %v454, %v455
  %v457 = vrot.slane %v456, 1
  %v458 = vmax.f32 %v456, %v457
  %v459 = vsel %vm227, %v155, -inf
  %v460 = vrot.slane %v459, 4
  %v461 = vmax.f32 %v459, %v460
  %v462 = vrot.slane %v461, 2
  %v463 = vmax.f32 %v461, %v462
  %v464 = vrot.slane %v463, 1
  %v465 = vmax.f32 %v463, %v464
  %v466 = vsel %vm227, %v156, -inf
  %v467 = vrot.slane %v466, 4
  %v468 = vmax.f32 %v466, %v467
  %v469 = vrot.slane %v468, 2
  %v470 = vmax.f32 %v468, %v469
  %v471 = vrot.slane %v470, 1
  %v472 = vmax.f32 %v470, %v471
  %v473 = vsel %vm227, %v157, -inf
  %v474 = vrot.slane %v473, 4
  %v475 = vmax.f32 %v473, %v474
  %v476 = vrot.slane %v475, 2
  %v477 = vmax.f32 %v475, %v476
  %v478 = vrot.slane %v477, 1
  %v479 = vmax.f32 %v477, %v478
  %v480 = vsel %vm227, %v95, -inf
  %v481 = vrot.slane %v480, 4
  %v482 = vmax.f32 %v480, %v481
  %v483 = vrot.slane %v482, 2
  %v484 = vmax.f32 %v482, %v483
  %v485 = vrot.slane %v484, 1
  %v486 = vmax.f32 %v484, %v485
  %v487 = vsel %vm227, %v158, -inf
  %v488 = vrot.slane %v487, 4
  %v489 = vmax.f32 %v487, %v488
  %v490 = vrot.slane %v489, 2
  %v491 = vmax.f32 %v489, %v490
  %v492 = vrot.slane %v491, 1
  %v493 = vmax.f32 %v491, %v492
  %v494 = vsel %vm227, %v159, -inf
  %v495 = vrot.slane %v494, 4
  %v496 = vmax.f32 %v494, %v495
  %v497 = vrot.slane %v496, 2
  %v498 = vmax.f32 %v496, %v497
  %v499 = vrot.slane %v498, 1
  %v500 = vmax.f32 %v498, %v499
  %v501 = vsel %vm227, %v160, -inf
  %v502 = vrot.slane %v501, 4
  %v503 = vmax.f32 %v501, %v502
  %v504 = vrot.slane %v503, 2
  %v505 = vmax.f32 %v503, %v504
  %v506 = vrot.slane %v505, 1
  %v507 = vmax.f32 %v505, %v506
  %v508 = vsel %vm227, %v98, -inf
  %v509 = vrot.slane %v508, 4
  %v510 = vmax.f32 %v508, %v509
  %v511 = vrot.slane %v510, 2
  %v512 = vmax.f32 %v510, %v511
  %v513 = vrot.slane %v512, 1
  %v514 = vmax.f32 %v512, %v513
  %v515 = vsel %vm227, %v161, -inf
  %v516 = vrot.slane %v515, 4
  %v517 = vmax.f32 %v515, %v516
  %v518 = vrot.slane %v517, 2
  %v519 = vmax.f32 %v517, %v518
  %v520 = vrot.slane %v519, 1
  %v521 = vmax.f32 %v519, %v520
  %v522 = vsel %vm227, %v162, -inf
  %v523 = vrot.slane %v522, 4
  %v524 = vmax.f32 %v522, %v523
  %v525 = vrot.slane %v524, 2
  %v526 = vmax.f32 %v524, %v525
  %v527 = vrot.slane %v526, 1
  %v528 = vmax.f32 %v526, %v527
  %v529 = vsel %vm227, %v163, -inf
  %v530 = vrot.slane %v529, 4
  %v531 = vmax.f32 %v529, %v530
  %v532 = vrot.slane %v531, 2
  %v533 = vmax.f32 %v531, %v532
  %v534 = vrot.slane %v533, 1
  %v535 = vmax.f32 %v533, %v534
  %v536 = vsel %vm227, %v101, -inf
  %v537 = vrot.slane %v536, 4
  %v538 = vmax.f32 %v536, %v537
  %v539 = vrot.slane %v538, 2
  %v540 = vmax.f32 %v538, %v539
  %v541 = vrot.slane %v540, 1
  %v542 = vmax.f32 %v540, %v541
  %v543 = vsel %vm227, %v164, -inf
  %v544 = vrot.slane %v543, 4
  %v545 = vmax.f32 %v543, %v544
  %v546 = vrot.slane %v545, 2
  %v547 = vmax.f32 %v545, %v546
  %v548 = vrot.slane %v547, 1
  %v549 = vmax.f32 %v547, %v548
  %v550 = vsel %vm227, %v165, -inf
  %v551 = vrot.slane %v550, 4
  %v552 = vmax.f32 %v550, %v551
  %v553 = vrot.slane %v552, 2
  %v554 = vmax.f32 %v552, %v553
  %v555 = vrot.slane %v554, 1
  %v556 = vmax.f32 %v554, %v555
  %v557 = vsel %vm227, %v166, -inf
  %v558 = vrot.slane %v557, 4
  %v559 = vmax.f32 %v557, %v558
  %v560 = vrot.slane %v559, 2
  %v561 = vmax.f32 %v559, %v560
  %v562 = vrot.slane %v561, 1
  %v563 = vmax.f32 %v561, %v562
  %v564 = vsel %vm227, %v104, -inf
  %v565 = vrot.slane %v564, 4
  %v566 = vmax.f32 %v564, %v565
  %v567 = vrot.slane %v566, 2
  %v568 = vmax.f32 %v566, %v567
  %v569 = vrot.slane %v568, 1
  %v570 = vmax.f32 %v568, %v569
  %v571 = vsel %vm227, %v167, -inf
  %v572 = vrot.slane %v571, 4
  %v573 = vmax.f32 %v571, %v572
  %v574 = vrot.slane %v573, 2
  %v575 = vmax.f32 %v573, %v574
  %v576 = vrot.slane %v575, 1
  %v577 = vmax.f32 %v575, %v576
  %v578 = vsel %vm227, %v168, -inf
  %v579 = vrot.slane %v578, 4
  %v580 = vmax.f32 %v578, %v579
  %v581 = vrot.slane %v580, 2
  %v582 = vmax.f32 %v580, %v581
  %v583 = vrot.slane %v582, 1
  %v584 = vmax.f32 %v582, %v583
  %v585 = vsel %vm227, %v169, -inf
  %v586 = vrot.slane %v585, 4
  %v587 = vmax.f32 %v585, %v586
  %v588 = vrot.slane %v587, 2
  %v589 = vmax.f32 %v587, %v588
  %v590 = vrot.slane %v589, 1
  %v591 = vmax.f32 %v589, %v590
  %v592 = vsel %vm227, %v107, -inf
  %v593 = vrot.slane %v592, 4
  %v594 = vmax.f32 %v592, %v593
  %v595 = vrot.slane %v594, 2
  %v596 = vmax.f32 %v594, %v595
  %v597 = vrot.slane %v596, 1
  %v598 = vmax.f32 %v596, %v597
  %v599 = vsel %vm227, %v170, -inf
  %v600 = vrot.slane %v599, 4
  %v601 = vmax.f32 %v599, %v600
  %v602 = vrot.slane %v601, 2
  %v603 = vmax.f32 %v601, %v602
  %v604 = vrot.slane %v603, 1
  %v605 = vmax.f32 %v603, %v604
  %v606 = vsel %vm227, %v171, -inf
  %v607 = vrot.slane %v606, 4
  %v608 = vmax.f32 %v606, %v607
  %v609 = vrot.slane %v608, 2
  %v610 = vmax.f32 %v608, %v609
  %v611 = vrot.slane %v610, 1
  %v612 = vmax.f32 %v610, %v611
  %v613 = vsel %vm227, %v172, -inf
  %v614 = vrot.slane %v613, 4
  %v615 = vmax.f32 %v613, %v614
  %v616 = vrot.slane %v615, 2
  %v617 = vmax.f32 %v615, %v616
  %v618 = vrot.slane %v617, 1
  %v619 = vmax.f32 %v617, %v618
  %v620 = vsel %vm227, %v110, -inf
  %v621 = vrot.slane %v620, 4
  %v622 = vmax.f32 %v620, %v621
  %v623 = vrot.slane %v622, 2
  %v624 = vmax.f32 %v622, %v623
  %v625 = vrot.slane %v624, 1
  %v626 = vmax.f32 %v624, %v625
  %v627 = vsel %vm227, %v173, -inf
  %v628 = vrot.slane %v627, 4
  %v629 = vmax.f32 %v627, %v628
  %v630 = vrot.slane %v629, 2
  %v631 = vmax.f32 %v629, %v630
  %v632 = vrot.slane %v631, 1
  %v633 = vmax.f32 %v631, %v632
  %v634 = vsel %vm227, %v174, -inf
  %v635 = vrot.slane %v634, 4
  %v636 = vmax.f32 %v634, %v635
  %v637 = vrot.slane %v636, 2
  %v638 = vmax.f32 %v636, %v637
  %v639 = vrot.slane %v638, 1
  %v640 = vmax.f32 %v638, %v639
  %v641 = vsel %vm227, %v175, -inf
  %v642 = vrot.slane %v641, 4
  %v643 = vmax.f32 %v641, %v642
  %v644 = vrot.slane %v643, 2
  %v645 = vmax.f32 %v643, %v644
  %v646 = vrot.slane %v645, 1
  %v647 = vmax.f32 %v645, %v646
  %v648 = vsel %vm227, %v113, -inf
  %v649 = vrot.slane %v648, 4
  %v650 = vmax.f32 %v648, %v649
  %v651 = vrot.slane %v650, 2
  %v652 = vmax.f32 %v650, %v651
  %v653 = vrot.slane %v652, 1
  %v654 = vmax.f32 %v652, %v653
  %v655 = vsel %vm227, %v176, -inf
  %v656 = vrot.slane %v655, 4
  %v657 = vmax.f32 %v655, %v656
  %v658 = vrot.slane %v657, 2
  %v659 = vmax.f32 %v657, %v658
  %v660 = vrot.slane %v659, 1
  %v661 = vmax.f32 %v659, %v660
  %v662 = vsel %vm227, %v177, -inf
  %v663 = vrot.slane %v662, 4
  %v664 = vmax.f32 %v662, %v663
  %v665 = vrot.slane %v664, 2
  %v666 = vmax.f32 %v664, %v665
  %v667 = vrot.slane %v666, 1
  %v668 = vmax.f32 %v666, %v667
  %v669 = vsel %vm227, %v178, -inf
  %v670 = vrot.slane %v669, 4
  %v671 = vmax.f32 %v669, %v670
  %v672 = vrot.slane %v671, 2
  %v673 = vmax.f32 %v671, %v672
  %v674 = vrot.slane %v673, 1
  %v675 = vmax.f32 %v673, %v674
  %v676 = vmax.f32 %v234, %v262
  %v677 = vmax.f32 %v241, %v269
  %v678 = vmax.f32 %v248, %v276
  %v679 = vmax.f32 %v255, %v283
  %v680 = vmax.f32 %v290, %v318
  %v681 = vmax.f32 %v297, %v325
  %v682 = vmax.f32 %v304, %v332
  %v683 = vmax.f32 %v311, %v339
  %v684 = vmax.f32 %v346, %v374
  %v685 = vmax.f32 %v353, %v381
  %v686 = vmax.f32 %v360, %v388
  %v687 = vmax.f32 %v367, %v395
  %v688 = vmax.f32 %v402, %v430
  %v689 = vmax.f32 %v409, %v437
  %v690 = vmax.f32 %v416, %v444
  %v691 = vmax.f32 %v423, %v451
  %v692 = vmax.f32 %v458, %v486
  %v693 = vmax.f32 %v465, %v493
  %v694 = vmax.f32 %v472, %v500
  %v695 = vmax.f32 %v479, %v507
  %v696 = vmax.f32 %v514, %v542
  %v697 = vmax.f32 %v521, %v549
  %v698 = vmax.f32 %v528, %v556
  %v699 = vmax.f32 %v535, %v563
  %v700 = vmax.f32 %v570, %v598
  %v701 = vmax.f32 %v577, %v605
  %v702 = vmax.f32 %v584, %v612
  %v703 = vmax.f32 %v591, %v619
  %v704 = vmax.f32 %v626, %v654
  %v705 = vmax.f32 %v633, %v661
  %v706 = vmax.f32 %v640, %v668
  %v707 = vmax.f32 %v647, %v675
  %vm740 = vcmask 1041409
  %v741 = vsel %vm740, %v677, %v676
  %vm742 = vcmask 1042434
  %v743 = vsel %vm742, %v678, %v741
  %vm744 = vcmask 1043459
  %v745 = vsel %vm744, %v679, %v743
  %v746 = vsel %vm740, %v681, %v680
  %v747 = vsel %vm742, %v682, %v746
  %v748 = vsel %vm744, %v683, %v747
  %v749 = vsel %vm740, %v685, %v684
  %v750 = vsel %vm742, %v686, %v749
  %v751 = vsel %vm744, %v687, %v750
  %v752 = vsel %vm740, %v689, %v688
  %v753 = vsel %vm742, %v690, %v752
  %v754 = vsel %vm744, %v691, %v753
  %v755 = vsel %vm740, %v693, %v692
  %v756 = vsel %vm742, %v694, %v755
  %v757 = vsel %vm744, %v695, %v756
  %v758 = vsel %vm740, %v697, %v696
  %v759 = vsel %vm742, %v698, %v758
  %v760 = vsel %vm744, %v699, %v759
  %v761 = vsel %vm740, %v701, %v700
  %v762 = vsel %vm742, %v702, %v761
  %v763 = vsel %vm744, %v703, %v762
  %v764 = vsel %vm740, %v705, %v704
  %v765 = vsel %vm742, %v706, %v764
  %v766 = vsel %vm744, %v707, %v765
  %775 = vst [vmem:[%s3] sm:$0xf] %v745
  %776 = vst [vmem:[%s3 + $0x4] sm:$0xf] %v748
  %777 = vst [vmem:[%s3 + $0x8] sm:$0xf] %v751
  %778 = vst [vmem:[%s3 + $0xc] sm:$0xf] %v754
  %779 = vst [vmem:[%s3 + $0x10] sm:$0xf] %v757
  %780 = vst [vmem:[%s3 + $0x14] sm:$0xf] %v760
  %781 = vst [vmem:[%s3 + $0x18] sm:$0xf] %v763
  %782 = vst [vmem:[%s3 + $0x1c] sm:$0xf] %v766
  // Predicated region
  $region14: #{_lambda_.4} parent=0 // pred_check
    _
  $region15: #{_lambda_.4} parent=0 // pred_check_branch
    %784 = sbr.rel (0) target = $region17
  $region16: #{_lambda_.4} parent=0 // pred_region
    _
  $region17: #{_lambda_.4} parent=0 // pred_fallthru
    _
  // Predicated region
  $region18: #{_lambda_.4} parent=0 // pred_check
    _
  $region19: #{_lambda_.4} parent=0 // pred_check_branch
    %786 = sbr.rel (0) target = $region21
  $region20: #{_lambda_.4} parent=0 // pred_region
    _
  $region21: #{_lambda_.4} parent=0 // pred_fallthru
    _

// kernel: _lambda_.3
$region0: #{_lambda_.3}
  #allocation0 [shape = 'u32[]', space=smem, size = 0x4, offset = 0x4, fixed_abs, tag = 'smem constant byte address 0x4 - core index']
  #allocation1 [shape = 'u32[72,128]{1,0:T(1,128)}', space=vmem, size = 0x9000, scoped, tag = 'internal scratch']
  %s0 = inlined_call_operand.vmem [shape: f32[2,2,2,11,11,1], index: 0, kind: input, shape index: {}]
  %s1 = inlined_call_operand.vmem [shape: f32[49,1,128], index: 1, kind: input, shape index: {}]
  %s2 = inlined_call_operand.vmem [shape: f32[1,128], index: 2, kind: input, shape index: {}]
  %s3 = inlined_call_operand.vmem [shape: f32[2,64,128], index: 3, kind: output, shape index: {}]
  %s4 = sld [smem:[#allocation0]]
  $region83: #{_lambda_.3} parent=0
    _
  %s6 = ssub.s32 1, %s4
  %s7 = scalar_select 0, %s6, %s4
  $region1: #{_lambda_.3} parent=0
    #allocation2 [shape = 'u8[720896]{0}', space=vmem, size = 0xb0000, scoped, tag = 'input window, operand 0']
    loop: start=0, step=1, limit=4
    $region2: #{_lambda_.3} parent=1 // loop_pre_header
      _
    $region3: #{_lambda_.3} parent=1 // loop_header
      %s9 = sphi 0, %s13
      %p10 = scmp.ge.s32.totalorder %s9, 4
      %s19 = sphi 0, %s21
      %s22 = sphi 0, %s19
      %s23 = sphi 0, %s22
      %s39 = sphi 0, %s23
      %s43 = sphi 0, %s43
      %s45 = sphi 0, %s43
      %s46 = sphi 0, %s45
      %s60 = sphi 0, %s46
      %s64 = sphi 0, %s64
      %s66 = sphi 0, %s64
      %s67 = sphi 0, %s66
      %s81 = sphi 0, %s67
      %s87 = sphi 0, %s89
      %s90 = sphi 0, %s87
      %s91 = sphi 0, %s90
      %s107 = sphi 0, %s91
    $region4: #{_lambda_.3} parent=1 // loop_header_branch
      %12 = sbr.rel (%p10) target = $region8
    $region5: #{_lambda_.3} parent=1 // loop_body
      %s14 = ssub.s32 %s9, 1
      %s15 = ssub.s32 %s9, 2
      %s16 = sadd.s32 %s9, 1
      %s17 = ssub.s32 %s9, %s16
      %p18 = scmp.eq.s32.totalorder %s17, 0
      %s20 = sadd.s32 %s19, 1
      %s21 = scalar_select %p18, %s19, %s20
      %p24 = pneg %p18
      %p25 = scmp.eq.s32.totalorder %s9, 1
      %p26 = por %p24, %p25
      %p27 = scmp.ne.s32.totalorder %s19, %s22
      %p28 = scmp.eq.s32.totalorder %s9, 0
      %p29 = por %p27, %p28
      %p30 = scmp.ne.s32.totalorder %s19, %s22
      %p31 = scmp.eq.s32.totalorder %s14, 1
      %p32 = por %p30, %p31
      %p33 = scmp.ne.s32.totalorder %s22, %s23
      %p34 = scmp.eq.s32.totalorder %s14, 0
      %p35 = por %p33, %p34
      %p36 = scmp.ne.s32.totalorder %s22, %s23
      %p37 = scmp.eq.s32.totalorder %s15, 1
      %p38 = por %p36, %p37
      %p40 = scmp.ne.s32.totalorder %s23, %s39
      %p41 = scmp.eq.s32.totalorder %s15, 0
      %p42 = por %p40, %p41
      %s44 = sadd.s32 %s43, 1
      %p47 = scmp.eq.s32.totalorder %s9, 1
      %p48 = scmp.ne.s32.totalorder %s43, %s45
      %p49 = scmp.eq.s32.totalorder %s9, 0
      %p50 = por %p48, %p49
      %p51 = scmp.ne.s32.totalorder %s43, %s45
      %p52 = scmp.eq.s32.totalorder %s14, 1
      %p53 = por %p51, %p52
      %p54 = scmp.ne.s32.totalorder %s45, %s46
      %p55 = scmp.eq.s32.totalorder %s14, 0
      %p56 = por %p54, %p55
      %p57 = scmp.ne.s32.totalorder %s45, %s46
      %p58 = scmp.eq.s32.totalorder %s15, 1
      %p59 = por %p57, %p58
      %p61 = scmp.ne.s32.totalorder %s46, %s60
      %p62 = scmp.eq.s32.totalorder %s15, 0
      %p63 = por %p61, %p62
      %s65 = sadd.s32 %s64, 1
      %p68 = scmp.eq.s32.totalorder %s9, 1
      %p69 = scmp.ne.s32.totalorder %s64, %s66
      %p70 = scmp.eq.s32.totalorder %s9, 0
      %p71 = por %p69, %p70
      %p72 = scmp.ne.s32.totalorder %s64, %s66
      %p73 = scmp.eq.s32.totalorder %s14, 1
      %p74 = por %p72, %p73
      %p75 = scmp.ne.s32.totalorder %s66, %s67
      %p76 = scmp.eq.s32.totalorder %s14, 0
      %p77 = por %p75, %p76
      %p78 = scmp.ne.s32.totalorder %s66, %s67
      %p79 = scmp.eq.s32.totalorder %s15, 1
      %p80 = por %p78, %p79
      %p82 = scmp.ne.s32.totalorder %s67, %s81
      %p83 = scmp.eq.s32.totalorder %s15, 0
      %p84 = por %p82, %p83
      %s85 = ssub.s32 %s9, %s16
      %p86 = scmp.eq.s32.totalorder %s85, 0
      %s88 = sadd.s32 %s87, 1
      %s89 = scalar_select %p86, %s87, %s88
      %p92 = pneg %p86
      %p93 = scmp.eq.s32.totalorder %s9, 1
      %p94 = por %p92, %p93
      %p95 = scmp.ne.s32.totalorder %s87, %s90
      %p96 = scmp.eq.s32.totalorder %s9, 0
      %p97 = por %p95, %p96
      %p98 = scmp.ne.s32.totalorder %s87, %s90
      %p99 = scmp.eq.s32.totalorder %s14, 1
      %p100 = por %p98, %p99
      %p101 = scmp.ne.s32.totalorder %s90, %s91
      %p102 = scmp.eq.s32.totalorder %s14, 0
      %p103 = por %p101, %p102
      %p104 = scmp.ne.s32.totalorder %s90, %s91
      %p105 = scmp.eq.s32.totalorder %s15, 1
      %p106 = por %p104, %p105
      %p108 = scmp.ne.s32.totalorder %s91, %s107
      %p109 = scmp.eq.s32.totalorder %s15, 0
      %p110 = por %p108, %p109
      %p111 = scmp.le.s32.totalorder 1, %s9
      %p112 = scmp.lt.s32.totalorder %s9, 3
      %p113 = pnand %p111, %p112
      %p114 = pneg %p113
      // Predicated region
      $region9: #{_lambda_.3} parent=5 // pred_check
        _
      $region10: #{_lambda_.3} parent=5 // pred_check_branch
        %116 = sbr.rel (%p113) target = $region12
      $region11: #{_lambda_.3} parent=5 // pred_region
        %s117 = ssub.s32 %s9, 1
        // Predicated region
        $region13: #{_lambda_.3} parent=11 // pred_check
          %p118 = pneg %p56
        $region14: #{_lambda_.3} parent=11 // pred_check_branch
          %120 = sbr.rel (%p118) target = $region16
        $region15: #{_lambda_.3} parent=11 // pred_region
          _
        $region16: #{_lambda_.3} parent=11 // pred_fallthru
          _
        // Predicated region
        $region17: #{_lambda_.3} parent=11 // pred_check
          %p121 = pneg %p77
        $region18: #{_lambda_.3} parent=11 // pred_check_branch
          %123 = sbr.rel (%p121) target = $region20
        $region19: #{_lambda_.3} parent=11 // pred_region
          _
        $region20: #{_lambda_.3} parent=11 // pred_fallthru
          _
      $region12: #{_lambda_.3} parent=5 // pred_fallthru
        _
      %p124 = scmp.lt.s32.totalorder %s9, 2
      // Predicated region
      $region21: #{_lambda_.3} parent=5 // pred_check
        %p125 = pneg %p124
      $region22: #{_lambda_.3} parent=5 // pred_check_branch
        %127 = sbr.rel (%p125) target = $region24
      $region23: #{_lambda_.3} parent=5 // pred_region
        // Predicated region
        $region25: #{_lambda_.3} parent=23 // pred_check
          %p128 = pneg %p29
        $region26: #{_lambda_.3} parent=23 // pred_check_branch
          %130 = sbr.rel (%p128) target = $region28
        $region27: #{_lambda_.3} parent=23 // pred_region
          %s131 = sand.u32 %s19, 1
          %s132 = sand.u32 %s19, 1
          %s133 = smul.addr %s132, 704
          %s134 = scalar_lea.vmem [#allocation2], %s133
          %s135 = smul.addr %s9, 22
          %s136 = smul.addr %s135, 8
          %s137 = scalar_lea.vmem %s0, %s136
          // Predicated region
          $region29: #{_lambda_.3} parent=27 // pred_check
            _
          $region30: #{_lambda_.3} parent=27 // pred_check_branch
            %139 = sbr.rel (0) target = $region32
          $region31: #{_lambda_.3} parent=27 // pred_region
            // Predicated region
            $region33: #{_lambda_.3} parent=31 // pred_check
              _
            $region34: #{_lambda_.3} parent=31 // pred_check_branch
              %141 = sbr.rel (0) target = $region36
            $region35: #{_lambda_.3} parent=31 // pred_region
              // Predicated region
              $region48: #{_lambda_.3} parent=35 // pred_check
                _
              $region49: #{_lambda_.3} parent=35 // pred_check_branch
                %331 = sbr.rel (0) target = $region51
              $region50: #{_lambda_.3} parent=35 // pred_region
                loop: start=0, step=1, limit=1
                $region52: #{_lambda_.3} parent=50 // loop_pre_header
                  _
                $region53: #{_lambda_.3} parent=50 // loop_header
                  %s333 = sphi 0, %s337
                  %p334 = scmp.ge.s32.totalorder %s333, 1
                  %s338 = sphi %s137, %s137
                  %s339 = sphi %s134, %s134
                $region54: #{_lambda_.3} parent=50 // loop_header_branch
                  %336 = sbr.rel (%p334) target = $region58
                $region55: #{_lambda_.3} parent=50 // loop_body
                  %v340 = vld [vmem:[%s338] sm:$0xff]
                  %341 = vst [vmem:[%s339] sm:$0xff] %v340
                  %v342 = vld [vmem:[%s338 + $0x8] sm:$0xff]
                  %343 = vst [vmem:[%s339 + $0x8] sm:$0xff] %v342
                  %v344 = vld [vmem:[%s338 + $0x10] sm:$0xff]
                  %345 = vst [vmem:[%s339 + $0x10] sm:$0xff] %v344
                  %v346 = vld [vmem:[%s338 + $0x18] sm:$0xff]
                  %347 = vst [vmem:[%s339 + $0x18] sm:$0xff] %v346
                  %v348 = vld [vmem:[%s338 + $0x20] sm:$0xff]
                  %349 = vst [vmem:[%s339 + $0x20] sm:$0xff] %v348
                  %v350 = vld [vmem:[%s338 + $0x28] sm:$0xff]
                  %351 = vst [vmem:[%s339 + $0x28] sm:$0xff] %v350
                  %v352 = vld [vmem:[%s338 + $0x30] sm:$0xff]
                  %353 = vst [vmem:[%s339 + $0x30] sm:$0xff] %v352
                  %v354 = vld [vmem:[%s338 + $0x38] sm:$0xff]
                  %355 = vst [vmem:[%s339 + $0x38] sm:$0xff] %v354
                  %v356 = vld [vmem:[%s338 + $0x40] sm:$0xff]
                  %357 = vst [vmem:[%s339 + $0x40] sm:$0xff] %v356
                  %v358 = vld [vmem:[%s338 + $0x48] sm:$0xff]
                  %359 = vst [vmem:[%s339 + $0x48] sm:$0xff] %v358
                  %v360 = vld [vmem:[%s338 + $0x50] sm:$0xff]
                  %361 = vst [vmem:[%s339 + $0x50] sm:$0xff] %v360
                  %v362 = vld [vmem:[%s338 + $0x58] sm:$0xff]
                  %363 = vst [vmem:[%s339 + $0x58] sm:$0xff] %v362
                  %v364 = vld [vmem:[%s338 + $0x60] sm:$0xff]
                  %365 = vst [vmem:[%s339 + $0x60] sm:$0xff] %v364
                  %v366 = vld [vmem:[%s338 + $0x68] sm:$0xff]
                  %367 = vst [vmem:[%s339 + $0x68] sm:$0xff] %v366
                  %v368 = vld [vmem:[%s338 + $0x70] sm:$0xff]
                  %369 = vst [vmem:[%s339 + $0x70] sm:$0xff] %v368
                  %v370 = vld [vmem:[%s338 + $0x78] sm:$0xff]
                  %371 = vst [vmem:[%s339 + $0x78] sm:$0xff] %v370
                  %v372 = vld [vmem:[%s338 + $0x80] sm:$0xff]
                  %373 = vst [vmem:[%s339 + $0x80] sm:$0xff] %v372
                  %v374 = vld [vmem:[%s338 + $0x88] sm:$0xff]
                  %375 = vst [vmem:[%s339 + $0x88] sm:$0xff] %v374
                  %v376 = vld [vmem:[%s338 + $0x90] sm:$0xff]
                  %377 = vst [vmem:[%s339 + $0x90] sm:$0xff] %v376
                  %v378 = vld [vmem:[%s338 + $0x98] sm:$0xff]
                  %379 = vst [vmem:[%s339 + $0x98] sm:$0xff] %v378
                  %v380 = vld [vmem:[%s338 + $0xa0] sm:$0xff]
                  %381 = vst [vmem:[%s339 + $0xa0] sm:$0xff] %v380
                  %v382 = vld [vmem:[%s338 + $0xa8] sm:$0xff]
                  %383 = vst [vmem:[%s339 + $0xa8] sm:$0xff] %v382
                  %v384 = vld [vmem:[%s338 + $0x160] sm:$0xff]
                  %385 = vst [vmem:[%s339 + $0xb0] sm:$0xff] %v384
                  %v386 = vld [vmem:[%s338 + $0x168] sm:$0xff]
                  %387 = vst [vmem:[%s339 + $0xb8] sm:$0xff] %v386
                  %v388 = vld [vmem:[%s338 + $0x170] sm:$0xff]
                  %389 = vst [vmem:[%s339 + $0xc0] sm:$0xff] %v388
                  %v390 = vld [vmem:[%s338 + $0x178] sm:$0xff]
                  %391 = vst [vmem:[%s339 + $0xc8] sm:$0xff] %v390
                  %v392 = vld [vmem:[%s338 + $0x180] sm:$0xff]
                  %393 = vst [vmem:[%s339 + $0xd0] sm:$0xff] %v392
                  %v394 = vld [vmem:[%s338 + $0x188] sm:$0xff]
                  %395 = vst [vmem:[%s339 + $0xd8] sm:$0xff] %v394
                  %v396 = vld [vmem:[%s338 + $0x190] sm:$0xff]
                  %397 = vst [vmem:[%s339 + $0xe0] sm:$0xff] %v396
                  %v398 = vld [vmem:[%s338 + $0x198] sm:$0xff]
                  %399 = vst [vmem:[%s339 + $0xe8] sm:$0xff] %v398
                  %v400 = vld [vmem:[%s338 + $0x1a0] sm:$0xff]
                  %401 = vst [vmem:[%s339 + $0xf0] sm:$0xff] %v400
                  %v402 = vld [vmem:[%s338 + $0x1a8] sm:$0xff]
                  %403 = vst [vmem:[%s339 + $0xf8] sm:$0xff] %v402
                  %v404 = vld [vmem:[%s338 + $0x1b0] sm:$0xff]
                  %405 = vst [vmem:[%s339 + $0x100] sm:$0xff] %v404
                  %v406 = vld [vmem:[%s338 + $0x1b8] sm:$0xff]
                  %407 = vst [vmem:[%s339 + $0x108] sm:$0xff] %v406
                  %v408 = vld [vmem:[%s338 + $0x1c0] sm:$0xff]
                  %409 = vst [vmem:[%s339 + $0x110] sm:$0xff] %v408
                  %v410 = vld [vmem:[%s338 + $0x1c8] sm:$0xff]
                  %411 = vst [vmem:[%s339 + $0x118] sm:$0xff] %v410
                  %v412 = vld [vmem:[%s338 + $0x1d0] sm:$0xff]
                  %413 = vst [vmem:[%s339 + $0x120] sm:$0xff] %v412
                  %v414 = vld [vmem:[%s338 + $0x1d8] sm:$0xff]
                  %415 = vst [vmem:[%s339 + $0x128] sm:$0xff] %v414
                  %v416 = vld [vmem:[%s338 + $0x1e0] sm:$0xff]
                  %417 = vst [vmem:[%s339 + $0x130] sm:$0xff] %v416
                  %v418 = vld [vmem:[%s338 + $0x1e8] sm:$0xff]
                  %419 = vst [vmem:[%s339 + $0x138] sm:$0xff] %v418
                  %v420 = vld [vmem:[%s338 + $0x1f0] sm:$0xff]
                  %421 = vst [vmem:[%s339 + $0x140] sm:$0xff] %v420
                  %v422 = vld [vmem:[%s338 + $0x1f8] sm:$0xff]
                  %423 = vst [vmem:[%s339 + $0x148] sm:$0xff] %v422
                  %v424 = vld [vmem:[%s338 + $0x200] sm:$0xff]
                  %425 = vst [vmem:[%s339 + $0x150] sm:$0xff] %v424
                  %v426 = vld [vmem:[%s338 + $0x208] sm:$0xff]
                  %427 = vst [vmem:[%s339 + $0x158] sm:$0xff] %v426
                  %v428 = vld [vmem:[%s338 + $0x2c0] sm:$0xff]
                  %429 = vst [vmem:[%s339 + $0x160] sm:$0xff] %v428
                  %v430 = vld [vmem:[%s338 + $0x2c8] sm:$0xff]
                  %431 = vst [vmem:[%s339 + $0x168] sm:$0xff] %v430
                  %v432 = vld [vmem:[%s338 + $0x2d0] sm:$0xff]
                  %433 = vst [vmem:[%s339 + $0x170] sm:$0xff] %v432
                  %v434 = vld [vmem:[%s338 + $0x2d8] sm:$0xff]
                  %435 = vst [vmem:[%s339 + $0x178] sm:$0xff] %v434
                  %v436 = vld [vmem:[%s338 + $0x2e0] sm:$0xff]
                  %437 = vst [vmem:[%s339 + $0x180] sm:$0xff] %v436
                  %v438 = vld [vmem:[%s338 + $0x2e8] sm:$0xff]
                  %439 = vst [vmem:[%s339 + $0x188] sm:$0xff] %v438
                  %v440 = vld [vmem:[%s338 + $0x2f0] sm:$0xff]
                  %441 = vst [vmem:[%s339 + $0x190] sm:$0xff] %v440
                  %v442 = vld [vmem:[%s338 + $0x2f8] sm:$0xff]
                  %443 = vst [vmem:[%s339 + $0x198] sm:$0xff] %v442
                  %v444 = vld [vmem:[%s338 + $0x300] sm:$0xff]
                  %445 = vst [vmem:[%s339 + $0x1a0] sm:$0xff] %v444
                  %v446 = vld [vmem:[%s338 + $0x308] sm:$0xff]
                  %447 = vst [vmem:[%s339 + $0x1a8] sm:$0xff] %v446
                  %v448 = vld [vmem:[%s338 + $0x310] sm:$0xff]
                  %449 = vst [vmem:[%s339 + $0x1b0] sm:$0xff] %v448
                  %v450 = vld [vmem:[%s338 + $0x318] sm:$0xff]
                  %451 = vst [vmem:[%s339 + $0x1b8] sm:$0xff] %v450
                  %v452 = vld [vmem:[%s338 + $0x320] sm:$0xff]
                  %453 = vst [vmem:[%s339 + $0x1c0] sm:$0xff] %v452
                  %v454 = vld [vmem:[%s338 + $0x328] sm:$0xff]
                  %455 = vst [vmem:[%s339 + $0x1c8] sm:$0xff] %v454
                  %v456 = vld [vmem:[%s338 + $0x330] sm:$0xff]
                  %457 = vst [vmem:[%s339 + $0x1d0] sm:$0xff] %v456
                  %v458 = vld [vmem:[%s338 + $0x338] sm:$0xff]
                  %459 = vst [vmem:[%s339 + $0x1d8] sm:$0xff] %v458
                  %v460 = vld [vmem:[%s338 + $0x340] sm:$0xff]
                  %461 = vst [vmem:[%s339 + $0x1e0] sm:$0xff] %v460
                  %v462 = vld [vmem:[%s338 + $0x348] sm:$0xff]
                  %463 = vst [vmem:[%s339 + $0x1e8] sm:$0xff] %v462
                  %v464 = vld [vmem:[%s338 + $0x350] sm:$0xff]
                  %465 = vst [vmem:[%s339 + $0x1f0] sm:$0xff] %v464
                  %v466 = vld [vmem:[%s338 + $0x358] sm:$0xff]
                  %467 = vst [vmem:[%s339 + $0x1f8] sm:$0xff] %v466
                  %v468 = vld [vmem:[%s338 + $0x360] sm:$0xff]
                  %469 = vst [vmem:[%s339 + $0x200] sm:$0xff] %v468
                  %v470 = vld [vmem:[%s338 + $0x368] sm:$0xff]
                  %471 = vst [vmem:[%s339 + $0x208] sm:$0xff] %v470
                  %v472 = vld [vmem:[%s338 + $0x420] sm:$0xff]
                  %473 = vst [vmem:[%s339 + $0x210] sm:$0xff] %v472
                  %v474 = vld [vmem:[%s338 + $0x428] sm:$0xff]
                  %475 = vst [vmem:[%s339 + $0x218] sm:$0xff] %v474
                  %v476 = vld [vmem:[%s338 + $0x430] sm:$0xff]
                  %477 = vst [vmem:[%s339 + $0x220] sm:$0xff] %v476
                  %v478 = vld [vmem:[%s338 + $0x438] sm:$0xff]
                  %479 = vst [vmem:[%s339 + $0x228] sm:$0xff] %v478
                  %v480 = vld [vmem:[%s338 + $0x440] sm:$0xff]
                  %481 = vst [vmem:[%s339 + $0x230] sm:$0xff] %v480
                  %v482 = vld [vmem:[%s338 + $0x448] sm:$0xff]
                  %483 = vst [vmem:[%s339 + $0x238] sm:$0xff] %v482
                  %v484 = vld [vmem:[%s338 + $0x450] sm:$0xff]
                  %485 = vst [vmem:[%s339 + $0x240] sm:$0xff] %v484
                  %v486 = vld [vmem:[%s338 + $0x458] sm:$0xff]
                  %487 = vst [vmem:[%s339 + $0x248] sm:$0xff] %v486
                  %v488 = vld [vmem:[%s338 + $0x460] sm:$0xff]
                  %489 = vst [vmem:[%s339 + $0x250] sm:$0xff] %v488
                  %v490 = vld [vmem:[%s338 + $0x468] sm:$0xff]
                  %491 = vst [vmem:[%s339 + $0x258] sm:$0xff] %v490
                  %v492 = vld [vmem:[%s338 + $0x470] sm:$0xff]
                  %493 = vst [vmem:[%s339 + $0x260] sm:$0xff] %v492
                  %v494 = vld [vmem:[%s338 + $0x478] sm:$0xff]
                  %495 = vst [vmem:[%s339 + $0x268] sm:$0xff] %v494
                  %v496 = vld [vmem:[%s338 + $0x480] sm:$0xff]
                  %497 = vst [vmem:[%s339 + $0x270] sm:$0xff] %v496
                  %v498 = vld [vmem:[%s338 + $0x488] sm:$0xff]
                  %499 = vst [vmem:[%s339 + $0x278] sm:$0xff] %v498
                  %v500 = vld [vmem:[%s338 + $0x490] sm:$0xff]
                  %501 = vst [vmem:[%s339 + $0x280] sm:$0xff] %v500
                  %v502 = vld [vmem:[%s338 + $0x498] sm:$0xff]
                  %503 = vst [vmem:[%s339 + $0x288] sm:$0xff] %v502
                  %v504 = vld [vmem:[%s338 + $0x4a0] sm:$0xff]
                  %505 = vst [vmem:[%s339 + $0x290] sm:$0xff] %v504
                  %v506 = vld [vmem:[%s338 + $0x4a8] sm:$0xff]
                  %507 = vst [vmem:[%s339 + $0x298] sm:$0xff] %v506
                  %v508 = vld [vmem:[%s338 + $0x4b0] sm:$0xff]
                  %509 = vst [vmem:[%s339 + $0x2a0] sm:$0xff] %v508
                  %v510 = vld [vmem:[%s338 + $0x4b8] sm:$0xff]
                  %511 = vst [vmem:[%s339 + $0x2a8] sm:$0xff] %v510
                  %v512 = vld [vmem:[%s338 + $0x4c0] sm:$0xff]
                  %513 = vst [vmem:[%s339 + $0x2b0] sm:$0xff] %v512
                  %v514 = vld [vmem:[%s338 + $0x4c8] sm:$0xff]
                  %515 = vst [vmem:[%s339 + $0x2b8] sm:$0xff] %v514
                $region56: #{_lambda_.3} parent=50 // loop_footer
                  %s337 = sadd.s32 1, %s333
                $region57: #{_lambda_.3} parent=50 // loop_footer_branch
                  %332 = sbr.rel target = $region53
                $region58: #{_lambda_.3} parent=50 // loop_exit
                  _
              $region51: #{_lambda_.3} parent=35 // pred_fallthru
                _
              // Predicated region
              $region59: #{_lambda_.3} parent=35 // pred_check
                _
              $region60: #{_lambda_.3} parent=35 // pred_check_branch
                %517 = sbr.rel target = $region62
              $region61: #{_lambda_.3} parent=35 // pred_region
                _
              $region62: #{_lambda_.3} parent=35 // pred_fallthru
                _
            $region36: #{_lambda_.3} parent=31 // pred_fallthru
              _
            // Predicated region
            $region37: #{_lambda_.3} parent=31 // pred_check
              _
            $region38: #{_lambda_.3} parent=31 // pred_check_branch
              %143 = sbr.rel target = $region40
            $region39: #{_lambda_.3} parent=31 // pred_region
              %s145 = ssub.s32 256, 1
              loop: start=0, step=1, limit=1
              $region41: #{_lambda_.3} parent=39 // loop_pre_header
                _
              $region42: #{_lambda_.3} parent=39 // loop_header
                %s147 = sphi 0, %s151
                %p148 = scmp.ge.s32.totalorder %s147, 1
                %s152 = sphi %s137, %s137
                %s153 = sphi %s134, %s134
              $region43: #{_lambda_.3} parent=39 // loop_header_branch
                %150 = sbr.rel (%p148) target = $region47
              $region44: #{_lambda_.3} parent=39 // loop_body
                %v154 = vld [vmem:[%s152] sm:%s145]
                %155 = vst [vmem:[%s153] sm:%s145] %v154
                %v156 = vld [vmem:[%s152 + $0x8] sm:%s145]
                %157 = vst [vmem:[%s153 + $0x8] sm:%s145] %v156
                %v158 = vld [vmem:[%s152 + $0x10] sm:%s145]
                %159 = vst [vmem:[%s153 + $0x10] sm:%s145] %v158
                %v160 = vld [vmem:[%s152 + $0x18] sm:%s145]
                %161 = vst [vmem:[%s153 + $0x18] sm:%s145] %v160
                %v162 = vld [vmem:[%s152 + $0x20] sm:%s145]
                %163 = vst [vmem:[%s153 + $0x20] sm:%s145] %v162
                %v164 = vld [vmem:[%s152 + $0x28] sm:%s145]
                %165 = vst [vmem:[%s153 + $0x28] sm:%s145] %v164
                %v166 = vld [vmem:[%s152 + $0x30] sm:%s145]
                %167 = vst [vmem:[%s153 + $0x30] sm:%s145] %v166
                %v168 = vld [vmem:[%s152 + $0x38] sm:%s145]
                %169 = vst [vmem:[%s153 + $0x38] sm:%s145] %v168
                %v170 = vld [vmem:[%s152 + $0x40] sm:%s145]
                %171 = vst [vmem:[%s153 + $0x40] sm:%s145] %v170
                %v172 = vld [vmem:[%s152 + $0x48] sm:%s145]
                %173 = vst [vmem:[%s153 + $0x48] sm:%s145] %v172
                %v174 = vld [vmem:[%s152 + $0x50] sm:%s145]
                %175 = vst [vmem:[%s153 + $0x50] sm:%s145] %v174
                %v176 = vld [vmem:[%s152 + $0x58] sm:%s145]
                %177 = vst [vmem:[%s153 + $0x58] sm:%s145] %v176
                %v178 = vld [vmem:[%s152 + $0x60] sm:%s145]
                %179 = vst [vmem:[%s153 + $0x60] sm:%s145] %v178
                %v180 = vld [vmem:[%s152 + $0x68] sm:%s145]
                %181 = vst [vmem:[%s153 + $0x68] sm:%s145] %v180
                %v182 = vld [vmem:[%s152 + $0x70] sm:%s145]
                %183 = vst [vmem:[%s153 + $0x70] sm:%s145] %v182
                %v184 = vld [vmem:[%s152 + $0x78] sm:%s145]
                %185 = vst [vmem:[%s153 + $0x78] sm:%s145] %v184
                %v186 = vld [vmem:[%s152 + $0x80] sm:%s145]
                %187 = vst [vmem:[%s153 + $0x80] sm:%s145] %v186
                %v188 = vld [vmem:[%s152 + $0x88] sm:%s145]
                %189 = vst [vmem:[%s153 + $0x88] sm:%s145] %v188
                %v190 = vld [vmem:[%s152 + $0x90] sm:%s145]
                %191 = vst [vmem:[%s153 + $0x90] sm:%s145] %v190
                %v192 = vld [vmem:[%s152 + $0x98] sm:%s145]
                %193 = vst [vmem:[%s153 + $0x98] sm:%s145] %v192
                %v194 = vld [vmem:[%s152 + $0xa0] sm:%s145]
                %195 = vst [vmem:[%s153 + $0xa0] sm:%s145] %v194
                %v196 = vld [vmem:[%s152 + $0xa8] sm:%s145]
                %197 = vst [vmem:[%s153 + $0xa8] sm:%s145] %v196
                %v198 = vld [vmem:[%s152 + $0x160] sm:%s145]
                %199 = vst [vmem:[%s153 + $0xb0] sm:%s145] %v198
                %v200 = vld [vmem:[%s152 + $0x168] sm:%s145]
                %201 = vst [vmem:[%s153 + $0xb8] sm:%s145] %v200
                %v202 = vld [vmem:[%s152 + $0x170] sm:%s145]
                %203 = vst [vmem:[%s153 + $0xc0] sm:%s145] %v202
                %v204 = vld [vmem:[%s152 + $0x178] sm:%s145]
                %205 = vst [vmem:[%s153 + $0xc8] sm:%s145] %v204
                %v206 = vld [vmem:[%s152 + $0x180] sm:%s145]
                %207 = vst [vmem:[%s153 + $0xd0] sm:%s145] %v206
                %v208 = vld [vmem:[%s152 + $0x188] sm:%s145]
                %209 = vst [vmem:[%s153 + $0xd8] sm:%s145] %v208
                %v210 = vld [vmem:[%s152 + $0x190] sm:%s145]
                %211 = vst [vmem:[%s153 + $0xe0] sm:%s145] %v210
                %v212 = vld [vmem:[%s152 + $0x198] sm:%s145]
                %213 = vst [vmem:[%s153 + $0xe8] sm:%s145] %v212
                %v214 = vld [vmem:[%s152 + $0x1a0] sm:%s145]
                %215 = vst [vmem:[%s153 + $0xf0] sm:%s145] %v214
                %v216 = vld [vmem:[%s152 + $0x1a8] sm:%s145]
                %217 = vst [vmem:[%s153 + $0xf8] sm:%s145] %v216
                %v218 = vld [vmem:[%s152 + $0x1b0] sm:%s145]
                %219 = vst [vmem:[%s153 + $0x100] sm:%s145] %v218
                %v220 = vld [vmem:[%s152 + $0x1b8] sm:%s145]
                %221 = vst [vmem:[%s153 + $0x108] sm:%s145] %v220
                %v222 = vld [vmem:[%s152 + $0x1c0] sm:%s145]
                %223 = vst [vmem:[%s153 + $0x110] sm:%s145] %v222
                %v224 = vld [vmem:[%s152 + $0x1c8] sm:%s145]
                %225 = vst [vmem:[%s153 + $0x118] sm:%s145] %v224
                %v226 = vld [vmem:[%s152 + $0x1d0] sm:%s145]
                %227 = vst [vmem:[%s153 + $0x120] sm:%s145] %v226
                %v228 = vld [vmem:[%s152 + $0x1d8] sm:%s145]
                %229 = vst [vmem:[%s153 + $0x128] sm:%s145] %v228
                %v230 = vld [vmem:[%s152 + $0x1e0] sm:%s145]
                %231 = vst [vmem:[%s153 + $0x130] sm:%s145] %v230
                %v232 = vld [vmem:[%s152 + $0x1e8] sm:%s145]
                %233 = vst [vmem:[%s153 + $0x138] sm:%s145] %v232
                %v234 = vld [vmem:[%s152 + $0x1f0] sm:%s145]
                %235 = vst [vmem:[%s153 + $0x140] sm:%s145] %v234
                %v236 = vld [vmem:[%s152 + $0x1f8] sm:%s145]
                %237 = vst [vmem:[%s153 + $0x148] sm:%s145] %v236
                %v238 = vld [vmem:[%s152 + $0x200] sm:%s145]
                %239 = vst [vmem:[%s153 + $0x150] sm:%s145] %v238
                %v240 = vld [vmem:[%s152 + $0x208] sm:%s145]
                %241 = vst [vmem:[%s153 + $0x158] sm:%s145] %v240
                %v242 = vld [vmem:[%s152 + $0x2c0] sm:%s145]
                %243 = vst [vmem:[%s153 + $0x160] sm:%s145] %v242
                %v244 = vld [vmem:[%s152 + $0x2c8] sm:%s145]
                %245 = vst [vmem:[%s153 + $0x168] sm:%s145] %v244
                %v246 = vld [vmem:[%s152 + $0x2d0] sm:%s145]
                %247 = vst [vmem:[%s153 + $0x170] sm:%s145] %v246
                %v248 = vld [vmem:[%s152 + $0x2d8] sm:%s145]
                %249 = vst [vmem:[%s153 + $0x178] sm:%s145] %v248
                %v250 = vld [vmem:[%s152 + $0x2e0] sm:%s145]
                %251 = vst [vmem:[%s153 + $0x180] sm:%s145] %v250
                %v252 = vld [vmem:[%s152 + $0x2e8] sm:%s145]
                %253 = vst [vmem:[%s153 + $0x188] sm:%s145] %v252
                %v254 = vld [vmem:[%s152 + $0x2f0] sm:%s145]
                %255 = vst [vmem:[%s153 + $0x190] sm:%s145] %v254
                %v256 = vld [vmem:[%s152 + $0x2f8] sm:%s145]
                %257 = vst [vmem:[%s153 + $0x198] sm:%s145] %v256
                %v258 = vld [vmem:[%s152 + $0x300] sm:%s145]
                %259 = vst [vmem:[%s153 + $0x1a0] sm:%s145] %v258
                %v260 = vld [vmem:[%s152 + $0x308] sm:%s145]
                %261 = vst [vmem:[%s153 + $0x1a8] sm:%s145] %v260
                %v262 = vld [vmem:[%s152 + $0x310] sm:%s145]
                %263 = vst [vmem:[%s153 + $0x1b0] sm:%s145] %v262
                %v264 = vld [vmem:[%s152 + $0x318] sm:%s145]
                %265 = vst [vmem:[%s153 + $0x1b8] sm:%s145] %v264
                %v266 = vld [vmem:[%s152 + $0x320] sm:%s145]
                %267 = vst [vmem:[%s153 + $0x1c0] sm:%s145] %v266
                %v268 = vld [vmem:[%s152 + $0x328] sm:%s145]
                %269 = vst [vmem:[%s153 + $0x1c8] sm:%s145] %v268
                %v270 = vld [vmem:[%s152 + $0x330] sm:%s145]
                %271 = vst [vmem:[%s153 + $0x1d0] sm:%s145] %v270
                %v272 = vld [vmem:[%s152 + $0x338] sm:%s145]
                %273 = vst [vmem:[%s153 + $0x1d8] sm:%s145] %v272
                %v274 = vld [vmem:[%s152 + $0x340] sm:%s145]
                %275 = vst [vmem:[%s153 + $0x1e0] sm:%s145] %v274
                %v276 = vld [vmem:[%s152 + $0x348] sm:%s145]
                %277 = vst [vmem:[%s153 + $0x1e8] sm:%s145] %v276
                %v278 = vld [vmem:[%s152 + $0x350] sm:%s145]
                %279 = vst [vmem:[%s153 + $0x1f0] sm:%s145] %v278
                %v280 = vld [vmem:[%s152 + $0x358] sm:%s145]
                %281 = vst [vmem:[%s153 + $0x1f8] sm:%s145] %v280
                %v282 = vld [vmem:[%s152 + $0x360] sm:%s145]
                %283 = vst [vmem:[%s153 + $0x200] sm:%s145] %v282
                %v284 = vld [vmem:[%s152 + $0x368] sm:%s145]
                %285 = vst [vmem:[%s153 + $0x208] sm:%s145] %v284
                %v286 = vld [vmem:[%s152 + $0x420] sm:%s145]
                %287 = vst [vmem:[%s153 + $0x210] sm:%s145] %v286
                %v288 = vld [vmem:[%s152 + $0x428] sm:%s145]
                %289 = vst [vmem:[%s153 + $0x218] sm:%s145] %v288
                %v290 = vld [vmem:[%s152 + $0x430] sm:%s145]
                %291 = vst [vmem:[%s153 + $0x220] sm:%s145] %v290
                %v292 = vld [vmem:[%s152 + $0x438] sm:%s145]
                %293 = vst [vmem:[%s153 + $0x228] sm:%s145] %v292
                %v294 = vld [vmem:[%s152 + $0x440] sm:%s145]
                %295 = vst [vmem:[%s153 + $0x230] sm:%s145] %v294
                %v296 = vld [vmem:[%s152 + $0x448] sm:%s145]
                %297 = vst [vmem:[%s153 + $0x238] sm:%s145] %v296
                %v298 = vld [vmem:[%s152 + $0x450] sm:%s145]
                %299 = vst [vmem:[%s153 + $0x240] sm:%s145] %v298
                %v300 = vld [vmem:[%s152 + $0x458] sm:%s145]
                %301 = vst [vmem:[%s153 + $0x248] sm:%s145] %v300
                %v302 = vld [vmem:[%s152 + $0x460] sm:%s145]
                %303 = vst [vmem:[%s153 + $0x250] sm:%s145] %v302
                %v304 = vld [vmem:[%s152 + $0x468] sm:%s145]
                %305 = vst [vmem:[%s153 + $0x258] sm:%s145] %v304
                %v306 = vld [vmem:[%s152 + $0x470] sm:%s145]
                %307 = vst [vmem:[%s153 + $0x260] sm:%s145] %v306
                %v308 = vld [vmem:[%s152 + $0x478] sm:%s145]
                %309 = vst [vmem:[%s153 + $0x268] sm:%s145] %v308
                %v310 = vld [vmem:[%s152 + $0x480] sm:%s145]
                %311 = vst [vmem:[%s153 + $0x270] sm:%s145] %v310
                %v312 = vld [vmem:[%s152 + $0x488] sm:%s145]
                %313 = vst [vmem:[%s153 + $0x278] sm:%s145] %v312
                %v314 = vld [vmem:[%s152 + $0x490] sm:%s145]
                %315 = vst [vmem:[%s153 + $0x280] sm:%s145] %v314
                %v316 = vld [vmem:[%s152 + $0x498] sm:%s145]
                %317 = vst [vmem:[%s153 + $0x288] sm:%s145] %v316
                %v318 = vld [vmem:[%s152 + $0x4a0] sm:%s145]
                %319 = vst [vmem:[%s153 + $0x290] sm:%s145] %v318
                %v320 = vld [vmem:[%s152 + $0x4a8] sm:%s145]
                %321 = vst [vmem:[%s153 + $0x298] sm:%s145] %v320
                %v322 = vld [vmem:[%s152 + $0x4b0] sm:%s145]
                %323 = vst [vmem:[%s153 + $0x2a0] sm:%s145] %v322
                %v324 = vld [vmem:[%s152 + $0x4b8] sm:%s145]
                %325 = vst [vmem:[%s153 + $0x2a8] sm:%s145] %v324
                %v326 = vld [vmem:[%s152 + $0x4c0] sm:%s145]
                %327 = vst [vmem:[%s153 + $0x2b0] sm:%s145] %v326
                %v328 = vld [vmem:[%s152 + $0x4c8] sm:%s145]
                %329 = vst [vmem:[%s153 + $0x2b8] sm:%s145] %v328
              $region45: #{_lambda_.3} parent=39 // loop_footer
                %s151 = sadd.s32 1, %s147
              $region46: #{_lambda_.3} parent=39 // loop_footer_branch
                %146 = sbr.rel target = $region42
              $region47: #{_lambda_.3} parent=39 // loop_exit
                _
            $region40: #{_lambda_.3} parent=31 // pred_fallthru
              _
          $region32: #{_lambda_.3} parent=27 // pred_fallthru
            _
          %518 = vnop
        $region28: #{_lambda_.3} parent=23 // pred_fallthru
          _
      $region24: #{_lambda_.3} parent=5 // pred_fallthru
        _
      %p519 = scmp.le.s32.totalorder 1, %s9
      %p520 = scmp.lt.s32.totalorder %s9, 3
      %p521 = pnand %p519, %p520
      %p522 = pneg %p521
      // Predicated region
      $region63: #{_lambda_.3} parent=5 // pred_check
        _
      $region64: #{_lambda_.3} parent=5 // pred_check_branch
        %524 = sbr.rel (%p521) target = $region66
      $region65: #{_lambda_.3} parent=5 // pred_region
        %s525 = ssub.s32 %s9, 1
        %s526 = sand.u32 %s22, 1
        %s527 = sand.u32 %s22, 1
        %s528 = smul.addr %s527, 704
        %s529 = scalar_lea.vmem [#allocation2], %s528
        // Predicated region
        $region67: #{_lambda_.3} parent=65 // pred_check
          %p530 = pneg %p35
        $region68: #{_lambda_.3} parent=65 // pred_check_branch
          %532 = sbr.rel (%p530) target = $region70
        $region69: #{_lambda_.3} parent=65 // pred_region
          _
        $region70: #{_lambda_.3} parent=65 // pred_fallthru
          _
        %s533 = sand.u32 %s22, 1
        %s534 = sand.u32 %s22, 1
        %s535 = smul.addr %s534, 704
        %s536 = scalar_lea.vmem [#allocation2], %s535
        %p537 = pneg %p35
        %p538 = pneg %p32
        %p539 = pneg %p56
        %p540 = pneg %p53
        %p541 = pneg %p77
        %p542 = pneg %p74
        %p543 = pneg %p103
        %p544 = pneg %p100
        %p545 = scmp.lt.s32.totalorder %s14, 1
        %s546 = scalar_select %p545, %s14, 1
        %s547 = smul.addr %s546, 8
        %s548 = smul.addr %s547, 8
        %s549 = scalar_lea.vmem %s3, %s548
        %p550 = scmp.lt.s32.totalorder %s14, 1
        %s551 = scalar_select %p550, %s14, 1
        %s552 = smul.addr %s551, 8
        %s553 = smul.addr %s552, 8
        %s554 = scalar_lea.vmem %s3, %s553
        %v555 = vld [vmem:[%s529] sm:$0xff]
        %v556 = vld [vmem:[%s529 + $0x8] sm:$0x7]
        %v557 = vld [vmem:[%s529 + $0x10] sm:$0xff]
        %v558 = vld [vmem:[%s529 + $0x18] sm:$0x7]
        %v559 = vld [vmem:[%s529 + $0x20] sm:$0xff]
        %v560 = vld [vmem:[%s529 + $0x28] sm:$0x7]
        %v561 = vld [vmem:[%s529 + $0x30] sm:$0xff]
        %v562 = vld [vmem:[%s529 + $0x38] sm:$0x7]
        %v563 = vld [vmem:[%s529 + $0x40] sm:$0xff]
        %v564 = vld [vmem:[%s529 + $0x48] sm:$0x7]
        %v565 = vld [vmem:[%s529 + $0x50] sm:$0xff]
        %v566 = vld [vmem:[%s529 + $0x58] sm:$0x7]
        %v567 = vld [vmem:[%s529 + $0x60] sm:$0xff]
        %v568 = vld [vmem:[%s529 + $0x68] sm:$0x7]
        %v569 = vld [vmem:[%s529 + $0x70] sm:$0xff]
        %v570 = vld [vmem:[%s529 + $0x78] sm:$0x7]
        %v571 = vld [vmem:[%s529 + $0x80] sm:$0xff]
        %v572 = vld [vmem:[%s529 + $0x88] sm:$0x7]
        %v573 = vld [vmem:[%s529 + $0x90] sm:$0xff]
        %v574 = vld [vmem:[%s529 + $0x98] sm:$0x7]
        %v575 = vld [vmem:[%s529 + $0xa0] sm:$0xff]
        %v576 = vld [vmem:[%s529 + $0xa8] sm:$0x7]
        %s577 = scalar_lea.vmem %s529, 176 [#allocation2]
        %v578 = vld [vmem:[%s577] sm:$0xff]
        %v579 = vld [vmem:[%s577 + $0x8] sm:$0x7]
        %v580 = vld [vmem:[%s577 + $0x10] sm:$0xff]
        %v581 = vld [vmem:[%s577 + $0x18] sm:$0x7]
        %v582 = vld [vmem:[%s577 + $0x20] sm:$0xff]
        %v583 = vld [vmem:[%s577 + $0x28] sm:$0x7]
        %v584 = vld [vmem:[%s577 + $0x30] sm:$0xff]
        %v585 = vld [vmem:[%s577 + $0x38] sm:$0x7]
        %v586 = vld [vmem:[%s577 + $0x40] sm:$0xff]
        %v587 = vld [vmem:[%s577 + $0x48] sm:$0x7]
        %v588 = vld [vmem:[%s577 + $0x50] sm:$0xff]
        %v589 = vld [vmem:[%s577 + $0x58] sm:$0x7]
        %v590 = vld [vmem:[%s577 + $0x60] sm:$0xff]
        %v591 = vld [vmem:[%s577 + $0x68] sm:$0x7]
        %v592 = vld [vmem:[%s577 + $0x70] sm:$0xff]
        %v593 = vld [vmem:[%s577 + $0x78] sm:$0x7]
        %v594 = vld [vmem:[%s577 + $0x80] sm:$0xff]
        %v595 = vld [vmem:[%s577 + $0x88] sm:$0x7]
        %v596 = vld [vmem:[%s577 + $0x90] sm:$0xff]
        %v597 = vld [vmem:[%s577 + $0x98] sm:$0x7]
        %v598 = vld [vmem:[%s577 + $0xa0] sm:$0xff]
        %v599 = vld [vmem:[%s577 + $0xa8] sm:$0x7]
        %s600 = scalar_lea.vmem %s529, 352 [#allocation2]
        %v601 = vld [vmem:[%s600] sm:$0xff]
        %v602 = vld [vmem:[%s600 + $0x8] sm:$0x7]
        %v603 = vld [vmem:[%s600 + $0x10] sm:$0xff]
        %v604 = vld [vmem:[%s600 + $0x18] sm:$0x7]
        %v605 = vld [vmem:[%s600 + $0x20] sm:$0xff]
        %v606 = vld [vmem:[%s600 + $0x28] sm:$0x7]
        %v607 = vld [vmem:[%s600 + $0x30] sm:$0xff]
        %v608 = vld [vmem:[%s600 + $0x38] sm:$0x7]
        %v609 = vld [vmem:[%s600 + $0x40] sm:$0xff]
        %v610 = vld [vmem:[%s600 + $0x48] sm:$0x7]
        %v611 = vld [vmem:[%s600 + $0x50] sm:$0xff]
        %v612 = vld [vmem:[%s600 + $0x58] sm:$0x7]
        %v613 = vld [vmem:[%s600 + $0x60] sm:$0xff]
        %v614 = vld [vmem:[%s600 + $0x68] sm:$0x7]
        %v615 = vld [vmem:[%s600 + $0x70] sm:$0xff]
        %v616 = vld [vmem:[%s600 + $0x78] sm:$0x7]
        %v617 = vld [vmem:[%s600 + $0x80] sm:$0xff]
        %v618 = vld [vmem:[%s600 + $0x88] sm:$0x7]
        %v619 = vld [vmem:[%s600 + $0x90] sm:$0xff]
        %v620 = vld [vmem:[%s600 + $0x98] sm:$0x7]
        %s621 = scalar_lea.vmem %s529, 528 [#allocation2]
        %v622 = vld [vmem:[%s621] sm:$0xff]
        %v623 = vld [vmem:[%s621 + $0x8] sm:$0x7]
        %v624 = vld [vmem:[%s621 + $0x10] sm:$0xff]
        %v625 = vld [vmem:[%s621 + $0x18] sm:$0x7]
        %v626 = vld [vmem:[%s621 + $0x20] sm:$0xff]
        %v627 = vld [vmem:[%s621 + $0x28] sm:$0x7]
        %v628 = vld [vmem:[%s621 + $0x30] sm:$0xff]
        %v629 = vld [vmem:[%s621 + $0x38] sm:$0x7]
        %v630 = vld [vmem:[%s621 + $0x40] sm:$0xff]
        %v631 = vld [vmem:[%s621 + $0x48] sm:$0x7]
        %v632 = vld [vmem:[%s621 + $0x50] sm:$0xff]
        %v633 = vld [vmem:[%s621 + $0x58] sm:$0x7]
        %v634 = vld [vmem:[%s621 + $0x60] sm:$0xff]
        %v635 = vld [vmem:[%s621 + $0x68] sm:$0x7]
        %v636 = vld [vmem:[%s621 + $0x70] sm:$0xff]
        %v637 = vld [vmem:[%s621 + $0x78] sm:$0x7]
        %v638 = vld [vmem:[%s621 + $0x80] sm:$0xff]
        %v639 = vld [vmem:[%s621 + $0x88] sm:$0x7]
        %v640 = vld [vmem:[%s621 + $0x90] sm:$0xff]
        %v641 = vld [vmem:[%s621 + $0x98] sm:$0x7]
        %v642 = vld [vmem:[%s1] sm:$0x1]
        %s643 = scalar_lea.vmem %s1, 1
        %v644 = vld [vmem:[%s643] sm:$0x1]
        %vm645 = vcmask 7168
        %v647 = vsel %vm645, %v578, 0
        %v650 = vsel %vm645, %v580, 0
        %v653 = vsel %vm645, %v582, 0
        %v656 = vsel %vm645, %v584, 0
        %v659 = vsel %vm645, %v586, 0
        %v662 = vsel %vm645, %v588, 0
        %v665 = vsel %vm645, %v590, 0
        %v668 = vsel %vm645, %v592, 0
        %vm670 = vcmask 1040384
        %v672 = vsel %vm670, %v644, 0
        %674 = vmatpush.msra.mxu0 0.0
        %675 = vmatpush.msra.mxu0 0.0
        %676 = vmatpush.msra.mxu0 0.0
        %677 = vmatpush.msra.mxu0 0.0
        %678 = vmatpush.msra.mxu0 0.0
        %679 = vmatpush.msra.mxu0 0.0
        %680 = vmatpush.msra.mxu0 0.0
        %681 = vmatpush.msra.mxu0 0.0
        %682 = vmatpush.msra.mxu0 0.0
        %683 = vmatpush.msra.mxu0 0.0
        %684 = vmatpush.msra.mxu0 0.0
        %685 = vmatpush.msra.mxu0 0.0
        %686 = vmatpush.msra.mxu0 0.0
        %687 = vmatpush.msra.mxu0 0.0
        %688 = vmatpush.msra.mxu0 0.0
        %689 = vmatpush.msra.mxu0 %v672
        %690 = vmatmul.f32.gmra.mxu0 %v647
        %v691 = vpop.f32.mrf.mxu0
        %v692 = vadd.f32 0.0, %v691
        %693 = vmatmul.f32.gmra.mxu0 %v650
        %v694 = vpop.f32.mrf.mxu0
        %v695 = vadd.f32 0.0, %v694
        %696 = vmatmul.f32.gmra.mxu0 %v653
        %v697 = vpop.f32.mrf.mxu0
        %v698 = vadd.f32 0.0, %v697
        %699 = vmatmul.f32.gmra.mxu0 %v656
        %v700 = vpop.f32.mrf.mxu0
        %v701 = vadd.f32 0.0, %v700
        %702 = vmatmul.f32.gmra.mxu0 %v659
        %v703 = vpop.f32.mrf.mxu0
        %v704 = vadd.f32 0.0, %v703
        %705 = vmatmul.f32.gmra.mxu0 %v662
        %v706 = vpop.f32.mrf.mxu0
        %v707 = vadd.f32 0.0, %v706
        %708 = vmatmul.f32.gmra.mxu0 %v665
        %v709 = vpop.f32.mrf.mxu0
        %v710 = vadd.f32 0.0, %v709
        %711 = vmatmul.f32.gmra.mxu0 %v668
        %v712 = vpop.f32.mrf.mxu0
        %v713 = vadd.f32 0.0, %v712
        %714 = vdwg.mxu0
        %v716 = vsel %vm645, %v555, 0
        %v719 = vsel %vm645, %v557, 0
        %v722 = vsel %vm645, %v559, 0
        %v725 = vsel %vm645, %v561, 0
        %v728 = vsel %vm645, %v563, 0
        %v731 = vsel %vm645, %v565, 0
        %v734 = vsel %vm645, %v567, 0
        %v737 = vsel %vm645, %v569, 0
        %v740 = vsel %vm670, %v642, 0
        %742 = vmatpush.msra.mxu0 0.0
        %743 = vmatpush.msra.mxu0 0.0
        %744 = vmatpush.msra.mxu0 0.0
        %745 = vmatpush.msra.mxu0 0.0
        %746 = vmatpush.msra.mxu0 0.0
        %747 = vmatpush.msra.mxu0 0.0
        %748 = vmatpush.msra.mxu0 0.0
        %749 = vmatpush.msra.mxu0 0.0
        %750 = vmatpush.msra.mxu0 0.0
        %751 = vmatpush.msra.mxu0 0.0
        %752 = vmatpush.msra.mxu0 0.0
        %753 = vmatpush.msra.mxu0 0.0
        %754 = vmatpush.msra.mxu0 0.0
        %755 = vmatpush.msra.mxu0 0.0
        %756 = vmatpush.msra.mxu0 0.0
        %757 = vmatpush.msra.mxu0 %v740
        %758 = vmatmul.f32.gmra.mxu0 %v716
        %v759 = vpop.f32.mrf.mxu0
        %v760 = vadd.f32 %v692, %v759
        %761 = vmatmul.f32.gmra.mxu0 %v719
        %v762 = vpop.f32.mrf.mxu0
        %v763 = vadd.f32 %v695, %v762
        %764 = vmatmul.f32.gmra.mxu0 %v722
        %v765 = vpop.f32.mrf.mxu0
        %v766 = vadd.f32 %v698, %v765
        %767 = vmatmul.f32.gmra.mxu0 %v725
        %v768 = vpop.f32.mrf.mxu0
        %v769 = vadd.f32 %v701, %v768
        %770 = vmatmul.f32.gmra.mxu0 %v728
        %v771 = vpop.f32.mrf.mxu0
        %v772 = vadd.f32 %v704, %v771
        %773 = vmatmul.f32.gmra.mxu0 %v731
        %v774 = vpop.f32.mrf.mxu0
        %v775 = vadd.f32 %v707, %v774
        %776 = vmatmul.f32.gmra.mxu0 %v734
        %v777 = vpop.f32.mrf.mxu0
        %v778 = vadd.f32 %v710, %v777
        %779 = vmatmul.f32.gmra.mxu0 %v737
        %v780 = vpop.f32.mrf.mxu0
        %v781 = vadd.f32 %v713, %v780
        %782 = vdwg.mxu0
        %vm791 = vcmask 1046528
        %v792 = vrot.slane %v555, 1
        %v793 = vrot.slane %v556, 1
        %v794 = vsel %vm791, %v792, %v793
        %v795 = vrot.slane %v557, 1
        %v796 = vrot.slane %v558, 1
        %v797 = vsel %vm791, %v795, %v796
        %v798 = vrot.slane %v559, 1
        %v799 = vrot.slane %v560, 1
        %v800 = vsel %vm791, %v798, %v799
        %v801 = vrot.slane %v561, 1
        %v802 = vrot.slane %v562, 1
        %v803 = vsel %vm791, %v801, %v802
        %v804 = vrot.slane %v563, 1
        %v805 = vrot.slane %v564, 1
        %v806 = vsel %vm791, %v804, %v805
        %v807 = vrot.slane %v565, 1
        %v808 = vrot.slane %v566, 1
        %v809 = vsel %vm791, %v807, %v808
        %v810 = vrot.slane %v567, 1
        %v811 = vrot.slane %v568, 1
        %v812 = vsel %vm791, %v810, %v811
        %v813 = vrot.slane %v569, 1
        %v814 = vrot.slane %v570, 1
        %v815 = vsel %vm791, %v813, %v814
        %s816 = scalar_lea.vmem %s1, 2
        %v817 = vld [vmem:[%s816] sm:$0x1]
        %v818 = vsel %vm645, %v794, 0
        %v820 = vsel %vm645, %v797, 0
        %v822 = vsel %vm645, %v800, 0
        %v824 = vsel %vm645, %v803, 0
        %v826 = vsel %vm645, %v806, 0
        %v828 = vsel %vm645, %v809, 0
        %v830 = vsel %vm645, %v812, 0
        %v832 = vsel %vm645, %v815, 0
        %v835 = vsel %vm670, %v817, 0
        %837 = vmatpush.msra.mxu0 0.0
        %838 = vmatpush.msra.mxu0 0.0
        %839 = vmatpush.msra.mxu0 0.0
        %840 = vmatpush.msra.mxu0 0.0
        %841 = vmatpush.msra.mxu0 0.0
        %842 = vmatpush.msra.mxu0 0.0
        %843 = vmatpush.msra.mxu0 0.0
        %844 = vmatpush.msra.mxu0 0.0
        %845 = vmatpush.msra.mxu0 0.0
        %846 = vmatpush.msra.mxu0 0.0
        %847 = vmatpush.msra.mxu0 0.0
        %848 = vmatpush.msra.mxu0 0.0
        %849 = vmatpush.msra.mxu0 0.0
        %850 = vmatpush.msra.mxu0 0.0
        %851 = vmatpush.msra.mxu0 0.0
        %852 = vmatpush.msra.mxu0 %v835
        %853 = vmatmul.f32.gmra.mxu0 %v818
        %v854 = vpop.f32.mrf.mxu0
        %v855 = vadd.f32 0.0, %v854
        %856 = vmatmul.f32.gmra.mxu0 %v820
        %v857 = vpop.f32.mrf.mxu0
        %v858 = vadd.f32 0.0, %v857
        %859 = vmatmul.f32.gmra.mxu0 %v822
        %v860 = vpop.f32.mrf.mxu0
        %v861 = vadd.f32 0.0, %v860
        %862 = vmatmul.f32.gmra.mxu0 %v824
        %v863 = vpop.f32.mrf.mxu0
        %v864 = vadd.f32 0.0, %v863
        %865 = vmatmul.f32.gmra.mxu0 %v826
        %v866 = vpop.f32.mrf.mxu0
        %v867 = vadd.f32 0.0, %v866
        %868 = vmatmul.f32.gmra.mxu0 %v828
        %v869 = vpop.f32.mrf.mxu0
        %v870 = vadd.f32 0.0, %v869
        %871 = vmatmul.f32.gmra.mxu0 %v830
        %v872 = vpop.f32.mrf.mxu0
        %v873 = vadd.f32 0.0, %v872
        %874 = vmatmul.f32.gmra.mxu0 %v832
        %v875 = vpop.f32.mrf.mxu0
        %v876 = vadd.f32 0.0, %v875
        %877 = vdwg.mxu0
        %v878 = vadd.f32 %v760, %v855
        %v879 = vadd.f32 %v763, %v858
        %v880 = vadd.f32 %v766, %v861
        %v881 = vadd.f32 %v769, %v864
        %v882 = vadd.f32 %v772, %v867
        %v883 = vadd.f32 %v775, %v870
        %v884 = vadd.f32 %v778, %v873
        %v885 = vadd.f32 %v781, %v876
        %v894 = vrot.slane %v578, 1
        %v895 = vrot.slane %v579, 1
        %v896 = vsel %vm791, %v894, %v895
        %v897 = vrot.slane %v580, 1
        %v898 = vrot.slane %v581, 1
        %v899 = vsel %vm791, %v897, %v898
        %v900 = vrot.slane %v582, 1
        %v901 = vrot.slane %v583, 1
        %v902 = vsel %vm791, %v900, %v901
        %v903 = vrot.slane %v584, 1
        %v904 = vrot.slane %v585, 1
        %v905 = vsel %vm791, %v903, %v904
        %v906 = vrot.slane %v586, 1
        %v907 = vrot.slane %v587, 1
        %v908 = vsel %vm791, %v906, %v907
        %v909 = vrot.slane %v588, 1
        %v910 = vrot.slane %v589, 1
        %v911 = vsel %vm791, %v909, %v910
        %v912 = vrot.slane %v590, 1
        %v913 = vrot.slane %v591, 1
        %v914 = vsel %vm791, %v912, %v913
        %v915 = vrot.slane %v592, 1
        %v916 = vrot.slane %v593, 1
        %v917 = vsel %vm791, %v915, %v916
        %s918 = scalar_lea.vmem %s1, 3
        %v919 = vld [vmem:[%s918] sm:$0x1]
        %v920 = vsel %vm645, %v896, 0
        %v922 = vsel %vm645, %v899, 0
        %v924 = vsel %vm645, %v902, 0
        %v926 = vsel %vm645, %v905, 0
        %v928 = vsel %vm645, %v908, 0
        %v930 = vsel %vm645, %v911, 0
        %v932 = vsel %vm645, %v914, 0
        %v934 = vsel %vm645, %v917, 0
        %v937 = vsel %vm670, %v919, 0
        %939 = vmatpush.msra.mxu0 0.0
        %940 = vmatpush.msra.mxu0 0.0
        %941 = vmatpush.msra.mxu0 0.0
        %942 = vmatpush.msra.mxu0 0.0
        %943 = vmatpush.msra.mxu0 0.0
        %944 = vmatpush.msra.mxu0 0.0
        %945 = vmatpush.msra.mxu0 0.0
        %946 = vmatpush.msra.mxu0 0.0
        %947 = vmatpush.msra.mxu0 0.0
        %948 = vmatpush.msra.mxu0 0.0
        %949 = vmatpush.msra.mxu0 0.0
        %950 = vmatpush.msra.mxu0 0.0
        %951 = vmatpush.msra.mxu0 0.0
        %952 = vmatpush.msra.mxu0 0.0
        %953 = vmatpush.msra.mxu0 0.0
        %954 = vmatpush.msra.mxu0 %v937
        %955 = vmatmul.f32.gmra.mxu0 %v920
        %v956 = vpop.f32.mrf.mxu0
        %v957 = vadd.f32 0.0, %v956
        %958 = vmatmul.f32.gmra.mxu0 %v922
        %v959 = vpop.f32.mrf.mxu0
        %v960 = vadd.f32 0.0, %v959
        %961 = vmatmul.f32.gmra.mxu0 %v924
        %v962 = vpop.f32.mrf.mxu0
        %v963 = vadd.f32 0.0, %v962
        %964 = vmatmul.f32.gmra.mxu0 %v926
        %v965 = vpop.f32.mrf.mxu0
        %v966 = vadd.f32 0.0, %v965
        %967 = vmatmul.f32.gmra.mxu0 %v928
        %v968 = vpop.f32.mrf.mxu0
        %v969 = vadd.f32 0.0, %v968
        %970 = vmatmul.f32.gmra.mxu0 %v930
        %v971 = vpop.f32.mrf.mxu0
        %v972 = vadd.f32 0.0, %v971
        %973 = vmatmul.f32.gmra.mxu0 %v932
        %v974 = vpop.f32.mrf.mxu0
        %v975 = vadd.f32 0.0, %v974
        %976 = vmatmul.f32.gmra.mxu0 %v934
        %v977 = vpop.f32.mrf.mxu0
        %v978 = vadd.f32 0.0, %v977
        %979 = vdwg.mxu0
        %v980 = vadd.f32 %v878, %v957
        %v981 = vadd.f32 %v879, %v960
        %v982 = vadd.f32 %v880, %v963
        %v983 = vadd.f32 %v881, %v966
        %v984 = vadd.f32 %v882, %v969
        %v985 = vadd.f32 %v883, %v972
        %v986 = vadd.f32 %v884, %v975
        %v987 = vadd.f32 %v885, %v978
        %vm988 = vcmask 1045504
        %v989 = vrot.slane %v555, 2
        %v990 = vrot.slane %v556, 2
        %v991 = vsel %vm988, %v989, %v990
        %v992 = vrot.slane %v557, 2
        %v993 = vrot.slane %v558, 2
        %v994 = vsel %vm988, %v992, %v993
        %v995 = vrot.slane %v559, 2
        %v996 = vrot.slane %v560, 2
        %v997 = vsel %vm988, %v995, %v996
        %v998 = vrot.slane %v561, 2
        %v999 = vrot.slane %v562, 2
        %v1000 = vsel %vm988, %v998, %v999
        %v1001 = vrot.slane %v563, 2
        %v1002 = vrot.slane %v564, 2
        %v1003 = vsel %vm988, %v1001, %v1002
        %v1004 = vrot.slane %v565, 2
        %v1005 = vrot.slane %v566, 2
        %v1006 = vsel %vm988, %v1004, %v1005
        %v1007 = vrot.slane %v567, 2
        %v1008 = vrot.slane %v568, 2
        %v1009 = vsel %vm988, %v1007, %v1008
        %v1010 = vrot.slane %v569, 2
        %v1011 = vrot.slane %v570, 2
        %v1012 = vsel %vm988, %v1010, %v1011
        %s1013 = scalar_lea.vmem %s1, 4
        %v1014 = vld [vmem:[%s1013] sm:$0x1]
        %v1015 = vsel %vm645, %v991, 0
        %v1017 = vsel %vm645, %v994, 0
        %v1019 = vsel %vm645, %v997, 0
        %v1021 = vsel %vm645, %v1000, 0
        %v1023 = vsel %vm645, %v1003, 0
        %v1025 = vsel %vm645, %v1006, 0
        %v1027 = vsel %vm645, %v1009, 0
        %v1029 = vsel %vm645, %v1012, 0
        %v1032 = vsel %vm670, %v1014, 0
        %1034 = vmatpush.msra.mxu0 0.0
        %1035 = vmatpush.msra.mxu0 0.0
        %1036 = vmatpush.msra.mxu0 0.0
        %1037 = vmatpush.msra.mxu0 0.0
        %1038 = vmatpush.msra.mxu0 0.0
        %1039 = vmatpush.msra.mxu0 0.0
        %1040 = vmatpush.msra.mxu0 0.0
        %1041 = vmatpush.msra.mxu0 0.0
        %1042 = vmatpush.msra.mxu0 0.0
        %1043 = vmatpush.msra.mxu0 0.0
        %1044 = vmatpush.msra.mxu0 0.0
        %1045 = vmatpush.msra.mxu0 0.0
        %1046 = vmatpush.msra.mxu0 0.0
        %1047 = vmatpush.msra.mxu0 0.0
        %1048 = vmatpush.msra.mxu0 0.0
        %1049 = vmatpush.msra.mxu0 %v1032
        %1050 = vmatmul.f32.gmra.mxu0 %v1015
        %v1051 = vpop.f32.mrf.mxu0
        %v1052 = vadd.f32 0.0, %v1051
        %1053 = vmatmul.f32.gmra.mxu0 %v1017
        %v1054 = vpop.f32.mrf.mxu0
        %v1055 = vadd.f32 0.0, %v1054
        %1056 = vmatmul.f32.gmra.mxu0 %v1019
        %v1057 = vpop.f32.mrf.mxu0
        %v1058 = vadd.f32 0.0, %v1057
        %1059 = vmatmul.f32.gmra.mxu0 %v1021
        %v1060 = vpop.f32.mrf.mxu0
        %v1061 = vadd.f32 0.0, %v1060
        %1062 = vmatmul.f32.gmra.mxu0 %v1023
        %v1063 = vpop.f32.mrf.mxu0
        %v1064 = vadd.f32 0.0, %v1063
        %1065 = vmatmul.f32.gmra.mxu0 %v1025
        %v1066 = vpop.f32.mrf.mxu0
        %v1067 = vadd.f32 0.0, %v1066
        %1068 = vmatmul.f32.gmra.mxu0 %v1027
        %v1069 = vpop.f32.mrf.mxu0
        %v1070 = vadd.f32 0.0, %v1069
        %1071 = vmatmul.f32.gmra.mxu0 %v1029
        %v1072 = vpop.f32.mrf.mxu0
        %v1073 = vadd.f32 0.0, %v1072
        %1074 = vdwg.mxu0
        %v1075 = vadd.f32 %v980, %v1052
        %v1076 = vadd.f32 %v981, %v1055
        %v1077 = vadd.f32 %v982, %v1058
        %v1078 = vadd.f32 %v983, %v1061
        %v1079 = vadd.f32 %v984, %v1064
        %v1080 = vadd.f32 %v985, %v1067
        %v1081 = vadd.f32 %v986, %v1070
        %v1082 = vadd.f32 %v987, %v1073
        %v1083 = vrot.slane %v578, 2
        %v1084 = vrot.slane %v579, 2
        %v1085 = vsel %vm988, %v1083, %v1084
        %v1086 = vrot.slane %v580, 2
        %v1087 = vrot.slane %v581, 2
        %v1088 = vsel %vm988, %v1086, %v1087
        %v1089 = vrot.slane %v582, 2
        %v1090 = vrot.slane %v583, 2
        %v1091 = vsel %vm988, %v1089, %v1090
        %v1092 = vrot.slane %v584, 2
        %v1093 = vrot.slane %v585, 2
        %v1094 = vsel %vm988, %v1092, %v1093
        %v1095 = vrot.slane %v586, 2
        %v1096 = vrot.slane %v587, 2
        %v1097 = vsel %vm988, %v1095, %v1096
        %v1098 = vrot.slane %v588, 2
        %v1099 = vrot.slane %v589, 2
        %v1100 = vsel %vm988, %v1098, %v1099
        %v1101 = vrot.slane %v590, 2
        %v1102 = vrot.slane %v591, 2
        %v1103 = vsel %vm988, %v1101, %v1102
        %v1104 = vrot.slane %v592, 2
        %v1105 = vrot.slane %v593, 2
        %v1106 = vsel %vm988, %v1104, %v1105
        %s1107 = scalar_lea.vmem %s1, 5
        %v1108 = vld [vmem:[%s1107] sm:$0x1]
        %v1109 = vsel %vm645, %v1085, 0
        %v1111 = vsel %vm645, %v1088, 0
        %v1113 = vsel %vm645, %v1091, 0
        %v1115 = vsel %vm645, %v1094, 0
        %v1117 = vsel %vm645, %v1097, 0
        %v1119 = vsel %vm645, %v1100, 0
        %v1121 = vsel %vm645, %v1103, 0
        %v1123 = vsel %vm645, %v1106, 0
        %v1126 = vsel %vm670, %v1108, 0
        %1128 = vmatpush.msra.mxu0 0.0
        %1129 = vmatpush.msra.mxu0 0.0
        %1130 = vmatpush.msra.mxu0 0.0
        %1131 = vmatpush.msra.mxu0 0.0
        %1132 = vmatpush.msra.mxu0 0.0
        %1133 = vmatpush.msra.mxu0 0.0
        %1134 = vmatpush.msra.mxu0 0.0
        %1135 = vmatpush.msra.mxu0 0.0
        %1136 = vmatpush.msra.mxu0 0.0
        %1137 = vmatpush.msra.mxu0 0.0
        %1138 = vmatpush.msra.mxu0 0.0
        %1139 = vmatpush.msra.mxu0 0.0
        %1140 = vmatpush.msra.mxu0 0.0
        %1141 = vmatpush.msra.mxu0 0.0
        %1142 = vmatpush.msra.mxu0 0.0
        %1143 = vmatpush.msra.mxu0 %v1126
        %1144 = vmatmul.f32.gmra.mxu0 %v1109
        %v1145 = vpop.f32.mrf.mxu0
        %v1146 = vadd.f32 0.0, %v1145
        %1147 = vmatmul.f32.gmra.mxu0 %v1111
        %v1148 = vpop.f32.mrf.mxu0
        %v1149 = vadd.f32 0.0, %v1148
        %1150 = vmatmul.f32.gmra.mxu0 %v1113
        %v1151 = vpop.f32.mrf.mxu0
        %v1152 = vadd.f32 0.0, %v1151
        %1153 = vmatmul.f32.gmra.mxu0 %v1115
        %v1154 = vpop.f32.mrf.mxu0
        %v1155 = vadd.f32 0.0, %v1154
        %1156 = vmatmul.f32.gmra.mxu0 %v1117
        %v1157 = vpop.f32.mrf.mxu0
        %v1158 = vadd.f32 0.0, %v1157
        %1159 = vmatmul.f32.gmra.mxu0 %v1119
        %v1160 = vpop.f32.mrf.mxu0
        %v1161 = vadd.f32 0.0, %v1160
        %1162 = vmatmul.f32.gmra.mxu0 %v1121
        %v1163 = vpop.f32.mrf.mxu0
        %v1164 = vadd.f32 0.0, %v1163
        %1165 = vmatmul.f32.gmra.mxu0 %v1123
        %v1166 = vpop.f32.mrf.mxu0
        %v1167 = vadd.f32 0.0, %v1166
        %1168 = vdwg.mxu0
        %v1169 = vadd.f32 %v1075, %v1146
        %v1170 = vadd.f32 %v1076, %v1149
        %v1171 = vadd.f32 %v1077, %v1152
        %v1172 = vadd.f32 %v1078, %v1155
        %v1173 = vadd.f32 %v1079, %v1158
        %v1174 = vadd.f32 %v1080, %v1161
        %v1175 = vadd.f32 %v1081, %v1164
        %v1176 = vadd.f32 %v1082, %v1167
        %vm1177 = vcmask 1044480
        %v1178 = vrot.slane %v555, 3
        %v1179 = vrot.slane %v556, 3
        %v1180 = vsel %vm1177, %v1178, %v1179
        %v1181 = vrot.slane %v557, 3
        %v1182 = vrot.slane %v558, 3
        %v1183 = vsel %vm1177, %v1181, %v1182
        %v1184 = vrot.slane %v559, 3
        %v1185 = vrot.slane %v560, 3
        %v1186 = vsel %vm1177, %v1184, %v1185
        %v1187 = vrot.slane %v561, 3
        %v1188 = vrot.slane %v562, 3
        %v1189 = vsel %vm1177, %v1187, %v1188
        %v1190 = vrot.slane %v563, 3
        %v1191 = vrot.slane %v564, 3
        %v1192 = vsel %vm1177, %v1190, %v1191
        %v1193 = vrot.slane %v565, 3
        %v1194 = vrot.slane %v566, 3
        %v1195 = vsel %vm1177, %v1193, %v1194
        %v1196 = vrot.slane %v567, 3
        %v1197 = vrot.slane %v568, 3
        %v1198 = vsel %vm1177, %v1196, %v1197
        %v1199 = vrot.slane %v569, 3
        %v1200 = vrot.slane %v570, 3
        %v1201 = vsel %vm1177, %v1199, %v1200
        %s1202 = scalar_lea.vmem %s1, 6
        %v1203 = vld [vmem:[%s1202] sm:$0x1]
        %v1204 = vsel %vm645, %v1180, 0
        %v1206 = vsel %vm645, %v1183, 0
        %v1208 = vsel %vm645, %v1186, 0
        %v1210 = vsel %vm645, %v1189, 0
        %v1212 = vsel %vm645, %v1192, 0
        %v1214 = vsel %vm645, %v1195, 0
        %v1216 = vsel %vm645, %v1198, 0
        %v1218 = vsel %vm645, %v1201, 0
        %v1221 = vsel %vm670, %v1203, 0
        %1223 = vmatpush.msra.mxu0 0.0
        %1224 = vmatpush.msra.mxu0 0.0
        %1225 = vmatpush.msra.mxu0 0.0
        %1226 = vmatpush.msra.mxu0 0.0
        %1227 = vmatpush.msra.mxu0 0.0
        %1228 = vmatpush.msra.mxu0 0.0
        %1229 = vmatpush.msra.mxu0 0.0
        %1230 = vmatpush.msra.mxu0 0.0
        %1231 = vmatpush.msra.mxu0 0.0
        %1232 = vmatpush.msra.mxu0 0.0
        %1233 = vmatpush.msra.mxu0 0.0
        %1234 = vmatpush.msra.mxu0 0.0
        %1235 = vmatpush.msra.mxu0 0.0
        %1236 = vmatpush.msra.mxu0 0.0
        %1237 = vmatpush.msra.mxu0 0.0
        %1238 = vmatpush.msra.mxu0 %v1221
        %1239 = vmatmul.f32.gmra.mxu0 %v1204
        %v1240 = vpop.f32.mrf.mxu0
        %v1241 = vadd.f32 0.0, %v1240
        %1242 = vmatmul.f32.gmra.mxu0 %v1206
        %v1243 = vpop.f32.mrf.mxu0
        %v1244 = vadd.f32 0.0, %v1243
        %1245 = vmatmul.f32.gmra.mxu0 %v1208
        %v1246 = vpop.f32.mrf.mxu0
        %v1247 = vadd.f32 0.0, %v1246
        %1248 = vmatmul.f32.gmra.mxu0 %v1210
        %v1249 = vpop.f32.mrf.mxu0
        %v1250 = vadd.f32 0.0, %v1249
        %1251 = vmatmul.f32.gmra.mxu0 %v1212
        %v1252 = vpop.f32.mrf.mxu0
        %v1253 = vadd.f32 0.0, %v1252
        %1254 = vmatmul.f32.gmra.mxu0 %v1214
        %v1255 = vpop.f32.mrf.mxu0
        %v1256 = vadd.f32 0.0, %v1255
        %1257 = vmatmul.f32.gmra.mxu0 %v1216
        %v1258 = vpop.f32.mrf.mxu0
        %v1259 = vadd.f32 0.0, %v1258
        %1260 = vmatmul.f32.gmra.mxu0 %v1218
        %v1261 = vpop.f32.mrf.mxu0
        %v1262 = vadd.f32 0.0, %v1261
        %1263 = vdwg.mxu0
        %v1264 = vadd.f32 %v1169, %v1241
        %v1265 = vadd.f32 %v1170, %v1244
        %v1266 = vadd.f32 %v1171, %v1247
        %v1267 = vadd.f32 %v1172, %v1250
        %v1268 = vadd.f32 %v1173, %v1253
        %v1269 = vadd.f32 %v1174, %v1256
        %v1270 = vadd.f32 %v1175, %v1259
        %v1271 = vadd.f32 %v1176, %v1262
        %s1272 = scalar_lea.vmem %s1, 7
        %v1273 = vld [vmem:[%s1272] sm:$0x1]
        %v1275 = vsel %vm645, %v601, 0
        %v1278 = vsel %vm645, %v603, 0
        %v1281 = vsel %vm645, %v605, 0
        %v1284 = vsel %vm645, %v607, 0
        %v1287 = vsel %vm645, %v609, 0
        %v1290 = vsel %vm645, %v611, 0
        %v1293 = vsel %vm645, %v613, 0
        %v1296 = vsel %vm645, %v615, 0
        %v1299 = vsel %vm670, %v1273, 0
        %1301 = vmatpush.msra.mxu0 0.0
        %1302 = vmatpush.msra.mxu0 0.0
        %1303 = vmatpush.msra.mxu0 0.0
        %1304 = vmatpush.msra.mxu0 0.0
        %1305 = vmatpush.msra.mxu0 0.0
        %1306 = vmatpush.msra.mxu0 0.0
        %1307 = vmatpush.msra.mxu0 0.0
        %1308 = vmatpush.msra.mxu0 0.0
        %1309 = vmatpush.msra.mxu0 0.0
        %1310 = vmatpush.msra.mxu0 0.0
        %1311 = vmatpush.msra.mxu0 0.0
        %1312 = vmatpush.msra.mxu0 0.0
        %1313 = vmatpush.msra.mxu0 0.0
        %1314 = vmatpush.msra.mxu0 0.0
        %1315 = vmatpush.msra.mxu0 0.0
        %1316 = vmatpush.msra.mxu0 %v1299
        %1317 = vmatmul.f32.gmra.mxu0 %v1275
        %v1318 = vpop.f32.mrf.mxu0
        %v1319 = vadd.f32 0.0, %v1318
        %1320 = vmatmul.f32.gmra.mxu0 %v1278
        %v1321 = vpop.f32.mrf.mxu0
        %v1322 = vadd.f32 0.0, %v1321
        %1323 = vmatmul.f32.gmra.mxu0 %v1281
        %v1324 = vpop.f32.mrf.mxu0
        %v1325 = vadd.f32 0.0, %v1324
        %1326 = vmatmul.f32.gmra.mxu0 %v1284
        %v1327 = vpop.f32.mrf.mxu0
        %v1328 = vadd.f32 0.0, %v1327
        %1329 = vmatmul.f32.gmra.mxu0 %v1287
        %v1330 = vpop.f32.mrf.mxu0
        %v1331 = vadd.f32 0.0, %v1330
        %1332 = vmatmul.f32.gmra.mxu0 %v1290
        %v1333 = vpop.f32.mrf.mxu0
        %v1334 = vadd.f32 0.0, %v1333
        %1335 = vmatmul.f32.gmra.mxu0 %v1293
        %v1336 = vpop.f32.mrf.mxu0
        %v1337 = vadd.f32 0.0, %v1336
        %1338 = vmatmul.f32.gmra.mxu0 %v1296
        %v1339 = vpop.f32.mrf.mxu0
        %v1340 = vadd.f32 0.0, %v1339
        %1341 = vdwg.mxu0
        %v1342 = vadd.f32 %v1264, %v1319
        %v1343 = vadd.f32 %v1265, %v1322
        %v1344 = vadd.f32 %v1266, %v1325
        %v1345 = vadd.f32 %v1267, %v1328
        %v1346 = vadd.f32 %v1268, %v1331
        %v1347 = vadd.f32 %v1269, %v1334
        %v1348 = vadd.f32 %v1270, %v1337
        %v1349 = vadd.f32 %v1271, %v1340
        %s1350 = scalar_lea.vmem %s1, 8
        %v1351 = vld [vmem:[%s1350] sm:$0x1]
        %v1353 = vsel %vm645, %v622, 0
        %v1356 = vsel %vm645, %v624, 0
        %v1359 = vsel %vm645, %v626, 0
        %v1362 = vsel %vm645, %v628, 0
        %v1365 = vsel %vm645, %v630, 0
        %v1368 = vsel %vm645, %v632, 0
        %v1371 = vsel %vm645, %v634, 0
        %v1374 = vsel %vm645, %v636, 0
        %v1377 = vsel %vm670, %v1351, 0
        %1379 = vmatpush.msra.mxu0 0.0
        %1380 = vmatpush.msra.mxu0 0.0
        %1381 = vmatpush.msra.mxu0 0.0
        %1382 = vmatpush.msra.mxu0 0.0
        %1383 = vmatpush.msra.mxu0 0.0
        %1384 = vmatpush.msra.mxu0 0.0
        %1385 = vmatpush.msra.mxu0 0.0
        %1386 = vmatpush.msra.mxu0 0.0
        %1387 = vmatpush.msra.mxu0 0.0
        %1388 = vmatpush.msra.mxu0 0.0
        %1389 = vmatpush.msra.mxu0 0.0
        %1390 = vmatpush.msra.mxu0 0.0
        %1391 = vmatpush.msra.mxu0 0.0
        %1392 = vmatpush.msra.mxu0 0.0
        %1393 = vmatpush.msra.mxu0 0.0
        %1394 = vmatpush.msra.mxu0 %v1377
        %1395 = vmatmul.f32.gmra.mxu0 %v1353
        %v1396 = vpop.f32.mrf.mxu0
        %v1397 = vadd.f32 0.0, %v1396
        %1398 = vmatmul.f32.gmra.mxu0 %v1356
        %v1399 = vpop.f32.mrf.mxu0
        %v1400 = vadd.f32 0.0, %v1399
        %1401 = vmatmul.f32.gmra.mxu0 %v1359
        %v1402 = vpop.f32.mrf.mxu0
        %v1403 = vadd.f32 0.0, %v1402
        %1404 = vmatmul.f32.gmra.mxu0 %v1362
        %v1405 = vpop.f32.mrf.mxu0
        %v1406 = vadd.f32 0.0, %v1405
        %1407 = vmatmul.f32.gmra.mxu0 %v1365
        %v1408 = vpop.f32.mrf.mxu0
        %v1409 = vadd.f32 0.0, %v1408
        %1410 = vmatmul.f32.gmra.mxu0 %v1368
        %v1411 = vpop.f32.mrf.mxu0
        %v1412 = vadd.f32 0.0, %v1411
        %1413 = vmatmul.f32.gmra.mxu0 %v1371
        %v1414 = vpop.f32.mrf.mxu0
        %v1415 = vadd.f32 0.0, %v1414
        %1416 = vmatmul.f32.gmra.mxu0 %v1374
        %v1417 = vpop.f32.mrf.mxu0
        %v1418 = vadd.f32 0.0, %v1417
        %1419 = vdwg.mxu0
        %v1420 = vadd.f32 %v1342, %v1397
        %v1421 = vadd.f32 %v1343, %v1400
        %v1422 = vadd.f32 %v1344, %v1403
        %v1423 = vadd.f32 %v1345, %v1406
        %v1424 = vadd.f32 %v1346, %v1409
        %v1425 = vadd.f32 %v1347, %v1412
        %v1426 = vadd.f32 %v1348, %v1415
        %v1427 = vadd.f32 %v1349, %v1418
        %v1436 = vrot.slane %v601, 1
        %v1437 = vrot.slane %v602, 1
        %v1438 = vsel %vm791, %v1436, %v1437
        %v1439 = vrot.slane %v603, 1
        %v1440 = vrot.slane %v604, 1
        %v1441 = vsel %vm791, %v1439, %v1440
        %v1442 = vrot.slane %v605, 1
        %v1443 = vrot.slane %v606, 1
        %v1444 = vsel %vm791, %v1442, %v1443
        %v1445 = vrot.slane %v607, 1
        %v1446 = vrot.slane %v608, 1
        %v1447 = vsel %vm791, %v1445, %v1446
        %v1448 = vrot.slane %v609, 1
        %v1449 = vrot.slane %v610, 1
        %v1450 = vsel %vm791, %v1448, %v1449
        %v1451 = vrot.slane %v611, 1
        %v1452 = vrot.slane %v612, 1
        %v1453 = vsel %vm791, %v1451, %v1452
        %v1454 = vrot.slane %v613, 1
        %v1455 = vrot.slane %v614, 1
        %v1456 = vsel %vm791, %v1454, %v1455
        %v1457 = vrot.slane %v615, 1
        %v1458 = vrot.slane %v616, 1
        %v1459 = vsel %vm791, %v1457, %v1458
        %s1460 = scalar_lea.vmem %s1, 9
        %v1461 = vld [vmem:[%s1460] sm:$0x1]
        %v1462 = vsel %vm645, %v1438, 0
        %v1464 = vsel %vm645, %v1441, 0
        %v1466 = vsel %vm645, %v1444, 0
        %v1468 = vsel %vm645, %v1447, 0
        %v1470 = vsel %vm645, %v1450, 0
        %v1472 = vsel %vm645, %v1453, 0
        %v1474 = vsel %vm645, %v1456, 0
        %v1476 = vsel %vm645, %v1459, 0
        %v1479 = vsel %vm670, %v1461, 0
        %1481 = vmatpush.msra.mxu0 0.0
        %1482 = vmatpush.msra.mxu0 0.0
        %1483 = vmatpush.msra.mxu0 0.0
        %1484 = vmatpush.msra.mxu0 0.0
        %1485 = vmatpush.msra.mxu0 0.0
        %1486 = vmatpush.msra.mxu0 0.0
        %1487 = vmatpush.msra.mxu0 0.0
        %1488 = vmatpush.msra.mxu0 0.0
        %1489 = vmatpush.msra.mxu0 0.0
        %1490 = vmatpush.msra.mxu0 0.0
        %1491 = vmatpush.msra.mxu0 0.0
        %1492 = vmatpush.msra.mxu0 0.0
        %1493 = vmatpush.msra.mxu0 0.0
        %1494 = vmatpush.msra.mxu0 0.0
        %1495 = vmatpush.msra.mxu0 0.0
        %1496 = vmatpush.msra.mxu0 %v1479
        %1497 = vmatmul.f32.gmra.mxu0 %v1462
        %v1498 = vpop.f32.mrf.mxu0
        %v1499 = vadd.f32 0.0, %v1498
        %1500 = vmatmul.f32.gmra.mxu0 %v1464
        %v1501 = vpop.f32.mrf.mxu0
        %v1502 = vadd.f32 0.0, %v1501
        %1503 = vmatmul.f32.gmra.mxu0 %v1466
        %v1504 = vpop.f32.mrf.mxu0
        %v1505 = vadd.f32 0.0, %v1504
        %1506 = vmatmul.f32.gmra.mxu0 %v1468
        %v1507 = vpop.f32.mrf.mxu0
        %v1508 = vadd.f32 0.0, %v1507
        %1509 = vmatmul.f32.gmra.mxu0 %v1470
        %v1510 = vpop.f32.mrf.mxu0
        %v1511 = vadd.f32 0.0, %v1510
        %1512 = vmatmul.f32.gmra.mxu0 %v1472
        %v1513 = vpop.f32.mrf.mxu0
        %v1514 = vadd.f32 0.0, %v1513
        %1515 = vmatmul.f32.gmra.mxu0 %v1474
        %v1516 = vpop.f32.mrf.mxu0
        %v1517 = vadd.f32 0.0, %v1516
        %1518 = vmatmul.f32.gmra.mxu0 %v1476
        %v1519 = vpop.f32.mrf.mxu0
        %v1520 = vadd.f32 0.0, %v1519
        %1521 = vdwg.mxu0
        %v1522 = vadd.f32 %v1420, %v1499
        %v1523 = vadd.f32 %v1421, %v1502
        %v1524 = vadd.f32 %v1422, %v1505
        %v1525 = vadd.f32 %v1423, %v1508
        %v1526 = vadd.f32 %v1424, %v1511
        %v1527 = vadd.f32 %v1425, %v1514
        %v1528 = vadd.f32 %v1426, %v1517
        %v1529 = vadd.f32 %v1427, %v1520
        %v1538 = vrot.slane %v622, 1
        %v1539 = vrot.slane %v623, 1
        %v1540 = vsel %vm791, %v1538, %v1539
        %v1541 = vrot.slane %v624, 1
        %v1542 = vrot.slane %v625, 1
        %v1543 = vsel %vm791, %v1541, %v1542
        %v1544 = vrot.slane %v626, 1
        %v1545 = vrot.slane %v627, 1
        %v1546 = vsel %vm791, %v1544, %v1545
        %v1547 = vrot.slane %v628, 1
        %v1548 = vrot.slane %v629, 1
        %v1549 = vsel %vm791, %v1547, %v1548
        %v1550 = vrot.slane %v630, 1
        %v1551 = vrot.slane %v631, 1
        %v1552 = vsel %vm791, %v1550, %v1551
        %v1553 = vrot.slane %v632, 1
        %v1554 = vrot.slane %v633, 1
        %v1555 = vsel %vm791, %v1553, %v1554
        %v1556 = vrot.slane %v634, 1
        %v1557 = vrot.slane %v635, 1
        %v1558 = vsel %vm791, %v1556, %v1557
        %v1559 = vrot.slane %v636, 1
        %v1560 = vrot.slane %v637, 1
        %v1561 = vsel %vm791, %v1559, %v1560
        %s1562 = scalar_lea.vmem %s1, 10
        %v1563 = vld [vmem:[%s1562] sm:$0x1]
        %v1564 = vsel %vm645, %v1540, 0
        %v1566 = vsel %vm645, %v1543, 0
        %v1568 = vsel %vm645, %v1546, 0
        %v1570 = vsel %vm645, %v1549, 0
        %v1572 = vsel %vm645, %v1552, 0
        %v1574 = vsel %vm645, %v1555, 0
        %v1576 = vsel %vm645, %v1558, 0
        %v1578 = vsel %vm645, %v1561, 0
        %v1581 = vsel %vm670, %v1563, 0
        %1583 = vmatpush.msra.mxu0 0.0
        %1584 = vmatpush.msra.mxu0 0.0
        %1585 = vmatpush.msra.mxu0 0.0
        %1586 = vmatpush.msra.mxu0 0.0
        %1587 = vmatpush.msra.mxu0 0.0
        %1588 = vmatpush.msra.mxu0 0.0
        %1589 = vmatpush.msra.mxu0 0.0
        %1590 = vmatpush.msra.mxu0 0.0
        %1591 = vmatpush.msra.mxu0 0.0
        %1592 = vmatpush.msra.mxu0 0.0
        %1593 = vmatpush.msra.mxu0 0.0
        %1594 = vmatpush.msra.mxu0 0.0
        %1595 = vmatpush.msra.mxu0 0.0
        %1596 = vmatpush.msra.mxu0 0.0
        %1597 = vmatpush.msra.mxu0 0.0
        %1598 = vmatpush.msra.mxu0 %v1581
        %1599 = vmatmul.f32.gmra.mxu0 %v1564
        %v1600 = vpop.f32.mrf.mxu0
        %v1601 = vadd.f32 0.0, %v1600
        %1602 = vmatmul.f32.gmra.mxu0 %v1566
        %v1603 = vpop.f32.mrf.mxu0
        %v1604 = vadd.f32 0.0, %v1603
        %1605 = vmatmul.f32.gmra.mxu0 %v1568
        %v1606 = vpop.f32.mrf.mxu0
        %v1607 = vadd.f32 0.0, %v1606
        %1608 = vmatmul.f32.gmra.mxu0 %v1570
        %v1609 = vpop.f32.mrf.mxu0
        %v1610 = vadd.f32 0.0, %v1609
        %1611 = vmatmul.f32.gmra.mxu0 %v1572
        %v1612 = vpop.f32.mrf.mxu0
        %v1613 = vadd.f32 0.0, %v1612
        %1614 = vmatmul.f32.gmra.mxu0 %v1574
        %v1615 = vpop.f32.mrf.mxu0
        %v1616 = vadd.f32 0.0, %v1615
        %1617 = vmatmul.f32.gmra.mxu0 %v1576
        %v1618 = vpop.f32.mrf.mxu0
        %v1619 = vadd.f32 0.0, %v1618
        %1620 = vmatmul.f32.gmra.mxu0 %v1578
        %v1621 = vpop.f32.mrf.mxu0
        %v1622 = vadd.f32 0.0, %v1621
        %1623 = vdwg.mxu0
        %v1624 = vadd.f32 %v1522, %v1601
        %v1625 = vadd.f32 %v1523, %v1604
        %v1626 = vadd.f32 %v1524, %v1607
        %v1627 = vadd.f32 %v1525, %v1610
        %v1628 = vadd.f32 %v1526, %v1613
        %v1629 = vadd.f32 %v1527, %v1616
        %v1630 = vadd.f32 %v1528, %v1619
        %v1631 = vadd.f32 %v1529, %v1622
        %v1632 = vrot.slane %v601, 2
        %v1633 = vrot.slane %v602, 2
        %v1634 = vsel %vm988, %v1632, %v1633
        %v1635 = vrot.slane %v603, 2
        %v1636 = vrot.slane %v604, 2
        %v1637 = vsel %vm988, %v1635, %v1636
        %v1638 = vrot.slane %v605, 2
        %v1639 = vrot.slane %v606, 2
        %v1640 = vsel %vm988, %v1638, %v1639
        %v1641 = vrot.slane %v607, 2
        %v1642 = vrot.slane %v608, 2
        %v1643 = vsel %vm988, %v1641, %v1642
        %v1644 = vrot.slane %v609, 2
        %v1645 = vrot.slane %v610, 2
        %v1646 = vsel %vm988, %v1644, %v1645
        %v1647 = vrot.slane %v611, 2
        %v1648 = vrot.slane %v612, 2
        %v1649 = vsel %vm988, %v1647, %v1648
        %v1650 = vrot.slane %v613, 2
        %v1651 = vrot.slane %v614, 2
        %v1652 = vsel %vm988, %v1650, %v1651
        %v1653 = vrot.slane %v615, 2
        %v1654 = vrot.slane %v616, 2
        %v1655 = vsel %vm988, %v1653, %v1654
        %s1656 = scalar_lea.vmem %s1, 11
        %v1657 = vld [vmem:[%s1656] sm:$0x1]
        %v1658 = vsel %vm645, %v1634, 0
        %v1660 = vsel %vm645, %v1637, 0
        %v1662 = vsel %vm645, %v1640, 0
        %v1664 = vsel %vm645, %v1643, 0
        %v1666 = vsel %vm645, %v1646, 0
        %v1668 = vsel %vm645, %v1649, 0
        %v1670 = vsel %vm645, %v1652, 0
        %v1672 = vsel %vm645, %v1655, 0
        %v1675 = vsel %vm670, %v1657, 0
        %1677 = vmatpush.msra.mxu0 0.0
        %1678 = vmatpush.msra.mxu0 0.0
        %1679 = vmatpush.msra.mxu0 0.0
        %1680 = vmatpush.msra.mxu0 0.0
        %1681 = vmatpush.msra.mxu0 0.0
        %1682 = vmatpush.msra.mxu0 0.0
        %1683 = vmatpush.msra.mxu0 0.0
        %1684 = vmatpush.msra.mxu0 0.0
        %1685 = vmatpush.msra.mxu0 0.0
        %1686 = vmatpush.msra.mxu0 0.0
        %1687 = vmatpush.msra.mxu0 0.0
        %1688 = vmatpush.msra.mxu0 0.0
        %1689 = vmatpush.msra.mxu0 0.0
        %1690 = vmatpush.msra.mxu0 0.0
        %1691 = vmatpush.msra.mxu0 0.0
        %1692 = vmatpush.msra.mxu0 %v1675
        %1693 = vmatmul.f32.gmra.mxu0 %v1658
        %v1694 = vpop.f32.mrf.mxu0
        %v1695 = vadd.f32 0.0, %v1694
        %1696 = vmatmul.f32.gmra.mxu0 %v1660
        %v1697 = vpop.f32.mrf.mxu0
        %v1698 = vadd.f32 0.0, %v1697
        %1699 = vmatmul.f32.gmra.mxu0 %v1662
        %v1700 = vpop.f32.mrf.mxu0
        %v1701 = vadd.f32 0.0, %v1700
        %1702 = vmatmul.f32.gmra.mxu0 %v1664
        %v1703 = vpop.f32.mrf.mxu0
        %v1704 = vadd.f32 0.0, %v1703
        %1705 = vmatmul.f32.gmra.mxu0 %v1666
        %v1706 = vpop.f32.mrf.mxu0
        %v1707 = vadd.f32 0.0, %v1706
        %1708 = vmatmul.f32.gmra.mxu0 %v1668
        %v1709 = vpop.f32.mrf.mxu0
        %v1710 = vadd.f32 0.0, %v1709
        %1711 = vmatmul.f32.gmra.mxu0 %v1670
        %v1712 = vpop.f32.mrf.mxu0
        %v1713 = vadd.f32 0.0, %v1712
        %1714 = vmatmul.f32.gmra.mxu0 %v1672
        %v1715 = vpop.f32.mrf.mxu0
        %v1716 = vadd.f32 0.0, %v1715
        %1717 = vdwg.mxu0
        %v1718 = vadd.f32 %v1624, %v1695
        %v1719 = vadd.f32 %v1625, %v1698
        %v1720 = vadd.f32 %v1626, %v1701
        %v1721 = vadd.f32 %v1627, %v1704
        %v1722 = vadd.f32 %v1628, %v1707
        %v1723 = vadd.f32 %v1629, %v1710
        %v1724 = vadd.f32 %v1630, %v1713
        %v1725 = vadd.f32 %v1631, %v1716
        %v1726 = vrot.slane %v622, 2
        %v1727 = vrot.slane %v623, 2
        %v1728 = vsel %vm988, %v1726, %v1727
        %v1729 = vrot.slane %v624, 2
        %v1730 = vrot.slane %v625, 2
        %v1731 = vsel %vm988, %v1729, %v1730
        %v1732 = vrot.slane %v626, 2
        %v1733 = vrot.slane %v627, 2
        %v1734 = vsel %vm988, %v1732, %v1733
        %v1735 = vrot.slane %v628, 2
        %v1736 = vrot.slane %v629, 2
        %v1737 = vsel %vm988, %v1735, %v1736
        %v1738 = vrot.slane %v630, 2
        %v1739 = vrot.slane %v631, 2
        %v1740 = vsel %vm988, %v1738, %v1739
        %v1741 = vrot.slane %v632, 2
        %v1742 = vrot.slane %v633, 2
        %v1743 = vsel %vm988, %v1741, %v1742
        %v1744 = vrot.slane %v634, 2
        %v1745 = vrot.slane %v635, 2
        %v1746 = vsel %vm988, %v1744, %v1745
        %v1747 = vrot.slane %v636, 2
        %v1748 = vrot.slane %v637, 2
        %v1749 = vsel %vm988, %v1747, %v1748
        %s1750 = scalar_lea.vmem %s1, 12
        %v1751 = vld [vmem:[%s1750] sm:$0x1]
        %v1752 = vsel %vm645, %v1728, 0
        %v1754 = vsel %vm645, %v1731, 0
        %v1756 = vsel %vm645, %v1734, 0
        %v1758 = vsel %vm645, %v1737, 0
        %v1760 = vsel %vm645, %v1740, 0
        %v1762 = vsel %vm645, %v1743, 0
        %v1764 = vsel %vm645, %v1746, 0
        %v1766 = vsel %vm645, %v1749, 0
        %v1769 = vsel %vm670, %v1751, 0
        %1771 = vmatpush.msra.mxu0 0.0
        %1772 = vmatpush.msra.mxu0 0.0
        %1773 = vmatpush.msra.mxu0 0.0
        %1774 = vmatpush.msra.mxu0 0.0
        %1775 = vmatpush.msra.mxu0 0.0
        %1776 = vmatpush.msra.mxu0 0.0
        %1777 = vmatpush.msra.mxu0 0.0
        %1778 = vmatpush.msra.mxu0 0.0
        %1779 = vmatpush.msra.mxu0 0.0
        %1780 = vmatpush.msra.mxu0 0.0
        %1781 = vmatpush.msra.mxu0 0.0
        %1782 = vmatpush.msra.mxu0 0.0
        %1783 = vmatpush.msra.mxu0 0.0
        %1784 = vmatpush.msra.mxu0 0.0
        %1785 = vmatpush.msra.mxu0 0.0
        %1786 = vmatpush.msra.mxu0 %v1769
        %1787 = vmatmul.f32.gmra.mxu0 %v1752
        %v1788 = vpop.f32.mrf.mxu0
        %v1789 = vadd.f32 0.0, %v1788
        %1790 = vmatmul.f32.gmra.mxu0 %v1754
        %v1791 = vpop.f32.mrf.mxu0
        %v1792 = vadd.f32 0.0, %v1791
        %1793 = vmatmul.f32.gmra.mxu0 %v1756
        %v1794 = vpop.f32.mrf.mxu0
        %v1795 = vadd.f32 0.0, %v1794
        %1796 = vmatmul.f32.gmra.mxu0 %v1758
        %v1797 = vpop.f32.mrf.mxu0
        %v1798 = vadd.f32 0.0, %v1797
        %1799 = vmatmul.f32.gmra.mxu0 %v1760
        %v1800 = vpop.f32.mrf.mxu0
        %v1801 = vadd.f32 0.0, %v1800
        %1802 = vmatmul.f32.gmra.mxu0 %v1762
        %v1803 = vpop.f32.mrf.mxu0
        %v1804 = vadd.f32 0.0, %v1803
        %1805 = vmatmul.f32.gmra.mxu0 %v1764
        %v1806 = vpop.f32.mrf.mxu0
        %v1807 = vadd.f32 0.0, %v1806
        %1808 = vmatmul.f32.gmra.mxu0 %v1766
        %v1809 = vpop.f32.mrf.mxu0
        %v1810 = vadd.f32 0.0, %v1809
        %1811 = vdwg.mxu0
        %v1812 = vadd.f32 %v1718, %v1789
        %v1813 = vadd.f32 %v1719, %v1792
        %v1814 = vadd.f32 %v1720, %v1795
        %v1815 = vadd.f32 %v1721, %v1798
        %v1816 = vadd.f32 %v1722, %v1801
        %v1817 = vadd.f32 %v1723, %v1804
        %v1818 = vadd.f32 %v1724, %v1807
        %v1819 = vadd.f32 %v1725, %v1810
        %v1820 = vrot.slane %v601, 3
        %v1821 = vrot.slane %v602, 3
        %v1822 = vsel %vm1177, %v1820, %v1821
        %v1823 = vrot.slane %v603, 3
        %v1824 = vrot.slane %v604, 3
        %v1825 = vsel %vm1177, %v1823, %v1824
        %v1826 = vrot.slane %v605, 3
        %v1827 = vrot.slane %v606, 3
        %v1828 = vsel %vm1177, %v1826, %v1827
        %v1829 = vrot.slane %v607, 3
        %v1830 = vrot.slane %v608, 3
        %v1831 = vsel %vm1177, %v1829, %v1830
        %v1832 = vrot.slane %v609, 3
        %v1833 = vrot.slane %v610, 3
        %v1834 = vsel %vm1177, %v1832, %v1833
        %v1835 = vrot.slane %v611, 3
        %v1836 = vrot.slane %v612, 3
        %v1837 = vsel %vm1177, %v1835, %v1836
        %v1838 = vrot.slane %v613, 3
        %v1839 = vrot.slane %v614, 3
        %v1840 = vsel %vm1177, %v1838, %v1839
        %v1841 = vrot.slane %v615, 3
        %v1842 = vrot.slane %v616, 3
        %v1843 = vsel %vm1177, %v1841, %v1842
        %s1844 = scalar_lea.vmem %s1, 13
        %v1845 = vld [vmem:[%s1844] sm:$0x1]
        %v1846 = vsel %vm645, %v1822, 0
        %v1848 = vsel %vm645, %v1825, 0
        %v1850 = vsel %vm645, %v1828, 0
        %v1852 = vsel %vm645, %v1831, 0
        %v1854 = vsel %vm645, %v1834, 0
        %v1856 = vsel %vm645, %v1837, 0
        %v1858 = vsel %vm645, %v1840, 0
        %v1860 = vsel %vm645, %v1843, 0
        %v1863 = vsel %vm670, %v1845, 0
        %1865 = vmatpush.msra.mxu0 0.0
        %1866 = vmatpush.msra.mxu0 0.0
        %1867 = vmatpush.msra.mxu0 0.0
        %1868 = vmatpush.msra.mxu0 0.0
        %1869 = vmatpush.msra.mxu0 0.0
        %1870 = vmatpush.msra.mxu0 0.0
        %1871 = vmatpush.msra.mxu0 0.0
        %1872 = vmatpush.msra.mxu0 0.0
        %1873 = vmatpush.msra.mxu0 0.0
        %1874 = vmatpush.msra.mxu0 0.0
        %1875 = vmatpush.msra.mxu0 0.0
        %1876 = vmatpush.msra.mxu0 0.0
        %1877 = vmatpush.msra.mxu0 0.0
        %1878 = vmatpush.msra.mxu0 0.0
        %1879 = vmatpush.msra.mxu0 0.0
        %1880 = vmatpush.msra.mxu0 %v1863
        %1881 = vmatmul.f32.gmra.mxu0 %v1846
        %v1882 = vpop.f32.mrf.mxu0
        %v1883 = vadd.f32 0.0, %v1882
        %1884 = vmatmul.f32.gmra.mxu0 %v1848
        %v1885 = vpop.f32.mrf.mxu0
        %v1886 = vadd.f32 0.0, %v1885
        %1887 = vmatmul.f32.gmra.mxu0 %v1850
        %v1888 = vpop.f32.mrf.mxu0
        %v1889 = vadd.f32 0.0, %v1888
        %1890 = vmatmul.f32.gmra.mxu0 %v1852
        %v1891 = vpop.f32.mrf.mxu0
        %v1892 = vadd.f32 0.0, %v1891
        %1893 = vmatmul.f32.gmra.mxu0 %v1854
        %v1894 = vpop.f32.mrf.mxu0
        %v1895 = vadd.f32 0.0, %v1894
        %1896 = vmatmul.f32.gmra.mxu0 %v1856
        %v1897 = vpop.f32.mrf.mxu0
        %v1898 = vadd.f32 0.0, %v1897
        %1899 = vmatmul.f32.gmra.mxu0 %v1858
        %v1900 = vpop.f32.mrf.mxu0
        %v1901 = vadd.f32 0.0, %v1900
        %1902 = vmatmul.f32.gmra.mxu0 %v1860
        %v1903 = vpop.f32.mrf.mxu0
        %v1904 = vadd.f32 0.0, %v1903
        %1905 = vdwg.mxu0
        %v1906 = vadd.f32 %v1812, %v1883
        %v1907 = vadd.f32 %v1813, %v1886
        %v1908 = vadd.f32 %v1814, %v1889
        %v1909 = vadd.f32 %v1815, %v1892
        %v1910 = vadd.f32 %v1816, %v1895
        %v1911 = vadd.f32 %v1817, %v1898
        %v1912 = vadd.f32 %v1818, %v1901
        %v1913 = vadd.f32 %v1819, %v1904
        %s1914 = scalar_lea.vmem %s1, 14
        %v1915 = vld [vmem:[%s1914] sm:$0x1]
        %v1917 = vsel %vm645, %v571, 0
        %v1920 = vsel %vm670, %v1915, 0
        %1922 = vmatpush.msra.mxu0 0.0
        %1923 = vmatpush.msra.mxu0 0.0
        %1924 = vmatpush.msra.mxu0 0.0
        %1925 = vmatpush.msra.mxu0 0.0
        %1926 = vmatpush.msra.mxu0 0.0
        %1927 = vmatpush.msra.mxu0 0.0
        %1928 = vmatpush.msra.mxu0 0.0
        %1929 = vmatpush.msra.mxu0 0.0
        %1930 = vmatpush.msra.mxu0 0.0
        %1931 = vmatpush.msra.mxu0 0.0
        %1932 = vmatpush.msra.mxu0 0.0
        %1933 = vmatpush.msra.mxu0 0.0
        %1934 = vmatpush.msra.mxu0 0.0
        %1935 = vmatpush.msra.mxu0 0.0
        %1936 = vmatpush.msra.mxu0 0.0
        %1937 = vmatpush.msra.mxu0 %v1920
        %1938 = vmatmul.f32.gmra.mxu0 %v719
        %v1939 = vpop.f32.mrf.mxu0
        %v1940 = vadd.f32 0.0, %v1939
        %1941 = vmatmul.f32.gmra.mxu0 %v722
        %v1942 = vpop.f32.mrf.mxu0
        %v1943 = vadd.f32 0.0, %v1942
        %1944 = vmatmul.f32.gmra.mxu0 %v725
        %v1945 = vpop.f32.mrf.mxu0
        %v1946 = vadd.f32 0.0, %v1945
        %1947 = vmatmul.f32.gmra.mxu0 %v728
        %v1948 = vpop.f32.mrf.mxu0
        %v1949 = vadd.f32 0.0, %v1948
        %1950 = vmatmul.f32.gmra.mxu0 %v731
        %v1951 = vpop.f32.mrf.mxu0
        %v1952 = vadd.f32 0.0, %v1951
        %1953 = vmatmul.f32.gmra.mxu0 %v734
        %v1954 = vpop.f32.mrf.mxu0
        %v1955 = vadd.f32 0.0, %v1954
        %1956 = vmatmul.f32.gmra.mxu0 %v737
        %v1957 = vpop.f32.mrf.mxu0
        %v1958 = vadd.f32 0.0, %v1957
        %1959 = vmatmul.f32.gmra.mxu0 %v1917
        %v1960 = vpop.f32.mrf.mxu0
        %v1961 = vadd.f32 0.0, %v1960
        %1962 = vdwg.mxu0
        %v1963 = vadd.f32 %v1906, %v1940
        %v1964 = vadd.f32 %v1907, %v1943
        %v1965 = vadd.f32 %v1908, %v1946
        %v1966 = vadd.f32 %v1909, %v1949
        %v1967 = vadd.f32 %v1910, %v1952
        %v1968 = vadd.f32 %v1911, %v1955
        %v1969 = vadd.f32 %v1912, %v1958
        %v1970 = vadd.f32 %v1913, %v1961
        %s1971 = scalar_lea.vmem %s1, 15
        %v1972 = vld [vmem:[%s1971] sm:$0x1]
        %v1974 = vsel %vm645, %v594, 0
        %v1977 = vsel %vm670, %v1972, 0
        %1979 = vmatpush.msra.mxu0 0.0
        %1980 = vmatpush.msra.mxu0 0.0
        %1981 = vmatpush.msra.mxu0 0.0
        %1982 = vmatpush.msra.mxu0 0.0
        %1983 = vmatpush.msra.mxu0 0.0
        %1984 = vmatpush.msra.mxu0 0.0
        %1985 = vmatpush.msra.mxu0 0.0
        %1986 = vmatpush.msra.mxu0 0.0
        %1987 = vmatpush.msra.mxu0 0.0
        %1988 = vmatpush.msra.mxu0 0.0
        %1989 = vmatpush.msra.mxu0 0.0
        %1990 = vmatpush.msra.mxu0 0.0
        %1991 = vmatpush.msra.mxu0 0.0
        %1992 = vmatpush.msra.mxu0 0.0
        %1993 = vmatpush.msra.mxu0 0.0
        %1994 = vmatpush.msra.mxu0 %v1977
        %1995 = vmatmul.f32.gmra.mxu0 %v650
        %v1996 = vpop.f32.mrf.mxu0
        %v1997 = vadd.f32 0.0, %v1996
        %1998 = vmatmul.f32.gmra.mxu0 %v653
        %v1999 = vpop.f32.mrf.mxu0
        %v2000 = vadd.f32 0.0, %v1999
        %2001 = vmatmul.f32.gmra.mxu0 %v656
        %v2002 = vpop.f32.mrf.mxu0
        %v2003 = vadd.f32 0.0, %v2002
        %2004 = vmatmul.f32.gmra.mxu0 %v659
        %v2005 = vpop.f32.mrf.mxu0
        %v2006 = vadd.f32 0.0, %v2005
        %2007 = vmatmul.f32.gmra.mxu0 %v662
        %v2008 = vpop.f32.mrf.mxu0
        %v2009 = vadd.f32 0.0, %v2008
        %2010 = vmatmul.f32.gmra.mxu0 %v665
        %v2011 = vpop.f32.mrf.mxu0
        %v2012 = vadd.f32 0.0, %v2011
        %2013 = vmatmul.f32.gmra.mxu0 %v668
        %v2014 = vpop.f32.mrf.mxu0
        %v2015 = vadd.f32 0.0, %v2014
        %2016 = vmatmul.f32.gmra.mxu0 %v1974
        %v2017 = vpop.f32.mrf.mxu0
        %v2018 = vadd.f32 0.0, %v2017
        %2019 = vdwg.mxu0
        %v2020 = vadd.f32 %v1963, %v1997
        %v2021 = vadd.f32 %v1964, %v2000
        %v2022 = vadd.f32 %v1965, %v2003
        %v2023 = vadd.f32 %v1966, %v2006
        %v2024 = vadd.f32 %v1967, %v2009
        %v2025 = vadd.f32 %v1968, %v2012
        %v2026 = vadd.f32 %v1969, %v2015
        %v2027 = vadd.f32 %v1970, %v2018
        %v2029 = vrot.slane %v571, 1
        %v2030 = vrot.slane %v572, 1
        %v2031 = vsel %vm791, %v2029, %v2030
        %s2032 = scalar_lea.vmem %s1, 16
        %v2033 = vld [vmem:[%s2032] sm:$0x1]
        %v2034 = vsel %vm645, %v2031, 0
        %v2037 = vsel %vm670, %v2033, 0
        %2039 = vmatpush.msra.mxu0 0.0
        %2040 = vmatpush.msra.mxu0 0.0
        %2041 = vmatpush.msra.mxu0 0.0
        %2042 = vmatpush.msra.mxu0 0.0
        %2043 = vmatpush.msra.mxu0 0.0
        %2044 = vmatpush.msra.mxu0 0.0
        %2045 = vmatpush.msra.mxu0 0.0
        %2046 = vmatpush.msra.mxu0 0.0
        %2047 = vmatpush.msra.mxu0 0.0
        %2048 = vmatpush.msra.mxu0 0.0
        %2049 = vmatpush.msra.mxu0 0.0
        %2050 = vmatpush.msra.mxu0 0.0
        %2051 = vmatpush.msra.mxu0 0.0
        %2052 = vmatpush.msra.mxu0 0.0
        %2053 = vmatpush.msra.mxu0 0.0
        %2054 = vmatpush.msra.mxu0 %v2037
        %2055 = vmatmul.f32.gmra.mxu0 %v820
        %v2056 = vpop.f32.mrf.mxu0
        %v2057 = vadd.f32 0.0, %v2056
        %2058 = vmatmul.f32.gmra.mxu0 %v822
        %v2059 = vpop.f32.mrf.mxu0
        %v2060 = vadd.f32 0.0, %v2059
        %2061 = vmatmul.f32.gmra.mxu0 %v824
        %v2062 = vpop.f32.mrf.mxu0
        %v2063 = vadd.f32 0.0, %v2062
        %2064 = vmatmul.f32.gmra.mxu0 %v826
        %v2065 = vpop.f32.mrf.mxu0
        %v2066 = vadd.f32 0.0, %v2065
        %2067 = vmatmul.f32.gmra.mxu0 %v828
        %v2068 = vpop.f32.mrf.mxu0
        %v2069 = vadd.f32 0.0, %v2068
        %2070 = vmatmul.f32.gmra.mxu0 %v830
        %v2071 = vpop.f32.mrf.mxu0
        %v2072 = vadd.f32 0.0, %v2071
        %2073 = vmatmul.f32.gmra.mxu0 %v832
        %v2074 = vpop.f32.mrf.mxu0
        %v2075 = vadd.f32 0.0, %v2074
        %2076 = vmatmul.f32.gmra.mxu0 %v2034
        %v2077 = vpop.f32.mrf.mxu0
        %v2078 = vadd.f32 0.0, %v2077
        %2079 = vdwg.mxu0
        %v2080 = vadd.f32 %v2020, %v2057
        %v2081 = vadd.f32 %v2021, %v2060
        %v2082 = vadd.f32 %v2022, %v2063
        %v2083 = vadd.f32 %v2023, %v2066
        %v2084 = vadd.f32 %v2024, %v2069
        %v2085 = vadd.f32 %v2025, %v2072
        %v2086 = vadd.f32 %v2026, %v2075
        %v2087 = vadd.f32 %v2027, %v2078
        %v2089 = vrot.slane %v594, 1
        %v2090 = vrot.slane %v595, 1
        %v2091 = vsel %vm791, %v2089, %v2090
        %s2092 = scalar_lea.vmem %s1, 17
        %v2093 = vld [vmem:[%s2092] sm:$0x1]
        %v2094 = vsel %vm645, %v2091, 0
        %v2097 = vsel %vm670, %v2093, 0
        %2099 = vmatpush.msra.mxu0 0.0
        %2100 = vmatpush.msra.mxu0 0.0
        %2101 = vmatpush.msra.mxu0 0.0
        %2102 = vmatpush.msra.mxu0 0.0
        %2103 = vmatpush.msra.mxu0 0.0
        %2104 = vmatpush.msra.mxu0 0.0
        %2105 = vmatpush.msra.mxu0 0.0
        %2106 = vmatpush.msra.mxu0 0.0
        %2107 = vmatpush.msra.mxu0 0.0
        %2108 = vmatpush.msra.mxu0 0.0
        %2109 = vmatpush.msra.mxu0 0.0
        %2110 = vmatpush.msra.mxu0 0.0
        %2111 = vmatpush.msra.mxu0 0.0
        %2112 = vmatpush.msra.mxu0 0.0
        %2113 = vmatpush.msra.mxu0 0.0
        %2114 = vmatpush.msra.mxu0 %v2097
        %2115 = vmatmul.f32.gmra.mxu0 %v922
        %v2116 = vpop.f32.mrf.mxu0
        %v2117 = vadd.f32 0.0, %v2116
        %2118 = vmatmul.f32.gmra.mxu0 %v924
        %v2119 = vpop.f32.mrf.mxu0
        %v2120 = vadd.f32 0.0, %v2119
        %2121 = vmatmul.f32.gmra.mxu0 %v926
        %v2122 = vpop.f32.mrf.mxu0
        %v2123 = vadd.f32 0.0, %v2122
        %2124 = vmatmul.f32.gmra.mxu0 %v928
        %v2125 = vpop.f32.mrf.mxu0
        %v2126 = vadd.f32 0.0, %v2125
        %2127 = vmatmul.f32.gmra.mxu0 %v930
        %v2128 = vpop.f32.mrf.mxu0
        %v2129 = vadd.f32 0.0, %v2128
        %2130 = vmatmul.f32.gmra.mxu0 %v932
        %v2131 = vpop.f32.mrf.mxu0
        %v2132 = vadd.f32 0.0, %v2131
        %2133 = vmatmul.f32.gmra.mxu0 %v934
        %v2134 = vpop.f32.mrf.mxu0
        %v2135 = vadd.f32 0.0, %v2134
        %2136 = vmatmul.f32.gmra.mxu0 %v2094
        %v2137 = vpop.f32.mrf.mxu0
        %v2138 = vadd.f32 0.0, %v2137
        %2139 = vdwg.mxu0
        %v2140 = vadd.f32 %v2080, %v2117
        %v2141 = vadd.f32 %v2081, %v2120
        %v2142 = vadd.f32 %v2082, %v2123
        %v2143 = vadd.f32 %v2083, %v2126
        %v2144 = vadd.f32 %v2084, %v2129
        %v2145 = vadd.f32 %v2085, %v2132
        %v2146 = vadd.f32 %v2086, %v2135
        %v2147 = vadd.f32 %v2087, %v2138
        %v2148 = vrot.slane %v571, 2
        %v2149 = vrot.slane %v572, 2
        %v2150 = vsel %vm988, %v2148, %v2149
        %s2151 = scalar_lea.vmem %s1, 18
        %v2152 = vld [vmem:[%s2151] sm:$0x1]
        %v2153 = vsel %vm645, %v2150, 0
        %v2156 = vsel %vm670, %v2152, 0
        %2158 = vmatpush.msra.mxu0 0.0
        %2159 = vmatpush.msra.mxu0 0.0
        %2160 = vmatpush.msra.mxu0 0.0
        %2161 = vmatpush.msra.mxu0 0.0
        %2162 = vmatpush.msra.mxu0 0.0
        %2163 = vmatpush.msra.mxu0 0.0
        %2164 = vmatpush.msra.mxu0 0.0
        %2165 = vmatpush.msra.mxu0 0.0
        %2166 = vmatpush.msra.mxu0 0.0
        %2167 = vmatpush.msra.mxu0 0.0
        %2168 = vmatpush.msra.mxu0 0.0
        %2169 = vmatpush.msra.mxu0 0.0
        %2170 = vmatpush.msra.mxu0 0.0
        %2171 = vmatpush.msra.mxu0 0.0
        %2172 = vmatpush.msra.mxu0 0.0
        %2173 = vmatpush.msra.mxu0 %v2156
        %2174 = vmatmul.f32.gmra.mxu0 %v1017
        %v2175 = vpop.f32.mrf.mxu0
        %v2176 = vadd.f32 0.0, %v2175
        %2177 = vmatmul.f32.gmra.mxu0 %v1019
        %v2178 = vpop.f32.mrf.mxu0
        %v2179 = vadd.f32 0.0, %v2178
        %2180 = vmatmul.f32.gmra.mxu0 %v1021
        %v2181 = vpop.f32.mrf.mxu0
        %v2182 = vadd.f32 0.0, %v2181
        %2183 = vmatmul.f32.gmra.mxu0 %v1023
        %v2184 = vpop.f32.mrf.mxu0
        %v2185 = vadd.f32 0.0, %v2184
        %2186 = vmatmul.f32.gmra.mxu0 %v1025
        %v2187 = vpop.f32.mrf.mxu0
        %v2188 = vadd.f32 0.0, %v2187
        %2189 = vmatmul.f32.gmra.mxu0 %v1027
        %v2190 = vpop.f32.mrf.mxu0
        %v2191 = vadd.f32 0.0, %v2190
        %2192 = vmatmul.f32.gmra.mxu0 %v1029
        %v2193 = vpop.f32.mrf.mxu0
        %v2194 = vadd.f32 0.0, %v2193
        %2195 = vmatmul.f32.gmra.mxu0 %v2153
        %v2196 = vpop.f32.mrf.mxu0
        %v2197 = vadd.f32 0.0, %v2196
        %2198 = vdwg.mxu0
        %v2199 = vadd.f32 %v2140, %v2176
        %v2200 = vadd.f32 %v2141, %v2179
        %v2201 = vadd.f32 %v2142, %v2182
        %v2202 = vadd.f32 %v2143, %v2185
        %v2203 = vadd.f32 %v2144, %v2188
        %v2204 = vadd.f32 %v2145, %v2191
        %v2205 = vadd.f32 %v2146, %v2194
        %v2206 = vadd.f32 %v2147, %v2197
        %v2207 = vrot.slane %v594, 2
        %v2208 = vrot.slane %v595, 2
        %v2209 = vsel %vm988, %v2207, %v2208
        %s2210 = scalar_lea.vmem %s1, 19
        %v2211 = vld [vmem:[%s2210] sm:$0x1]
        %v2212 = vsel %vm645, %v2209, 0
        %v2215 = vsel %vm670, %v2211, 0
        %2217 = vmatpush.msra.mxu0 0.0
        %2218 = vmatpush.msra.mxu0 0.0
        %2219 = vmatpush.msra.mxu0 0.0
        %2220 = vmatpush.msra.mxu0 0.0
        %2221 = vmatpush.msra.mxu0 0.0
        %2222 = vmatpush.msra.mxu0 0.0
        %2223 = vmatpush.msra.mxu0 0.0
        %2224 = vmatpush.msra.mxu0 0.0
        %2225 = vmatpush.msra.mxu0 0.0
        %2226 = vmatpush.msra.mxu0 0.0
        %2227 = vmatpush.msra.mxu0 0.0
        %2228 = vmatpush.msra.mxu0 0.0
        %2229 = vmatpush.msra.mxu0 0.0
        %2230 = vmatpush.msra.mxu0 0.0
        %2231 = vmatpush.msra.mxu0 0.0
        %2232 = vmatpush.msra.mxu0 %v2215
        %2233 = vmatmul.f32.gmra.mxu0 %v1111
        %v2234 = vpop.f32.mrf.mxu0
        %v2235 = vadd.f32 0.0, %v2234
        %2236 = vmatmul.f32.gmra.mxu0 %v1113
        %v2237 = vpop.f32.mrf.mxu0
        %v2238 = vadd.f32 0.0, %v2237
        %2239 = vmatmul.f32.gmra.mxu0 %v1115
        %v2240 = vpop.f32.mrf.mxu0
        %v2241 = vadd.f32 0.0, %v2240
        %2242 = vmatmul.f32.gmra.mxu0 %v1117
        %v2243 = vpop.f32.mrf.mxu0
        %v2244 = vadd.f32 0.0, %v2243
        %2245 = vmatmul.f32.gmra.mxu0 %v1119
        %v2246 = vpop.f32.mrf.mxu0
        %v2247 = vadd.f32 0.0, %v2246
        %2248 = vmatmul.f32.gmra.mxu0 %v1121
        %v2249 = vpop.f32.mrf.mxu0
        %v2250 = vadd.f32 0.0, %v2249
        %2251 = vmatmul.f32.gmra.mxu0 %v1123
        %v2252 = vpop.f32.mrf.mxu0
        %v2253 = vadd.f32 0.0, %v2252
        %2254 = vmatmul.f32.gmra.mxu0 %v2212
        %v2255 = vpop.f32.mrf.mxu0
        %v2256 = vadd.f32 0.0, %v2255
        %2257 = vdwg.mxu0
        %v2258 = vadd.f32 %v2199, %v2235
        %v2259 = vadd.f32 %v2200, %v2238
        %v2260 = vadd.f32 %v2201, %v2241
        %v2261 = vadd.f32 %v2202, %v2244
        %v2262 = vadd.f32 %v2203, %v2247
        %v2263 = vadd.f32 %v2204, %v2250
        %v2264 = vadd.f32 %v2205, %v2253
        %v2265 = vadd.f32 %v2206, %v2256
        %v2266 = vrot.slane %v571, 3
        %v2267 = vrot.slane %v572, 3
        %v2268 = vsel %vm1177, %v2266, %v2267
        %s2269 = scalar_lea.vmem %s1, 20
        %v2270 = vld [vmem:[%s2269] sm:$0x1]
        %v2271 = vsel %vm645, %v2268, 0
        %v2274 = vsel %vm670, %v2270, 0
        %2276 = vmatpush.msra.mxu0 0.0
        %2277 = vmatpush.msra.mxu0 0.0
        %2278 = vmatpush.msra.mxu0 0.0
        %2279 = vmatpush.msra.mxu0 0.0
        %2280 = vmatpush.msra.mxu0 0.0
        %2281 = vmatpush.msra.mxu0 0.0
        %2282 = vmatpush.msra.mxu0 0.0
        %2283 = vmatpush.msra.mxu0 0.0
        %2284 = vmatpush.msra.mxu0 0.0
        %2285 = vmatpush.msra.mxu0 0.0
        %2286 = vmatpush.msra.mxu0 0.0
        %2287 = vmatpush.msra.mxu0 0.0
        %2288 = vmatpush.msra.mxu0 0.0
        %2289 = vmatpush.msra.mxu0 0.0
        %2290 = vmatpush.msra.mxu0 0.0
        %2291 = vmatpush.msra.mxu0 %v2274
        %2292 = vmatmul.f32.gmra.mxu0 %v1206
        %v2293 = vpop.f32.mrf.mxu0
        %v2294 = vadd.f32 0.0, %v2293
        %2295 = vmatmul.f32.gmra.mxu0 %v1208
        %v2296 = vpop.f32.mrf.mxu0
        %v2297 = vadd.f32 0.0, %v2296
        %2298 = vmatmul.f32.gmra.mxu0 %v1210
        %v2299 = vpop.f32.mrf.mxu0
        %v2300 = vadd.f32 0.0, %v2299
        %2301 = vmatmul.f32.gmra.mxu0 %v1212
        %v2302 = vpop.f32.mrf.mxu0
        %v2303 = vadd.f32 0.0, %v2302
        %2304 = vmatmul.f32.gmra.mxu0 %v1214
        %v2305 = vpop.f32.mrf.mxu0
        %v2306 = vadd.f32 0.0, %v2305
        %2307 = vmatmul.f32.gmra.mxu0 %v1216
        %v2308 = vpop.f32.mrf.mxu0
        %v2309 = vadd.f32 0.0, %v2308
        %2310 = vmatmul.f32.gmra.mxu0 %v1218
        %v2311 = vpop.f32.mrf.mxu0
        %v2312 = vadd.f32 0.0, %v2311
        %2313 = vmatmul.f32.gmra.mxu0 %v2271
        %v2314 = vpop.f32.mrf.mxu0
        %v2315 = vadd.f32 0.0, %v2314
        %2316 = vdwg.mxu0
        %v2317 = vadd.f32 %v2258, %v2294
        %v2318 = vadd.f32 %v2259, %v2297
        %v2319 = vadd.f32 %v2260, %v2300
        %v2320 = vadd.f32 %v2261, %v2303
        %v2321 = vadd.f32 %v2262, %v2306
        %v2322 = vadd.f32 %v2263, %v2309
        %v2323 = vadd.f32 %v2264, %v2312
        %v2324 = vadd.f32 %v2265, %v2315
        %s2325 = scalar_lea.vmem %s1, 21
        %v2326 = vld [vmem:[%s2325] sm:$0x1]
        %v2328 = vsel %vm645, %v617, 0
        %v2331 = vsel %vm670, %v2326, 0
        %2333 = vmatpush.msra.mxu0 0.0
        %2334 = vmatpush.msra.mxu0 0.0
        %2335 = vmatpush.msra.mxu0 0.0
        %2336 = vmatpush.msra.mxu0 0.0
        %2337 = vmatpush.msra.mxu0 0.0
        %2338 = vmatpush.msra.mxu0 0.0
        %2339 = vmatpush.msra.mxu0 0.0
        %2340 = vmatpush.msra.mxu0 0.0
        %2341 = vmatpush.msra.mxu0 0.0
        %2342 = vmatpush.msra.mxu0 0.0
        %2343 = vmatpush.msra.mxu0 0.0
        %2344 = vmatpush.msra.mxu0 0.0
        %2345 = vmatpush.msra.mxu0 0.0
        %2346 = vmatpush.msra.mxu0 0.0
        %2347 = vmatpush.msra.mxu0 0.0
        %2348 = vmatpush.msra.mxu0 %v2331
        %2349 = vmatmul.f32.gmra.mxu0 %v1278
        %v2350 = vpop.f32.mrf.mxu0
        %v2351 = vadd.f32 0.0, %v2350
        %2352 = vmatmul.f32.gmra.mxu0 %v1281
        %v2353 = vpop.f32.mrf.mxu0
        %v2354 = vadd.f32 0.0, %v2353
        %2355 = vmatmul.f32.gmra.mxu0 %v1284
        %v2356 = vpop.f32.mrf.mxu0
        %v2357 = vadd.f32 0.0, %v2356
        %2358 = vmatmul.f32.gmra.mxu0 %v1287
        %v2359 = vpop.f32.mrf.mxu0
        %v2360 = vadd.f32 0.0, %v2359
        %2361 = vmatmul.f32.gmra.mxu0 %v1290
        %v2362 = vpop.f32.mrf.mxu0
        %v2363 = vadd.f32 0.0, %v2362
        %2364 = vmatmul.f32.gmra.mxu0 %v1293
        %v2365 = vpop.f32.mrf.mxu0
        %v2366 = vadd.f32 0.0, %v2365
        %2367 = vmatmul.f32.gmra.mxu0 %v1296
        %v2368 = vpop.f32.mrf.mxu0
        %v2369 = vadd.f32 0.0, %v2368
        %2370 = vmatmul.f32.gmra.mxu0 %v2328
        %v2371 = vpop.f32.mrf.mxu0
        %v2372 = vadd.f32 0.0, %v2371
        %2373 = vdwg.mxu0
        %v2374 = vadd.f32 %v2317, %v2351
        %v2375 = vadd.f32 %v2318, %v2354
        %v2376 = vadd.f32 %v2319, %v2357
        %v2377 = vadd.f32 %v2320, %v2360
        %v2378 = vadd.f32 %v2321, %v2363
        %v2379 = vadd.f32 %v2322, %v2366
        %v2380 = vadd.f32 %v2323, %v2369
        %v2381 = vadd.f32 %v2324, %v2372
        %s2382 = scalar_lea.vmem %s1, 22
        %v2383 = vld [vmem:[%s2382] sm:$0x1]
        %v2385 = vsel %vm645, %v638, 0
        %v2388 = vsel %vm670, %v2383, 0
        %2390 = vmatpush.msra.mxu0 0.0
        %2391 = vmatpush.msra.mxu0 0.0
        %2392 = vmatpush.msra.mxu0 0.0
        %2393 = vmatpush.msra.mxu0 0.0
        %2394 = vmatpush.msra.mxu0 0.0
        %2395 = vmatpush.msra.mxu0 0.0
        %2396 = vmatpush.msra.mxu0 0.0
        %2397 = vmatpush.msra.mxu0 0.0
        %2398 = vmatpush.msra.mxu0 0.0
        %2399 = vmatpush.msra.mxu0 0.0
        %2400 = vmatpush.msra.mxu0 0.0
        %2401 = vmatpush.msra.mxu0 0.0
        %2402 = vmatpush.msra.mxu0 0.0
        %2403 = vmatpush.msra.mxu0 0.0
        %2404 = vmatpush.msra.mxu0 0.0
        %2405 = vmatpush.msra.mxu0 %v2388
        %2406 = vmatmul.f32.gmra.mxu0 %v1356
        %v2407 = vpop.f32.mrf.mxu0
        %v2408 = vadd.f32 0.0, %v2407
        %2409 = vmatmul.f32.gmra.mxu0 %v1359
        %v2410 = vpop.f32.mrf.mxu0
        %v2411 = vadd.f32 0.0, %v2410
        %2412 = vmatmul.f32.gmra.mxu0 %v1362
        %v2413 = vpop.f32.mrf.mxu0
        %v2414 = vadd.f32 0.0, %v2413
        %2415 = vmatmul.f32.gmra.mxu0 %v1365
        %v2416 = vpop.f32.mrf.mxu0
        %v2417 = vadd.f32 0.0, %v2416
        %2418 = vmatmul.f32.gmra.mxu0 %v1368
        %v2419 = vpop.f32.mrf.mxu0
        %v2420 = vadd.f32 0.0, %v2419
        %2421 = vmatmul.f32.gmra.mxu0 %v1371
        %v2422 = vpop.f32.mrf.mxu0
        %v2423 = vadd.f32 0.0, %v2422
        %2424 = vmatmul.f32.gmra.mxu0 %v1374
        %v2425 = vpop.f32.mrf.mxu0
        %v2426 = vadd.f32 0.0, %v2425
        %2427 = vmatmul.f32.gmra.mxu0 %v2385
        %v2428 = vpop.f32.mrf.mxu0
        %v2429 = vadd.f32 0.0, %v2428
        %2430 = vdwg.mxu0
        %v2431 = vadd.f32 %v2374, %v2408
        %v2432 = vadd.f32 %v2375, %v2411
        %v2433 = vadd.f32 %v2376, %v2414
        %v2434 = vadd.f32 %v2377, %v2417
        %v2435 = vadd.f32 %v2378, %v2420
        %v2436 = vadd.f32 %v2379, %v2423
        %v2437 = vadd.f32 %v2380, %v2426
        %v2438 = vadd.f32 %v2381, %v2429
        %v2440 = vrot.slane %v617, 1
        %v2441 = vrot.slane %v618, 1
        %v2442 = vsel %vm791, %v2440, %v2441
        %s2443 = scalar_lea.vmem %s1, 23
        %v2444 = vld [vmem:[%s2443] sm:$0x1]
        %v2445 = vsel %vm645, %v2442, 0
        %v2448 = vsel %vm670, %v2444, 0
        %2450 = vmatpush.msra.mxu0 0.0
        %2451 = vmatpush.msra.mxu0 0.0
        %2452 = vmatpush.msra.mxu0 0.0
        %2453 = vmatpush.msra.mxu0 0.0
        %2454 = vmatpush.msra.mxu0 0.0
        %2455 = vmatpush.msra.mxu0 0.0
        %2456 = vmatpush.msra.mxu0 0.0
        %2457 = vmatpush.msra.mxu0 0.0
        %2458 = vmatpush.msra.mxu0 0.0
        %2459 = vmatpush.msra.mxu0 0.0
        %2460 = vmatpush.msra.mxu0 0.0
        %2461 = vmatpush.msra.mxu0 0.0
        %2462 = vmatpush.msra.mxu0 0.0
        %2463 = vmatpush.msra.mxu0 0.0
        %2464 = vmatpush.msra.mxu0 0.0
        %2465 = vmatpush.msra.mxu0 %v2448
        %2466 = vmatmul.f32.gmra.mxu0 %v1464
        %v2467 = vpop.f32.mrf.mxu0
        %v2468 = vadd.f32 0.0, %v2467
        %2469 = vmatmul.f32.gmra.mxu0 %v1466
        %v2470 = vpop.f32.mrf.mxu0
        %v2471 = vadd.f32 0.0, %v2470
        %2472 = vmatmul.f32.gmra.mxu0 %v1468
        %v2473 = vpop.f32.mrf.mxu0
        %v2474 = vadd.f32 0.0, %v2473
        %2475 = vmatmul.f32.gmra.mxu0 %v1470
        %v2476 = vpop.f32.mrf.mxu0
        %v2477 = vadd.f32 0.0, %v2476
        %2478 = vmatmul.f32.gmra.mxu0 %v1472
        %v2479 = vpop.f32.mrf.mxu0
        %v2480 = vadd.f32 0.0, %v2479
        %2481 = vmatmul.f32.gmra.mxu0 %v1474
        %v2482 = vpop.f32.mrf.mxu0
        %v2483 = vadd.f32 0.0, %v2482
        %2484 = vmatmul.f32.gmra.mxu0 %v1476
        %v2485 = vpop.f32.mrf.mxu0
        %v2486 = vadd.f32 0.0, %v2485
        %2487 = vmatmul.f32.gmra.mxu0 %v2445
        %v2488 = vpop.f32.mrf.mxu0
        %v2489 = vadd.f32 0.0, %v2488
        %2490 = vdwg.mxu0
        %v2491 = vadd.f32 %v2431, %v2468
        %v2492 = vadd.f32 %v2432, %v2471
        %v2493 = vadd.f32 %v2433, %v2474
        %v2494 = vadd.f32 %v2434, %v2477
        %v2495 = vadd.f32 %v2435, %v2480
        %v2496 = vadd.f32 %v2436, %v2483
        %v2497 = vadd.f32 %v2437, %v2486
        %v2498 = vadd.f32 %v2438, %v2489
        %v2500 = vrot.slane %v638, 1
        %v2501 = vrot.slane %v639, 1
        %v2502 = vsel %vm791, %v2500, %v2501
        %s2503 = scalar_lea.vmem %s1, 24
        %v2504 = vld [vmem:[%s2503] sm:$0x1]
        %v2505 = vsel %vm645, %v2502, 0
        %v2508 = vsel %vm670, %v2504, 0
        %2510 = vmatpush.msra.mxu0 0.0
        %2511 = vmatpush.msra.mxu0 0.0
        %2512 = vmatpush.msra.mxu0 0.0
        %2513 = vmatpush.msra.mxu0 0.0
        %2514 = vmatpush.msra.mxu0 0.0
        %2515 = vmatpush.msra.mxu0 0.0
        %2516 = vmatpush.msra.mxu0 0.0
        %2517 = vmatpush.msra.mxu0 0.0
        %2518 = vmatpush.msra.mxu0 0.0
        %2519 = vmatpush.msra.mxu0 0.0
        %2520 = vmatpush.msra.mxu0 0.0
        %2521 = vmatpush.msra.mxu0 0.0
        %2522 = vmatpush.msra.mxu0 0.0
        %2523 = vmatpush.msra.mxu0 0.0
        %2524 = vmatpush.msra.mxu0 0.0
        %2525 = vmatpush.msra.mxu0 %v2508
        %2526 = vmatmul.f32.gmra.mxu0 %v1566
        %v2527 = vpop.f32.mrf.mxu0
        %v2528 = vadd.f32 0.0, %v2527
        %2529 = vmatmul.f32.gmra.mxu0 %v1568
        %v2530 = vpop.f32.mrf.mxu0
        %v2531 = vadd.f32 0.0, %v2530
        %2532 = vmatmul.f32.gmra.mxu0 %v1570
        %v2533 = vpop.f32.mrf.mxu0
        %v2534 = vadd.f32 0.0, %v2533
        %2535 = vmatmul.f32.gmra.mxu0 %v1572
        %v2536 = vpop.f32.mrf.mxu0
        %v2537 = vadd.f32 0.0, %v2536
        %2538 = vmatmul.f32.gmra.mxu0 %v1574
        %v2539 = vpop.f32.mrf.mxu0
        %v2540 = vadd.f32 0.0, %v2539
        %2541 = vmatmul.f32.gmra.mxu0 %v1576
        %v2542 = vpop.f32.mrf.mxu0
        %v2543 = vadd.f32 0.0, %v2542
        %2544 = vmatmul.f32.gmra.mxu0 %v1578
        %v2545 = vpop.f32.mrf.mxu0
        %v2546 = vadd.f32 0.0, %v2545
        %2547 = vmatmul.f32.gmra.mxu0 %v2505
        %v2548 = vpop.f32.mrf.mxu0
        %v2549 = vadd.f32 0.0, %v2548
        %2550 = vdwg.mxu0
        %v2551 = vadd.f32 %v2491, %v2528
        %v2552 = vadd.f32 %v2492, %v2531
        %v2553 = vadd.f32 %v2493, %v2534
        %v2554 = vadd.f32 %v2494, %v2537
        %v2555 = vadd.f32 %v2495, %v2540
        %v2556 = vadd.f32 %v2496, %v2543
        %v2557 = vadd.f32 %v2497, %v2546
        %v2558 = vadd.f32 %v2498, %v2549
        %v2559 = vrot.slane %v617, 2
        %v2560 = vrot.slane %v618, 2
        %v2561 = vsel %vm988, %v2559, %v2560
        %s2562 = scalar_lea.vmem %s1, 25
        %v2563 = vld [vmem:[%s2562] sm:$0x1]
        %v2564 = vsel %vm645, %v2561, 0
        %v2567 = vsel %vm670, %v2563, 0
        %2569 = vmatpush.msra.mxu0 0.0
        %2570 = vmatpush.msra.mxu0 0.0
        %2571 = vmatpush.msra.mxu0 0.0
        %2572 = vmatpush.msra.mxu0 0.0
        %2573 = vmatpush.msra.mxu0 0.0
        %2574 = vmatpush.msra.mxu0 0.0
        %2575 = vmatpush.msra.mxu0 0.0
        %2576 = vmatpush.msra.mxu0 0.0
        %2577 = vmatpush.msra.mxu0 0.0
        %2578 = vmatpush.msra.mxu0 0.0
        %2579 = vmatpush.msra.mxu0 0.0
        %2580 = vmatpush.msra.mxu0 0.0
        %2581 = vmatpush.msra.mxu0 0.0
        %2582 = vmatpush.msra.mxu0 0.0
        %2583 = vmatpush.msra.mxu0 0.0
        %2584 = vmatpush.msra.mxu0 %v2567
        %2585 = vmatmul.f32.gmra.mxu0 %v1660
        %v2586 = vpop.f32.mrf.mxu0
        %v2587 = vadd.f32 0.0, %v2586
        %2588 = vmatmul.f32.gmra.mxu0 %v1662
        %v2589 = vpop.f32.mrf.mxu0
        %v2590 = vadd.f32 0.0, %v2589
        %2591 = vmatmul.f32.gmra.mxu0 %v1664
        %v2592 = vpop.f32.mrf.mxu0
        %v2593 = vadd.f32 0.0, %v2592
        %2594 = vmatmul.f32.gmra.mxu0 %v1666
        %v2595 = vpop.f32.mrf.mxu0
        %v2596 = vadd.f32 0.0, %v2595
        %2597 = vmatmul.f32.gmra.mxu0 %v1668
        %v2598 = vpop.f32.mrf.mxu0
        %v2599 = vadd.f32 0.0, %v2598
        %2600 = vmatmul.f32.gmra.mxu0 %v1670
        %v2601 = vpop.f32.mrf.mxu0
        %v2602 = vadd.f32 0.0, %v2601
        %2603 = vmatmul.f32.gmra.mxu0 %v1672
        %v2604 = vpop.f32.mrf.mxu0
        %v2605 = vadd.f32 0.0, %v2604
        %2606 = vmatmul.f32.gmra.mxu0 %v2564
        %v2607 = vpop.f32.mrf.mxu0
        %v2608 = vadd.f32 0.0, %v2607
        %2609 = vdwg.mxu0
        %v2610 = vadd.f32 %v2551, %v2587
        %v2611 = vadd.f32 %v2552, %v2590
        %v2612 = vadd.f32 %v2553, %v2593
        %v2613 = vadd.f32 %v2554, %v2596
        %v2614 = vadd.f32 %v2555, %v2599
        %v2615 = vadd.f32 %v2556, %v2602
        %v2616 = vadd.f32 %v2557, %v2605
        %v2617 = vadd.f32 %v2558, %v2608
        %v2618 = vrot.slane %v638, 2
        %v2619 = vrot.slane %v639, 2
        %v2620 = vsel %vm988, %v2618, %v2619
        %s2621 = scalar_lea.vmem %s1, 26
        %v2622 = vld [vmem:[%s2621] sm:$0x1]
        %v2623 = vsel %vm645, %v2620, 0
        %v2626 = vsel %vm670, %v2622, 0
        %2628 = vmatpush.msra.mxu0 0.0
        %2629 = vmatpush.msra.mxu0 0.0
        %2630 = vmatpush.msra.mxu0 0.0
        %2631 = vmatpush.msra.mxu0 0.0
        %2632 = vmatpush.msra.mxu0 0.0
        %2633 = vmatpush.msra.mxu0 0.0
        %2634 = vmatpush.msra.mxu0 0.0
        %2635 = vmatpush.msra.mxu0 0.0
        %2636 = vmatpush.msra.mxu0 0.0
        %2637 = vmatpush.msra.mxu0 0.0
        %2638 = vmatpush.msra.mxu0 0.0
        %2639 = vmatpush.msra.mxu0 0.0
        %2640 = vmatpush.msra.mxu0 0.0
        %2641 = vmatpush.msra.mxu0 0.0
        %2642 = vmatpush.msra.mxu0 0.0
        %2643 = vmatpush.msra.mxu0 %v2626
        %2644 = vmatmul.f32.gmra.mxu0 %v1754
        %v2645 = vpop.f32.mrf.mxu0
        %v2646 = vadd.f32 0.0, %v2645
        %2647 = vmatmul.f32.gmra.mxu0 %v1756
        %v2648 = vpop.f32.mrf.mxu0
        %v2649 = vadd.f32 0.0, %v2648
        %2650 = vmatmul.f32.gmra.mxu0 %v1758
        %v2651 = vpop.f32.mrf.mxu0
        %v2652 = vadd.f32 0.0, %v2651
        %2653 = vmatmul.f32.gmra.mxu0 %v1760
        %v2654 = vpop.f32.mrf.mxu0
        %v2655 = vadd.f32 0.0, %v2654
        %2656 = vmatmul.f32.gmra.mxu0 %v1762
        %v2657 = vpop.f32.mrf.mxu0
        %v2658 = vadd.f32 0.0, %v2657
        %2659 = vmatmul.f32.gmra.mxu0 %v1764
        %v2660 = vpop.f32.mrf.mxu0
        %v2661 = vadd.f32 0.0, %v2660
        %2662 = vmatmul.f32.gmra.mxu0 %v1766
        %v2663 = vpop.f32.mrf.mxu0
        %v2664 = vadd.f32 0.0, %v2663
        %2665 = vmatmul.f32.gmra.mxu0 %v2623
        %v2666 = vpop.f32.mrf.mxu0
        %v2667 = vadd.f32 0.0, %v2666
        %2668 = vdwg.mxu0
        %v2669 = vadd.f32 %v2610, %v2646
        %v2670 = vadd.f32 %v2611, %v2649
        %v2671 = vadd.f32 %v2612, %v2652
        %v2672 = vadd.f32 %v2613, %v2655
        %v2673 = vadd.f32 %v2614, %v2658
        %v2674 = vadd.f32 %v2615, %v2661
        %v2675 = vadd.f32 %v2616, %v2664
        %v2676 = vadd.f32 %v2617, %v2667
        %v2677 = vrot.slane %v617, 3
        %v2678 = vrot.slane %v618, 3
        %v2679 = vsel %vm1177, %v2677, %v2678
        %s2680 = scalar_lea.vmem %s1, 27
        %v2681 = vld [vmem:[%s2680] sm:$0x1]
        %v2682 = vsel %vm645, %v2679, 0
        %v2685 = vsel %vm670, %v2681, 0
        %2687 = vmatpush.msra.mxu0 0.0
        %2688 = vmatpush.msra.mxu0 0.0
        %2689 = vmatpush.msra.mxu0 0.0
        %2690 = vmatpush.msra.mxu0 0.0
        %2691 = vmatpush.msra.mxu0 0.0
        %2692 = vmatpush.msra.mxu0 0.0
        %2693 = vmatpush.msra.mxu0 0.0
        %2694 = vmatpush.msra.mxu0 0.0
        %2695 = vmatpush.msra.mxu0 0.0
        %2696 = vmatpush.msra.mxu0 0.0
        %2697 = vmatpush.msra.mxu0 0.0
        %2698 = vmatpush.msra.mxu0 0.0
        %2699 = vmatpush.msra.mxu0 0.0
        %2700 = vmatpush.msra.mxu0 0.0
        %2701 = vmatpush.msra.mxu0 0.0
        %2702 = vmatpush.msra.mxu0 %v2685
        %2703 = vmatmul.f32.gmra.mxu0 %v1848
        %v2704 = vpop.f32.mrf.mxu0
        %v2705 = vadd.f32 0.0, %v2704
        %2706 = vmatmul.f32.gmra.mxu0 %v1850
        %v2707 = vpop.f32.mrf.mxu0
        %v2708 = vadd.f32 0.0, %v2707
        %2709 = vmatmul.f32.gmra.mxu0 %v1852
        %v2710 = vpop.f32.mrf.mxu0
        %v2711 = vadd.f32 0.0, %v2710
        %2712 = vmatmul.f32.gmra.mxu0 %v1854
        %v2713 = vpop.f32.mrf.mxu0
        %v2714 = vadd.f32 0.0, %v2713
        %2715 = vmatmul.f32.gmra.mxu0 %v1856
        %v2716 = vpop.f32.mrf.mxu0
        %v2717 = vadd.f32 0.0, %v2716
        %2718 = vmatmul.f32.gmra.mxu0 %v1858
        %v2719 = vpop.f32.mrf.mxu0
        %v2720 = vadd.f32 0.0, %v2719
        %2721 = vmatmul.f32.gmra.mxu0 %v1860
        %v2722 = vpop.f32.mrf.mxu0
        %v2723 = vadd.f32 0.0, %v2722
        %2724 = vmatmul.f32.gmra.mxu0 %v2682
        %v2725 = vpop.f32.mrf.mxu0
        %v2726 = vadd.f32 0.0, %v2725
        %2727 = vdwg.mxu0
        %v2728 = vadd.f32 %v2669, %v2705
        %v2729 = vadd.f32 %v2670, %v2708
        %v2730 = vadd.f32 %v2671, %v2711
        %v2731 = vadd.f32 %v2672, %v2714
        %v2732 = vadd.f32 %v2673, %v2717
        %v2733 = vadd.f32 %v2674, %v2720
        %v2734 = vadd.f32 %v2675, %v2723
        %v2735 = vadd.f32 %v2676, %v2726
        %s2736 = scalar_lea.vmem %s1, 28
        %v2737 = vld [vmem:[%s2736] sm:$0x1]
        %v2739 = vsel %vm645, %v573, 0
        %v2742 = vsel %vm670, %v2737, 0
        %2744 = vmatpush.msra.mxu0 0.0
        %2745 = vmatpush.msra.mxu0 0.0
        %2746 = vmatpush.msra.mxu0 0.0
        %2747 = vmatpush.msra.mxu0 0.0
        %2748 = vmatpush.msra.mxu0 0.0
        %2749 = vmatpush.msra.mxu0 0.0
        %2750 = vmatpush.msra.mxu0 0.0
        %2751 = vmatpush.msra.mxu0 0.0
        %2752 = vmatpush.msra.mxu0 0.0
        %2753 = vmatpush.msra.mxu0 0.0
        %2754 = vmatpush.msra.mxu0 0.0
        %2755 = vmatpush.msra.mxu0 0.0
        %2756 = vmatpush.msra.mxu0 0.0
        %2757 = vmatpush.msra.mxu0 0.0
        %2758 = vmatpush.msra.mxu0 0.0
        %2759 = vmatpush.msra.mxu0 %v2742
        %2760 = vmatmul.f32.gmra.mxu0 %v722
        %v2761 = vpop.f32.mrf.mxu0
        %v2762 = vadd.f32 0.0, %v2761
        %2763 = vmatmul.f32.gmra.mxu0 %v725
        %v2764 = vpop.f32.mrf.mxu0
        %v2765 = vadd.f32 0.0, %v2764
        %2766 = vmatmul.f32.gmra.mxu0 %v728
        %v2767 = vpop.f32.mrf.mxu0
        %v2768 = vadd.f32 0.0, %v2767
        %2769 = vmatmul.f32.gmra.mxu0 %v731
        %v2770 = vpop.f32.mrf.mxu0
        %v2771 = vadd.f32 0.0, %v2770
        %2772 = vmatmul.f32.gmra.mxu0 %v734
        %v2773 = vpop.f32.mrf.mxu0
        %v2774 = vadd.f32 0.0, %v2773
        %2775 = vmatmul.f32.gmra.mxu0 %v737
        %v2776 = vpop.f32.mrf.mxu0
        %v2777 = vadd.f32 0.0, %v2776
        %2778 = vmatmul.f32.gmra.mxu0 %v1917
        %v2779 = vpop.f32.mrf.mxu0
        %v2780 = vadd.f32 0.0, %v2779
        %2781 = vmatmul.f32.gmra.mxu0 %v2739
        %v2782 = vpop.f32.mrf.mxu0
        %v2783 = vadd.f32 0.0, %v2782
        %2784 = vdwg.mxu0
        %v2785 = vadd.f32 %v2728, %v2762
        %v2786 = vadd.f32 %v2729, %v2765
        %v2787 = vadd.f32 %v2730, %v2768
        %v2788 = vadd.f32 %v2731, %v2771
        %v2789 = vadd.f32 %v2732, %v2774
        %v2790 = vadd.f32 %v2733, %v2777
        %v2791 = vadd.f32 %v2734, %v2780
        %v2792 = vadd.f32 %v2735, %v2783
        %s2793 = scalar_lea.vmem %s1, 29
        %v2794 = vld [vmem:[%s2793] sm:$0x1]
        %v2796 = vsel %vm645, %v596, 0
        %v2799 = vsel %vm670, %v2794, 0
        %2801 = vmatpush.msra.mxu0 0.0
        %2802 = vmatpush.msra.mxu0 0.0
        %2803 = vmatpush.msra.mxu0 0.0
        %2804 = vmatpush.msra.mxu0 0.0
        %2805 = vmatpush.msra.mxu0 0.0
        %2806 = vmatpush.msra.mxu0 0.0
        %2807 = vmatpush.msra.mxu0 0.0
        %2808 = vmatpush.msra.mxu0 0.0
        %2809 = vmatpush.msra.mxu0 0.0
        %2810 = vmatpush.msra.mxu0 0.0
        %2811 = vmatpush.msra.mxu0 0.0
        %2812 = vmatpush.msra.mxu0 0.0
        %2813 = vmatpush.msra.mxu0 0.0
        %2814 = vmatpush.msra.mxu0 0.0
        %2815 = vmatpush.msra.mxu0 0.0
        %2816 = vmatpush.msra.mxu0 %v2799
        %2817 = vmatmul.f32.gmra.mxu0 %v653
        %v2818 = vpop.f32.mrf.mxu0
        %v2819 = vadd.f32 0.0, %v2818
        %2820 = vmatmul.f32.gmra.mxu0 %v656
        %v2821 = vpop.f32.mrf.mxu0
        %v2822 = vadd.f32 0.0, %v2821
        %2823 = vmatmul.f32.gmra.mxu0 %v659
        %v2824 = vpop.f32.mrf.mxu0
        %v2825 = vadd.f32 0.0, %v2824
        %2826 = vmatmul.f32.gmra.mxu0 %v662
        %v2827 = vpop.f32.mrf.mxu0
        %v2828 = vadd.f32 0.0, %v2827
        %2829 = vmatmul.f32.gmra.mxu0 %v665
        %v2830 = vpop.f32.mrf.mxu0
        %v2831 = vadd.f32 0.0, %v2830
        %2832 = vmatmul.f32.gmra.mxu0 %v668
        %v2833 = vpop.f32.mrf.mxu0
        %v2834 = vadd.f32 0.0, %v2833
        %2835 = vmatmul.f32.gmra.mxu0 %v1974
        %v2836 = vpop.f32.mrf.mxu0
        %v2837 = vadd.f32 0.0, %v2836
        %2838 = vmatmul.f32.gmra.mxu0 %v2796
        %v2839 = vpop.f32.mrf.mxu0
        %v2840 = vadd.f32 0.0, %v2839
        %2841 = vdwg.mxu0
        %v2842 = vadd.f32 %v2785, %v2819
        %v2843 = vadd.f32 %v2786, %v2822
        %v2844 = vadd.f32 %v2787, %v2825
        %v2845 = vadd.f32 %v2788, %v2828
        %v2846 = vadd.f32 %v2789, %v2831
        %v2847 = vadd.f32 %v2790, %v2834
        %v2848 = vadd.f32 %v2791, %v2837
        %v2849 = vadd.f32 %v2792, %v2840
        %v2851 = vrot.slane %v573, 1
        %v2852 = vrot.slane %v574, 1
        %v2853 = vsel %vm791, %v2851, %v2852
        %s2854 = scalar_lea.vmem %s1, 30
        %v2855 = vld [vmem:[%s2854] sm:$0x1]
        %v2856 = vsel %vm645, %v2853, 0
        %v2859 = vsel %vm670, %v2855, 0
        %2861 = vmatpush.msra.mxu0 0.0
        %2862 = vmatpush.msra.mxu0 0.0
        %2863 = vmatpush.msra.mxu0 0.0
        %2864 = vmatpush.msra.mxu0 0.0
        %2865 = vmatpush.msra.mxu0 0.0
        %2866 = vmatpush.msra.mxu0 0.0
        %2867 = vmatpush.msra.mxu0 0.0
        %2868 = vmatpush.msra.mxu0 0.0
        %2869 = vmatpush.msra.mxu0 0.0
        %2870 = vmatpush.msra.mxu0 0.0
        %2871 = vmatpush.msra.mxu0 0.0
        %2872 = vmatpush.msra.mxu0 0.0
        %2873 = vmatpush.msra.mxu0 0.0
        %2874 = vmatpush.msra.mxu0 0.0
        %2875 = vmatpush.msra.mxu0 0.0
        %2876 = vmatpush.msra.mxu0 %v2859
        %2877 = vmatmul.f32.gmra.mxu0 %v822
        %v2878 = vpop.f32.mrf.mxu0
        %v2879 = vadd.f32 0.0, %v2878
        %2880 = vmatmul.f32.gmra.mxu0 %v824
        %v2881 = vpop.f32.mrf.mxu0
        %v2882 = vadd.f32 0.0, %v2881
        %2883 = vmatmul.f32.gmra.mxu0 %v826
        %v2884 = vpop.f32.mrf.mxu0
        %v2885 = vadd.f32 0.0, %v2884
        %2886 = vmatmul.f32.gmra.mxu0 %v828
        %v2887 = vpop.f32.mrf.mxu0
        %v2888 = vadd.f32 0.0, %v2887
        %2889 = vmatmul.f32.gmra.mxu0 %v830
        %v2890 = vpop.f32.mrf.mxu0
        %v2891 = vadd.f32 0.0, %v2890
        %2892 = vmatmul.f32.gmra.mxu0 %v832
        %v2893 = vpop.f32.mrf.mxu0
        %v2894 = vadd.f32 0.0, %v2893
        %2895 = vmatmul.f32.gmra.mxu0 %v2034
        %v2896 = vpop.f32.mrf.mxu0
        %v2897 = vadd.f32 0.0, %v2896
        %2898 = vmatmul.f32.gmra.mxu0 %v2856
        %v2899 = vpop.f32.mrf.mxu0
        %v2900 = vadd.f32 0.0, %v2899
        %2901 = vdwg.mxu0
        %v2902 = vadd.f32 %v2842, %v2879
        %v2903 = vadd.f32 %v2843, %v2882
        %v2904 = vadd.f32 %v2844, %v2885
        %v2905 = vadd.f32 %v2845, %v2888
        %v2906 = vadd.f32 %v2846, %v2891
        %v2907 = vadd.f32 %v2847, %v2894
        %v2908 = vadd.f32 %v2848, %v2897
        %v2909 = vadd.f32 %v2849, %v2900
        %v2911 = vrot.slane %v596, 1
        %v2912 = vrot.slane %v597, 1
        %v2913 = vsel %vm791, %v2911, %v2912
        %s2914 = scalar_lea.vmem %s1, 31
        %v2915 = vld [vmem:[%s2914] sm:$0x1]
        %v2916 = vsel %vm645, %v2913, 0
        %v2919 = vsel %vm670, %v2915, 0
        %2921 = vmatpush.msra.mxu0 0.0
        %2922 = vmatpush.msra.mxu0 0.0
        %2923 = vmatpush.msra.mxu0 0.0
        %2924 = vmatpush.msra.mxu0 0.0
        %2925 = vmatpush.msra.mxu0 0.0
        %2926 = vmatpush.msra.mxu0 0.0
        %2927 = vmatpush.msra.mxu0 0.0
        %2928 = vmatpush.msra.mxu0 0.0
        %2929 = vmatpush.msra.mxu0 0.0
        %2930 = vmatpush.msra.mxu0 0.0
        %2931 = vmatpush.msra.mxu0 0.0
        %2932 = vmatpush.msra.mxu0 0.0
        %2933 = vmatpush.msra.mxu0 0.0
        %2934 = vmatpush.msra.mxu0 0.0
        %2935 = vmatpush.msra.mxu0 0.0
        %2936 = vmatpush.msra.mxu0 %v2919
        %2937 = vmatmul.f32.gmra.mxu0 %v924
        %v2938 = vpop.f32.mrf.mxu0
        %v2939 = vadd.f32 0.0, %v2938
        %2940 = vmatmul.f32.gmra.mxu0 %v926
        %v2941 = vpop.f32.mrf.mxu0
        %v2942 = vadd.f32 0.0, %v2941
        %2943 = vmatmul.f32.gmra.mxu0 %v928
        %v2944 = vpop.f32.mrf.mxu0
        %v2945 = vadd.f32 0.0, %v2944
        %2946 = vmatmul.f32.gmra.mxu0 %v930
        %v2947 = vpop.f32.mrf.mxu0
        %v2948 = vadd.f32 0.0, %v2947
        %2949 = vmatmul.f32.gmra.mxu0 %v932
        %v2950 = vpop.f32.mrf.mxu0
        %v2951 = vadd.f32 0.0, %v2950
        %2952 = vmatmul.f32.gmra.mxu0 %v934
        %v2953 = vpop.f32.mrf.mxu0
        %v2954 = vadd.f32 0.0, %v2953
        %2955 = vmatmul.f32.gmra.mxu0 %v2094
        %v2956 = vpop.f32.mrf.mxu0
        %v2957 = vadd.f32 0.0, %v2956
        %2958 = vmatmul.f32.gmra.mxu0 %v2916
        %v2959 = vpop.f32.mrf.mxu0
        %v2960 = vadd.f32 0.0, %v2959
        %2961 = vdwg.mxu0
        %v2962 = vadd.f32 %v2902, %v2939
        %v2963 = vadd.f32 %v2903, %v2942
        %v2964 = vadd.f32 %v2904, %v2945
        %v2965 = vadd.f32 %v2905, %v2948
        %v2966 = vadd.f32 %v2906, %v2951
        %v2967 = vadd.f32 %v2907, %v2954
        %v2968 = vadd.f32 %v2908, %v2957
        %v2969 = vadd.f32 %v2909, %v2960
        %v2970 = vrot.slane %v573, 2
        %v2971 = vrot.slane %v574, 2
        %v2972 = vsel %vm988, %v2970, %v2971
        %s2973 = scalar_lea.vmem %s1, 32
        %v2974 = vld [vmem:[%s2973] sm:$0x1]
        %v2975 = vsel %vm645, %v2972, 0
        %v2978 = vsel %vm670, %v2974, 0
        %2980 = vmatpush.msra.mxu0 0.0
        %2981 = vmatpush.msra.mxu0 0.0
        %2982 = vmatpush.msra.mxu0 0.0
        %2983 = vmatpush.msra.mxu0 0.0
        %2984 = vmatpush.msra.mxu0 0.0
        %2985 = vmatpush.msra.mxu0 0.0
        %2986 = vmatpush.msra.mxu0 0.0
        %2987 = vmatpush.msra.mxu0 0.0
        %2988 = vmatpush.msra.mxu0 0.0
        %2989 = vmatpush.msra.mxu0 0.0
        %2990 = vmatpush.msra.mxu0 0.0
        %2991 = vmatpush.msra.mxu0 0.0
        %2992 = vmatpush.msra.mxu0 0.0
        %2993 = vmatpush.msra.mxu0 0.0
        %2994 = vmatpush.msra.mxu0 0.0
        %2995 = vmatpush.msra.mxu0 %v2978
        %2996 = vmatmul.f32.gmra.mxu0 %v1019
        %v2997 = vpop.f32.mrf.mxu0
        %v2998 = vadd.f32 0.0, %v2997
        %2999 = vmatmul.f32.gmra.mxu0 %v1021
        %v3000 = vpop.f32.mrf.mxu0
        %v3001 = vadd.f32 0.0, %v3000
        %3002 = vmatmul.f32.gmra.mxu0 %v1023
        %v3003 = vpop.f32.mrf.mxu0
        %v3004 = vadd.f32 0.0, %v3003
        %3005 = vmatmul.f32.gmra.mxu0 %v1025
        %v3006 = vpop.f32.mrf.mxu0
        %v3007 = vadd.f32 0.0, %v3006
        %3008 = vmatmul.f32.gmra.mxu0 %v1027
        %v3009 = vpop.f32.mrf.mxu0
        %v3010 = vadd.f32 0.0, %v3009
        %3011 = vmatmul.f32.gmra.mxu0 %v1029
        %v3012 = vpop.f32.mrf.mxu0
        %v3013 = vadd.f32 0.0, %v3012
        %3014 = vmatmul.f32.gmra.mxu0 %v2153
        %v3015 = vpop.f32.mrf.mxu0
        %v3016 = vadd.f32 0.0, %v3015
        %3017 = vmatmul.f32.gmra.mxu0 %v2975
        %v3018 = vpop.f32.mrf.mxu0
        %v3019 = vadd.f32 0.0, %v3018
        %3020 = vdwg.mxu0
        %v3021 = vadd.f32 %v2962, %v2998
        %v3022 = vadd.f32 %v2963, %v3001
        %v3023 = vadd.f32 %v2964, %v3004
        %v3024 = vadd.f32 %v2965, %v3007
        %v3025 = vadd.f32 %v2966, %v3010
        %v3026 = vadd.f32 %v2967, %v3013
        %v3027 = vadd.f32 %v2968, %v3016
        %v3028 = vadd.f32 %v2969, %v3019
        %v3029 = vrot.slane %v596, 2
        %v3030 = vrot.slane %v597, 2
        %v3031 = vsel %vm988, %v3029, %v3030
        %s3032 = scalar_lea.vmem %s1, 33
        %v3033 = vld [vmem:[%s3032] sm:$0x1]
        %v3034 = vsel %vm645, %v3031, 0
        %v3037 = vsel %vm670, %v3033, 0
        %3039 = vmatpush.msra.mxu0 0.0
        %3040 = vmatpush.msra.mxu0 0.0
        %3041 = vmatpush.msra.mxu0 0.0
        %3042 = vmatpush.msra.mxu0 0.0
        %3043 = vmatpush.msra.mxu0 0.0
        %3044 = vmatpush.msra.mxu0 0.0
        %3045 = vmatpush.msra.mxu0 0.0
        %3046 = vmatpush.msra.mxu0 0.0
        %3047 = vmatpush.msra.mxu0 0.0
        %3048 = vmatpush.msra.mxu0 0.0
        %3049 = vmatpush.msra.mxu0 0.0
        %3050 = vmatpush.msra.mxu0 0.0
        %3051 = vmatpush.msra.mxu0 0.0
        %3052 = vmatpush.msra.mxu0 0.0
        %3053 = vmatpush.msra.mxu0 0.0
        %3054 = vmatpush.msra.mxu0 %v3037
        %3055 = vmatmul.f32.gmra.mxu0 %v1113
        %v3056 = vpop.f32.mrf.mxu0
        %v3057 = vadd.f32 0.0, %v3056
        %3058 = vmatmul.f32.gmra.mxu0 %v1115
        %v3059 = vpop.f32.mrf.mxu0
        %v3060 = vadd.f32 0.0, %v3059
        %3061 = vmatmul.f32.gmra.mxu0 %v1117
        %v3062 = vpop.f32.mrf.mxu0
        %v3063 = vadd.f32 0.0, %v3062
        %3064 = vmatmul.f32.gmra.mxu0 %v1119
        %v3065 = vpop.f32.mrf.mxu0
        %v3066 = vadd.f32 0.0, %v3065
        %3067 = vmatmul.f32.gmra.mxu0 %v1121
        %v3068 = vpop.f32.mrf.mxu0
        %v3069 = vadd.f32 0.0, %v3068
        %3070 = vmatmul.f32.gmra.mxu0 %v1123
        %v3071 = vpop.f32.mrf.mxu0
        %v3072 = vadd.f32 0.0, %v3071
        %3073 = vmatmul.f32.gmra.mxu0 %v2212
        %v3074 = vpop.f32.mrf.mxu0
        %v3075 = vadd.f32 0.0, %v3074
        %3076 = vmatmul.f32.gmra.mxu0 %v3034
        %v3077 = vpop.f32.mrf.mxu0
        %v3078 = vadd.f32 0.0, %v3077
        %3079 = vdwg.mxu0
        %v3080 = vadd.f32 %v3021, %v3057
        %v3081 = vadd.f32 %v3022, %v3060
        %v3082 = vadd.f32 %v3023, %v3063
        %v3083 = vadd.f32 %v3024, %v3066
        %v3084 = vadd.f32 %v3025, %v3069
        %v3085 = vadd.f32 %v3026, %v3072
        %v3086 = vadd.f32 %v3027, %v3075
        %v3087 = vadd.f32 %v3028, %v3078
        %v3088 = vrot.slane %v573, 3
        %v3089 = vrot.slane %v574, 3
        %v3090 = vsel %vm1177, %v3088, %v3089
        %s3091 = scalar_lea.vmem %s1, 34
        %v3092 = vld [vmem:[%s3091] sm:$0x1]
        %v3093 = vsel %vm645, %v3090, 0
        %v3096 = vsel %vm670, %v3092, 0
        %3098 = vmatpush.msra.mxu0 0.0
        %3099 = vmatpush.msra.mxu0 0.0
        %3100 = vmatpush.msra.mxu0 0.0
        %3101 = vmatpush.msra.mxu0 0.0
        %3102 = vmatpush.msra.mxu0 0.0
        %3103 = vmatpush.msra.mxu0 0.0
        %3104 = vmatpush.msra.mxu0 0.0
        %3105 = vmatpush.msra.mxu0 0.0
        %3106 = vmatpush.msra.mxu0 0.0
        %3107 = vmatpush.msra.mxu0 0.0
        %3108 = vmatpush.msra.mxu0 0.0
        %3109 = vmatpush.msra.mxu0 0.0
        %3110 = vmatpush.msra.mxu0 0.0
        %3111 = vmatpush.msra.mxu0 0.0
        %3112 = vmatpush.msra.mxu0 0.0
        %3113 = vmatpush.msra.mxu0 %v3096
        %3114 = vmatmul.f32.gmra.mxu0 %v1208
        %v3115 = vpop.f32.mrf.mxu0
        %v3116 = vadd.f32 0.0, %v3115
        %3117 = vmatmul.f32.gmra.mxu0 %v1210
        %v3118 = vpop.f32.mrf.mxu0
        %v3119 = vadd.f32 0.0, %v3118
        %3120 = vmatmul.f32.gmra.mxu0 %v1212
        %v3121 = vpop.f32.mrf.mxu0
        %v3122 = vadd.f32 0.0, %v3121
        %3123 = vmatmul.f32.gmra.mxu0 %v1214
        %v3124 = vpop.f32.mrf.mxu0
        %v3125 = vadd.f32 0.0, %v3124
        %3126 = vmatmul.f32.gmra.mxu0 %v1216
        %v3127 = vpop.f32.mrf.mxu0
        %v3128 = vadd.f32 0.0, %v3127
        %3129 = vmatmul.f32.gmra.mxu0 %v1218
        %v3130 = vpop.f32.mrf.mxu0
        %v3131 = vadd.f32 0.0, %v3130
        %3132 = vmatmul.f32.gmra.mxu0 %v2271
        %v3133 = vpop.f32.mrf.mxu0
        %v3134 = vadd.f32 0.0, %v3133
        %3135 = vmatmul.f32.gmra.mxu0 %v3093
        %v3136 = vpop.f32.mrf.mxu0
        %v3137 = vadd.f32 0.0, %v3136
        %3138 = vdwg.mxu0
        %v3139 = vadd.f32 %v3080, %v3116
        %v3140 = vadd.f32 %v3081, %v3119
        %v3141 = vadd.f32 %v3082, %v3122
        %v3142 = vadd.f32 %v3083, %v3125
        %v3143 = vadd.f32 %v3084, %v3128
        %v3144 = vadd.f32 %v3085, %v3131
        %v3145 = vadd.f32 %v3086, %v3134
        %v3146 = vadd.f32 %v3087, %v3137
        %s3147 = scalar_lea.vmem %s1, 35
        %v3148 = vld [vmem:[%s3147] sm:$0x1]
        %v3150 = vsel %vm645, %v619, 0
        %v3153 = vsel %vm670, %v3148, 0
        %3155 = vmatpush.msra.mxu0 0.0
        %3156 = vmatpush.msra.mxu0 0.0
        %3157 = vmatpush.msra.mxu0 0.0
        %3158 = vmatpush.msra.mxu0 0.0
        %3159 = vmatpush.msra.mxu0 0.0
        %3160 = vmatpush.msra.mxu0 0.0
        %3161 = vmatpush.msra.mxu0 0.0
        %3162 = vmatpush.msra.mxu0 0.0
        %3163 = vmatpush.msra.mxu0 0.0
        %3164 = vmatpush.msra.mxu0 0.0
        %3165 = vmatpush.msra.mxu0 0.0
        %3166 = vmatpush.msra.mxu0 0.0
        %3167 = vmatpush.msra.mxu0 0.0
        %3168 = vmatpush.msra.mxu0 0.0
        %3169 = vmatpush.msra.mxu0 0.0
        %3170 = vmatpush.msra.mxu0 %v3153
        %3171 = vmatmul.f32.gmra.mxu0 %v1281
        %v3172 = vpop.f32.mrf.mxu0
        %v3173 = vadd.f32 0.0, %v3172
        %3174 = vmatmul.f32.gmra.mxu0 %v1284
        %v3175 = vpop.f32.mrf.mxu0
        %v3176 = vadd.f32 0.0, %v3175
        %3177 = vmatmul.f32.gmra.mxu0 %v1287
        %v3178 = vpop.f32.mrf.mxu0
        %v3179 = vadd.f32 0.0, %v3178
        %3180 = vmatmul.f32.gmra.mxu0 %v1290
        %v3181 = vpop.f32.mrf.mxu0
        %v3182 = vadd.f32 0.0, %v3181
        %3183 = vmatmul.f32.gmra.mxu0 %v1293
        %v3184 = vpop.f32.mrf.mxu0
        %v3185 = vadd.f32 0.0, %v3184
        %3186 = vmatmul.f32.gmra.mxu0 %v1296
        %v3187 = vpop.f32.mrf.mxu0
        %v3188 = vadd.f32 0.0, %v3187
        %3189 = vmatmul.f32.gmra.mxu0 %v2328
        %v3190 = vpop.f32.mrf.mxu0
        %v3191 = vadd.f32 0.0, %v3190
        %3192 = vmatmul.f32.gmra.mxu0 %v3150
        %v3193 = vpop.f32.mrf.mxu0
        %v3194 = vadd.f32 0.0, %v3193
        %3195 = vdwg.mxu0
        %v3196 = vadd.f32 %v3139, %v3173
        %v3197 = vadd.f32 %v3140, %v3176
        %v3198 = vadd.f32 %v3141, %v3179
        %v3199 = vadd.f32 %v3142, %v3182
        %v3200 = vadd.f32 %v3143, %v3185
        %v3201 = vadd.f32 %v3144, %v3188
        %v3202 = vadd.f32 %v3145, %v3191
        %v3203 = vadd.f32 %v3146, %v3194
        %s3204 = scalar_lea.vmem %s1, 36
        %v3205 = vld [vmem:[%s3204] sm:$0x1]
        %v3207 = vsel %vm645, %v640, 0
        %v3210 = vsel %vm670, %v3205, 0
        %3212 = vmatpush.msra.mxu0 0.0
        %3213 = vmatpush.msra.mxu0 0.0
        %3214 = vmatpush.msra.mxu0 0.0
        %3215 = vmatpush.msra.mxu0 0.0
        %3216 = vmatpush.msra.mxu0 0.0
        %3217 = vmatpush.msra.mxu0 0.0
        %3218 = vmatpush.msra.mxu0 0.0
        %3219 = vmatpush.msra.mxu0 0.0
        %3220 = vmatpush.msra.mxu0 0.0
        %3221 = vmatpush.msra.mxu0 0.0
        %3222 = vmatpush.msra.mxu0 0.0
        %3223 = vmatpush.msra.mxu0 0.0
        %3224 = vmatpush.msra.mxu0 0.0
        %3225 = vmatpush.msra.mxu0 0.0
        %3226 = vmatpush.msra.mxu0 0.0
        %3227 = vmatpush.msra.mxu0 %v3210
        %3228 = vmatmul.f32.gmra.mxu0 %v1359
        %v3229 = vpop.f32.mrf.mxu0
        %v3230 = vadd.f32 0.0, %v3229
        %3231 = vmatmul.f32.gmra.mxu0 %v1362
        %v3232 = vpop.f32.mrf.mxu0
        %v3233 = vadd.f32 0.0, %v3232
        %3234 = vmatmul.f32.gmra.mxu0 %v1365
        %v3235 = vpop.f32.mrf.mxu0
        %v3236 = vadd.f32 0.0, %v3235
        %3237 = vmatmul.f32.gmra.mxu0 %v1368
        %v3238 = vpop.f32.mrf.mxu0
        %v3239 = vadd.f32 0.0, %v3238
        %3240 = vmatmul.f32.gmra.mxu0 %v1371
        %v3241 = vpop.f32.mrf.mxu0
        %v3242 = vadd.f32 0.0, %v3241
        %3243 = vmatmul.f32.gmra.mxu0 %v1374
        %v3244 = vpop.f32.mrf.mxu0
        %v3245 = vadd.f32 0.0, %v3244
        %3246 = vmatmul.f32.gmra.mxu0 %v2385
        %v3247 = vpop.f32.mrf.mxu0
        %v3248 = vadd.f32 0.0, %v3247
        %3249 = vmatmul.f32.gmra.mxu0 %v3207
        %v3250 = vpop.f32.mrf.mxu0
        %v3251 = vadd.f32 0.0, %v3250
        %3252 = vdwg.mxu0
        %v3253 = vadd.f32 %v3196, %v3230
        %v3254 = vadd.f32 %v3197, %v3233
        %v3255 = vadd.f32 %v3198, %v3236
        %v3256 = vadd.f32 %v3199, %v3239
        %v3257 = vadd.f32 %v3200, %v3242
        %v3258 = vadd.f32 %v3201, %v3245
        %v3259 = vadd.f32 %v3202, %v3248
        %v3260 = vadd.f32 %v3203, %v3251
        %v3262 = vrot.slane %v619, 1
        %v3263 = vrot.slane %v620, 1
        %v3264 = vsel %vm791, %v3262, %v3263
        %s3265 = scalar_lea.vmem %s1, 37
        %v3266 = vld [vmem:[%s3265] sm:$0x1]
        %v3267 = vsel %vm645, %v3264, 0
        %v3270 = vsel %vm670, %v3266, 0
        %3272 = vmatpush.msra.mxu0 0.0
        %3273 = vmatpush.msra.mxu0 0.0
        %3274 = vmatpush.msra.mxu0 0.0
        %3275 = vmatpush.msra.mxu0 0.0
        %3276 = vmatpush.msra.mxu0 0.0
        %3277 = vmatpush.msra.mxu0 0.0
        %3278 = vmatpush.msra.mxu0 0.0
        %3279 = vmatpush.msra.mxu0 0.0
        %3280 = vmatpush.msra.mxu0 0.0
        %3281 = vmatpush.msra.mxu0 0.0
        %3282 = vmatpush.msra.mxu0 0.0
        %3283 = vmatpush.msra.mxu0 0.0
        %3284 = vmatpush.msra.mxu0 0.0
        %3285 = vmatpush.msra.mxu0 0.0
        %3286 = vmatpush.msra.mxu0 0.0
        %3287 = vmatpush.msra.mxu0 %v3270
        %3288 = vmatmul.f32.gmra.mxu0 %v1466
        %v3289 = vpop.f32.mrf.mxu0
        %v3290 = vadd.f32 0.0, %v3289
        %3291 = vmatmul.f32.gmra.mxu0 %v1468
        %v3292 = vpop.f32.mrf.mxu0
        %v3293 = vadd.f32 0.0, %v3292
        %3294 = vmatmul.f32.gmra.mxu0 %v1470
        %v3295 = vpop.f32.mrf.mxu0
        %v3296 = vadd.f32 0.0, %v3295
        %3297 = vmatmul.f32.gmra.mxu0 %v1472
        %v3298 = vpop.f32.mrf.mxu0
        %v3299 = vadd.f32 0.0, %v3298
        %3300 = vmatmul.f32.gmra.mxu0 %v1474
        %v3301 = vpop.f32.mrf.mxu0
        %v3302 = vadd.f32 0.0, %v3301
        %3303 = vmatmul.f32.gmra.mxu0 %v1476
        %v3304 = vpop.f32.mrf.mxu0
        %v3305 = vadd.f32 0.0, %v3304
        %3306 = vmatmul.f32.gmra.mxu0 %v2445
        %v3307 = vpop.f32.mrf.mxu0
        %v3308 = vadd.f32 0.0, %v3307
        %3309 = vmatmul.f32.gmra.mxu0 %v3267
        %v3310 = vpop.f32.mrf.mxu0
        %v3311 = vadd.f32 0.0, %v3310
        %3312 = vdwg.mxu0
        %v3313 = vadd.f32 %v3253, %v3290
        %v3314 = vadd.f32 %v3254, %v3293
        %v3315 = vadd.f32 %v3255, %v3296
        %v3316 = vadd.f32 %v3256, %v3299
        %v3317 = vadd.f32 %v3257, %v3302
        %v3318 = vadd.f32 %v3258, %v3305
        %v3319 = vadd.f32 %v3259, %v3308
        %v3320 = vadd.f32 %v3260, %v3311
        %v3322 = vrot.slane %v640, 1
        %v3323 = vrot.slane %v641, 1
        %v3324 = vsel %vm791, %v3322, %v3323
        %s3325 = scalar_lea.vmem %s1, 38
        %v3326 = vld [vmem:[%s3325] sm:$0x1]
        %v3327 = vsel %vm645, %v3324, 0
        %v3330 = vsel %vm670, %v3326, 0
        %3332 = vmatpush.msra.mxu0 0.0
        %3333 = vmatpush.msra.mxu0 0.0
        %3334 = vmatpush.msra.mxu0 0.0
        %3335 = vmatpush.msra.mxu0 0.0
        %3336 = vmatpush.msra.mxu0 0.0
        %3337 = vmatpush.msra.mxu0 0.0
        %3338 = vmatpush.msra.mxu0 0.0
        %3339 = vmatpush.msra.mxu0 0.0
        %3340 = vmatpush.msra.mxu0 0.0
        %3341 = vmatpush.msra.mxu0 0.0
        %3342 = vmatpush.msra.mxu0 0.0
        %3343 = vmatpush.msra.mxu0 0.0
        %3344 = vmatpush.msra.mxu0 0.0
        %3345 = vmatpush.msra.mxu0 0.0
        %3346 = vmatpush.msra.mxu0 0.0
        %3347 = vmatpush.msra.mxu0 %v3330
        %3348 = vmatmul.f32.gmra.mxu0 %v1568
        %v3349 = vpop.f32.mrf.mxu0
        %v3350 = vadd.f32 0.0, %v3349
        %3351 = vmatmul.f32.gmra.mxu0 %v1570
        %v3352 = vpop.f32.mrf.mxu0
        %v3353 = vadd.f32 0.0, %v3352
        %3354 = vmatmul.f32.gmra.mxu0 %v1572
        %v3355 = vpop.f32.mrf.mxu0
        %v3356 = vadd.f32 0.0, %v3355
        %3357 = vmatmul.f32.gmra.mxu0 %v1574
        %v3358 = vpop.f32.mrf.mxu0
        %v3359 = vadd.f32 0.0, %v3358
        %3360 = vmatmul.f32.gmra.mxu0 %v1576
        %v3361 = vpop.f32.mrf.mxu0
        %v3362 = vadd.f32 0.0, %v3361
        %3363 = vmatmul.f32.gmra.mxu0 %v1578
        %v3364 = vpop.f32.mrf.mxu0
        %v3365 = vadd.f32 0.0, %v3364
        %3366 = vmatmul.f32.gmra.mxu0 %v2505
        %v3367 = vpop.f32.mrf.mxu0
        %v3368 = vadd.f32 0.0, %v3367
        %3369 = vmatmul.f32.gmra.mxu0 %v3327
        %v3370 = vpop.f32.mrf.mxu0
        %v3371 = vadd.f32 0.0, %v3370
        %3372 = vdwg.mxu0
        %v3373 = vadd.f32 %v3313, %v3350
        %v3374 = vadd.f32 %v3314, %v3353
        %v3375 = vadd.f32 %v3315, %v3356
        %v3376 = vadd.f32 %v3316, %v3359
        %v3377 = vadd.f32 %v3317, %v3362
        %v3378 = vadd.f32 %v3318, %v3365
        %v3379 = vadd.f32 %v3319, %v3368
        %v3380 = vadd.f32 %v3320, %v3371
        %v3381 = vrot.slane %v619, 2
        %v3382 = vrot.slane %v620, 2
        %v3383 = vsel %vm988, %v3381, %v3382
        %s3384 = scalar_lea.vmem %s1, 39
        %v3385 = vld [vmem:[%s3384] sm:$0x1]
        %v3386 = vsel %vm645, %v3383, 0
        %v3389 = vsel %vm670, %v3385, 0
        %3391 = vmatpush.msra.mxu0 0.0
        %3392 = vmatpush.msra.mxu0 0.0
        %3393 = vmatpush.msra.mxu0 0.0
        %3394 = vmatpush.msra.mxu0 0.0
        %3395 = vmatpush.msra.mxu0 0.0
        %3396 = vmatpush.msra.mxu0 0.0
        %3397 = vmatpush.msra.mxu0 0.0
        %3398 = vmatpush.msra.mxu0 0.0
        %3399 = vmatpush.msra.mxu0 0.0
        %3400 = vmatpush.msra.mxu0 0.0
        %3401 = vmatpush.msra.mxu0 0.0
        %3402 = vmatpush.msra.mxu0 0.0
        %3403 = vmatpush.msra.mxu0 0.0
        %3404 = vmatpush.msra.mxu0 0.0
        %3405 = vmatpush.msra.mxu0 0.0
        %3406 = vmatpush.msra.mxu0 %v3389
        %3407 = vmatmul.f32.gmra.mxu0 %v1662
        %v3408 = vpop.f32.mrf.mxu0
        %v3409 = vadd.f32 0.0, %v3408
        %3410 = vmatmul.f32.gmra.mxu0 %v1664
        %v3411 = vpop.f32.mrf.mxu0
        %v3412 = vadd.f32 0.0, %v3411
        %3413 = vmatmul.f32.gmra.mxu0 %v1666
        %v3414 = vpop.f32.mrf.mxu0
        %v3415 = vadd.f32 0.0, %v3414
        %3416 = vmatmul.f32.gmra.mxu0 %v1668
        %v3417 = vpop.f32.mrf.mxu0
        %v3418 = vadd.f32 0.0, %v3417
        %3419 = vmatmul.f32.gmra.mxu0 %v1670
        %v3420 = vpop.f32.mrf.mxu0
        %v3421 = vadd.f32 0.0, %v3420
        %3422 = vmatmul.f32.gmra.mxu0 %v1672
        %v3423 = vpop.f32.mrf.mxu0
        %v3424 = vadd.f32 0.0, %v3423
        %3425 = vmatmul.f32.gmra.mxu0 %v2564
        %v3426 = vpop.f32.mrf.mxu0
        %v3427 = vadd.f32 0.0, %v3426
        %3428 = vmatmul.f32.gmra.mxu0 %v3386
        %v3429 = vpop.f32.mrf.mxu0
        %v3430 = vadd.f32 0.0, %v3429
        %3431 = vdwg.mxu0
        %v3432 = vadd.f32 %v3373, %v3409
        %v3433 = vadd.f32 %v3374, %v3412
        %v3434 = vadd.f32 %v3375, %v3415
        %v3435 = vadd.f32 %v3376, %v3418
        %v3436 = vadd.f32 %v3377, %v3421
        %v3437 = vadd.f32 %v3378, %v3424
        %v3438 = vadd.f32 %v3379, %v3427
        %v3439 = vadd.f32 %v3380, %v3430
        %v3440 = vrot.slane %v640, 2
        %v3441 = vrot.slane %v641, 2
        %v3442 = vsel %vm988, %v3440, %v3441
        %s3443 = scalar_lea.vmem %s1, 40
        %v3444 = vld [vmem:[%s3443] sm:$0x1]
        %v3445 = vsel %vm645, %v3442, 0
        %v3448 = vsel %vm670, %v3444, 0
        %3450 = vmatpush.msra.mxu0 0.0
        %3451 = vmatpush.msra.mxu0 0.0
        %3452 = vmatpush.msra.mxu0 0.0
        %3453 = vmatpush.msra.mxu0 0.0
        %3454 = vmatpush.msra.mxu0 0.0
        %3455 = vmatpush.msra.mxu0 0.0
        %3456 = vmatpush.msra.mxu0 0.0
        %3457 = vmatpush.msra.mxu0 0.0
        %3458 = vmatpush.msra.mxu0 0.0
        %3459 = vmatpush.msra.mxu0 0.0
        %3460 = vmatpush.msra.mxu0 0.0
        %3461 = vmatpush.msra.mxu0 0.0
        %3462 = vmatpush.msra.mxu0 0.0
        %3463 = vmatpush.msra.mxu0 0.0
        %3464 = vmatpush.msra.mxu0 0.0
        %3465 = vmatpush.msra.mxu0 %v3448
        %3466 = vmatmul.f32.gmra.mxu0 %v1756
        %v3467 = vpop.f32.mrf.mxu0
        %v3468 = vadd.f32 0.0, %v3467
        %3469 = vmatmul.f32.gmra.mxu0 %v1758
        %v3470 = vpop.f32.mrf.mxu0
        %v3471 = vadd.f32 0.0, %v3470
        %3472 = vmatmul.f32.gmra.mxu0 %v1760
        %v3473 = vpop.f32.mrf.mxu0
        %v3474 = vadd.f32 0.0, %v3473
        %3475 = vmatmul.f32.gmra.mxu0 %v1762
        %v3476 = vpop.f32.mrf.mxu0
        %v3477 = vadd.f32 0.0, %v3476
        %3478 = vmatmul.f32.gmra.mxu0 %v1764
        %v3479 = vpop.f32.mrf.mxu0
        %v3480 = vadd.f32 0.0, %v3479
        %3481 = vmatmul.f32.gmra.mxu0 %v1766
        %v3482 = vpop.f32.mrf.mxu0
        %v3483 = vadd.f32 0.0, %v3482
        %3484 = vmatmul.f32.gmra.mxu0 %v2623
        %v3485 = vpop.f32.mrf.mxu0
        %v3486 = vadd.f32 0.0, %v3485
        %3487 = vmatmul.f32.gmra.mxu0 %v3445
        %v3488 = vpop.f32.mrf.mxu0
        %v3489 = vadd.f32 0.0, %v3488
        %3490 = vdwg.mxu0
        %v3491 = vadd.f32 %v3432, %v3468
        %v3492 = vadd.f32 %v3433, %v3471
        %v3493 = vadd.f32 %v3434, %v3474
        %v3494 = vadd.f32 %v3435, %v3477
        %v3495 = vadd.f32 %v3436, %v3480
        %v3496 = vadd.f32 %v3437, %v3483
        %v3497 = vadd.f32 %v3438, %v3486
        %v3498 = vadd.f32 %v3439, %v3489
        %v3499 = vrot.slane %v619, 3
        %v3500 = vrot.slane %v620, 3
        %v3501 = vsel %vm1177, %v3499, %v3500
        %s3502 = scalar_lea.vmem %s1, 41
        %v3503 = vld [vmem:[%s3502] sm:$0x1]
        %v3504 = vsel %vm645, %v3501, 0
        %v3507 = vsel %vm670, %v3503, 0
        %3509 = vmatpush.msra.mxu0 0.0
        %3510 = vmatpush.msra.mxu0 0.0
        %3511 = vmatpush.msra.mxu0 0.0
        %3512 = vmatpush.msra.mxu0 0.0
        %3513 = vmatpush.msra.mxu0 0.0
        %3514 = vmatpush.msra.mxu0 0.0
        %3515 = vmatpush.msra.mxu0 0.0
        %3516 = vmatpush.msra.mxu0 0.0
        %3517 = vmatpush.msra.mxu0 0.0
        %3518 = vmatpush.msra.mxu0 0.0
        %3519 = vmatpush.msra.mxu0 0.0
        %3520 = vmatpush.msra.mxu0 0.0
        %3521 = vmatpush.msra.mxu0 0.0
        %3522 = vmatpush.msra.mxu0 0.0
        %3523 = vmatpush.msra.mxu0 0.0
        %3524 = vmatpush.msra.mxu0 %v3507
        %3525 = vmatmul.f32.gmra.mxu0 %v1850
        %v3526 = vpop.f32.mrf.mxu0
        %v3527 = vadd.f32 0.0, %v3526
        %3528 = vmatmul.f32.gmra.mxu0 %v1852
        %v3529 = vpop.f32.mrf.mxu0
        %v3530 = vadd.f32 0.0, %v3529
        %3531 = vmatmul.f32.gmra.mxu0 %v1854
        %v3532 = vpop.f32.mrf.mxu0
        %v3533 = vadd.f32 0.0, %v3532
        %3534 = vmatmul.f32.gmra.mxu0 %v1856
        %v3535 = vpop.f32.mrf.mxu0
        %v3536 = vadd.f32 0.0, %v3535
        %3537 = vmatmul.f32.gmra.mxu0 %v1858
        %v3538 = vpop.f32.mrf.mxu0
        %v3539 = vadd.f32 0.0, %v3538
        %3540 = vmatmul.f32.gmra.mxu0 %v1860
        %v3541 = vpop.f32.mrf.mxu0
        %v3542 = vadd.f32 0.0, %v3541
        %3543 = vmatmul.f32.gmra.mxu0 %v2682
        %v3544 = vpop.f32.mrf.mxu0
        %v3545 = vadd.f32 0.0, %v3544
        %3546 = vmatmul.f32.gmra.mxu0 %v3504
        %v3547 = vpop.f32.mrf.mxu0
        %v3548 = vadd.f32 0.0, %v3547
        %3549 = vdwg.mxu0
        %v3550 = vadd.f32 %v3491, %v3527
        %v3551 = vadd.f32 %v3492, %v3530
        %v3552 = vadd.f32 %v3493, %v3533
        %v3553 = vadd.f32 %v3494, %v3536
        %v3554 = vadd.f32 %v3495, %v3539
        %v3555 = vadd.f32 %v3496, %v3542
        %v3556 = vadd.f32 %v3497, %v3545
        %v3557 = vadd.f32 %v3498, %v3548
        %s3558 = scalar_lea.vmem %s1, 42
        %v3559 = vld [vmem:[%s3558] sm:$0x1]
        %v3561 = vsel %vm645, %v575, 0
        %v3564 = vsel %vm670, %v3559, 0
        %3566 = vmatpush.msra.mxu0 0.0
        %3567 = vmatpush.msra.mxu0 0.0
        %3568 = vmatpush.msra.mxu0 0.0
        %3569 = vmatpush.msra.mxu0 0.0
        %3570 = vmatpush.msra.mxu0 0.0
        %3571 = vmatpush.msra.mxu0 0.0
        %3572 = vmatpush.msra.mxu0 0.0
        %3573 = vmatpush.msra.mxu0 0.0
        %3574 = vmatpush.msra.mxu0 0.0
        %3575 = vmatpush.msra.mxu0 0.0
        %3576 = vmatpush.msra.mxu0 0.0
        %3577 = vmatpush.msra.mxu0 0.0
        %3578 = vmatpush.msra.mxu0 0.0
        %3579 = vmatpush.msra.mxu0 0.0
        %3580 = vmatpush.msra.mxu0 0.0
        %3581 = vmatpush.msra.mxu0 %v3564
        %3582 = vmatmul.f32.gmra.mxu0 %v725
        %v3583 = vpop.f32.mrf.mxu0
        %v3584 = vadd.f32 0.0, %v3583
        %3585 = vmatmul.f32.gmra.mxu0 %v728
        %v3586 = vpop.f32.mrf.mxu0
        %v3587 = vadd.f32 0.0, %v3586
        %3588 = vmatmul.f32.gmra.mxu0 %v731
        %v3589 = vpop.f32.mrf.mxu0
        %v3590 = vadd.f32 0.0, %v3589
        %3591 = vmatmul.f32.gmra.mxu0 %v734
        %v3592 = vpop.f32.mrf.mxu0
        %v3593 = vadd.f32 0.0, %v3592
        %3594 = vmatmul.f32.gmra.mxu0 %v737
        %v3595 = vpop.f32.mrf.mxu0
        %v3596 = vadd.f32 0.0, %v3595
        %3597 = vmatmul.f32.gmra.mxu0 %v1917
        %v3598 = vpop.f32.mrf.mxu0
        %v3599 = vadd.f32 0.0, %v3598
        %3600 = vmatmul.f32.gmra.mxu0 %v2739
        %v3601 = vpop.f32.mrf.mxu0
        %v3602 = vadd.f32 0.0, %v3601
        %3603 = vmatmul.f32.gmra.mxu0 %v3561
        %v3604 = vpop.f32.mrf.mxu0
        %v3605 = vadd.f32 0.0, %v3604
        %3606 = vdwg.mxu0
        %v3607 = vadd.f32 %v3550, %v3584
        %v3608 = vadd.f32 %v3551, %v3587
        %v3609 = vadd.f32 %v3552, %v3590
        %v3610 = vadd.f32 %v3553, %v3593
        %v3611 = vadd.f32 %v3554, %v3596
        %v3612 = vadd.f32 %v3555, %v3599
        %v3613 = vadd.f32 %v3556, %v3602
        %v3614 = vadd.f32 %v3557, %v3605
        %s3615 = scalar_lea.vmem %s1, 43
        %v3616 = vld [vmem:[%s3615] sm:$0x1]
        %v3618 = vsel %vm645, %v598, 0
        %v3621 = vsel %vm670, %v3616, 0
        %3623 = vmatpush.msra.mxu0 0.0
        %3624 = vmatpush.msra.mxu0 0.0
        %3625 = vmatpush.msra.mxu0 0.0
        %3626 = vmatpush.msra.mxu0 0.0
        %3627 = vmatpush.msra.mxu0 0.0
        %3628 = vmatpush.msra.mxu0 0.0
        %3629 = vmatpush.msra.mxu0 0.0
        %3630 = vmatpush.msra.mxu0 0.0
        %3631 = vmatpush.msra.mxu0 0.0
        %3632 = vmatpush.msra.mxu0 0.0
        %3633 = vmatpush.msra.mxu0 0.0
        %3634 = vmatpush.msra.mxu0 0.0
        %3635 = vmatpush.msra.mxu0 0.0
        %3636 = vmatpush.msra.mxu0 0.0
        %3637 = vmatpush.msra.mxu0 0.0
        %3638 = vmatpush.msra.mxu0 %v3621
        %3639 = vmatmul.f32.gmra.mxu0 %v656
        %v3640 = vpop.f32.mrf.mxu0
        %v3641 = vadd.f32 0.0, %v3640
        %3642 = vmatmul.f32.gmra.mxu0 %v659
        %v3643 = vpop.f32.mrf.mxu0
        %v3644 = vadd.f32 0.0, %v3643
        %3645 = vmatmul.f32.gmra.mxu0 %v662
        %v3646 = vpop.f32.mrf.mxu0
        %v3647 = vadd.f32 0.0, %v3646
        %3648 = vmatmul.f32.gmra.mxu0 %v665
        %v3649 = vpop.f32.mrf.mxu0
        %v3650 = vadd.f32 0.0, %v3649
        %3651 = vmatmul.f32.gmra.mxu0 %v668
        %v3652 = vpop.f32.mrf.mxu0
        %v3653 = vadd.f32 0.0, %v3652
        %3654 = vmatmul.f32.gmra.mxu0 %v1974
        %v3655 = vpop.f32.mrf.mxu0
        %v3656 = vadd.f32 0.0, %v3655
        %3657 = vmatmul.f32.gmra.mxu0 %v2796
        %v3658 = vpop.f32.mrf.mxu0
        %v3659 = vadd.f32 0.0, %v3658
        %3660 = vmatmul.f32.gmra.mxu0 %v3618
        %v3661 = vpop.f32.mrf.mxu0
        %v3662 = vadd.f32 0.0, %v3661
        %3663 = vdwg.mxu0
        %v3664 = vadd.f32 %v3607, %v3641
        %v3665 = vadd.f32 %v3608, %v3644
        %v3666 = vadd.f32 %v3609, %v3647
        %v3667 = vadd.f32 %v3610, %v3650
        %v3668 = vadd.f32 %v3611, %v3653
        %v3669 = vadd.f32 %v3612, %v3656
        %v3670 = vadd.f32 %v3613, %v3659
        %v3671 = vadd.f32 %v3614, %v3662
        %v3673 = vrot.slane %v575, 1
        %v3674 = vrot.slane %v576, 1
        %v3675 = vsel %vm791, %v3673, %v3674
        %s3676 = scalar_lea.vmem %s1, 44
        %v3677 = vld [vmem:[%s3676] sm:$0x1]
        %v3678 = vsel %vm645, %v3675, 0
        %v3681 = vsel %vm670, %v3677, 0
        %3683 = vmatpush.msra.mxu0 0.0
        %3684 = vmatpush.msra.mxu0 0.0
        %3685 = vmatpush.msra.mxu0 0.0
        %3686 = vmatpush.msra.mxu0 0.0
        %3687 = vmatpush.msra.mxu0 0.0
        %3688 = vmatpush.msra.mxu0 0.0
        %3689 = vmatpush.msra.mxu0 0.0
        %3690 = vmatpush.msra.mxu0 0.0
        %3691 = vmatpush.msra.mxu0 0.0
        %3692 = vmatpush.msra.mxu0 0.0
        %3693 = vmatpush.msra.mxu0 0.0
        %3694 = vmatpush.msra.mxu0 0.0
        %3695 = vmatpush.msra.mxu0 0.0
        %3696 = vmatpush.msra.mxu0 0.0
        %3697 = vmatpush.msra.mxu0 0.0
        %3698 = vmatpush.msra.mxu0 %v3681
        %3699 = vmatmul.f32.gmra.mxu0 %v824
        %v3700 = vpop.f32.mrf.mxu0
        %v3701 = vadd.f32 0.0, %v3700
        %3702 = vmatmul.f32.gmra.mxu0 %v826
        %v3703 = vpop.f32.mrf.mxu0
        %v3704 = vadd.f32 0.0, %v3703
        %3705 = vmatmul.f32.gmra.mxu0 %v828
        %v3706 = vpop.f32.mrf.mxu0
        %v3707 = vadd.f32 0.0, %v3706
        %3708 = vmatmul.f32.gmra.mxu0 %v830
        %v3709 = vpop.f32.mrf.mxu0
        %v3710 = vadd.f32 0.0, %v3709
        %3711 = vmatmul.f32.gmra.mxu0 %v832
        %v3712 = vpop.f32.mrf.mxu0
        %v3713 = vadd.f32 0.0, %v3712
        %3714 = vmatmul.f32.gmra.mxu0 %v2034
        %v3715 = vpop.f32.mrf.mxu0
        %v3716 = vadd.f32 0.0, %v3715
        %3717 = vmatmul.f32.gmra.mxu0 %v2856
        %v3718 = vpop.f32.mrf.mxu0
        %v3719 = vadd.f32 0.0, %v3718
        %3720 = vmatmul.f32.gmra.mxu0 %v3678
        %v3721 = vpop.f32.mrf.mxu0
        %v3722 = vadd.f32 0.0, %v3721
        %3723 = vdwg.mxu0
        %v3724 = vadd.f32 %v3664, %v3701
        %v3725 = vadd.f32 %v3665, %v3704
        %v3726 = vadd.f32 %v3666, %v3707
        %v3727 = vadd.f32 %v3667, %v3710
        %v3728 = vadd.f32 %v3668, %v3713
        %v3729 = vadd.f32 %v3669, %v3716
        %v3730 = vadd.f32 %v3670, %v3719
        %v3731 = vadd.f32 %v3671, %v3722
        %v3733 = vrot.slane %v598, 1
        %v3734 = vrot.slane %v599, 1
        %v3735 = vsel %vm791, %v3733, %v3734
        %s3736 = scalar_lea.vmem %s1, 45
        %v3737 = vld [vmem:[%s3736] sm:$0x1]
        %v3738 = vsel %vm645, %v3735, 0
        %v3741 = vsel %vm670, %v3737, 0
        %3743 = vmatpush.msra.mxu0 0.0
        %3744 = vmatpush.msra.mxu0 0.0
        %3745 = vmatpush.msra.mxu0 0.0
        %3746 = vmatpush.msra.mxu0 0.0
        %3747 = vmatpush.msra.mxu0 0.0
        %3748 = vmatpush.msra.mxu0 0.0
        %3749 = vmatpush.msra.mxu0 0.0
        %3750 = vmatpush.msra.mxu0 0.0
        %3751 = vmatpush.msra.mxu0 0.0
        %3752 = vmatpush.msra.mxu0 0.0
        %3753 = vmatpush.msra.mxu0 0.0
        %3754 = vmatpush.msra.mxu0 0.0
        %3755 = vmatpush.msra.mxu0 0.0
        %3756 = vmatpush.msra.mxu0 0.0
        %3757 = vmatpush.msra.mxu0 0.0
        %3758 = vmatpush.msra.mxu0 %v3741
        %3759 = vmatmul.f32.gmra.mxu0 %v926
        %v3760 = vpop.f32.mrf.mxu0
        %v3761 = vadd.f32 0.0, %v3760
        %3762 = vmatmul.f32.gmra.mxu0 %v928
        %v3763 = vpop.f32.mrf.mxu0
        %v3764 = vadd.f32 0.0, %v3763
        %3765 = vmatmul.f32.gmra.mxu0 %v930
        %v3766 = vpop.f32.mrf.mxu0
        %v3767 = vadd.f32 0.0, %v3766
        %3768 = vmatmul.f32.gmra.mxu0 %v932
        %v3769 = vpop.f32.mrf.mxu0
        %v3770 = vadd.f32 0.0, %v3769
        %3771 = vmatmul.f32.gmra.mxu0 %v934
        %v3772 = vpop.f32.mrf.mxu0
        %v3773 = vadd.f32 0.0, %v3772
        %3774 = vmatmul.f32.gmra.mxu0 %v2094
        %v3775 = vpop.f32.mrf.mxu0
        %v3776 = vadd.f32 0.0, %v3775
        %3777 = vmatmul.f32.gmra.mxu0 %v2916
        %v3778 = vpop.f32.mrf.mxu0
        %v3779 = vadd.f32 0.0, %v3778
        %3780 = vmatmul.f32.gmra.mxu0 %v3738
        %v3781 = vpop.f32.mrf.mxu0
        %v3782 = vadd.f32 0.0, %v3781
        %3783 = vdwg.mxu0
        %v3784 = vadd.f32 %v3724, %v3761
        %v3785 = vadd.f32 %v3725, %v3764
        %v3786 = vadd.f32 %v3726, %v3767
        %v3787 = vadd.f32 %v3727, %v3770
        %v3788 = vadd.f32 %v3728, %v3773
        %v3789 = vadd.f32 %v3729, %v3776
        %v3790 = vadd.f32 %v3730, %v3779
        %v3791 = vadd.f32 %v3731, %v3782
        %v3792 = vrot.slane %v575, 2
        %v3793 = vrot.slane %v576, 2
        %v3794 = vsel %vm988, %v3792, %v3793
        %s3795 = scalar_lea.vmem %s1, 46
        %v3796 = vld [vmem:[%s3795] sm:$0x1]
        %v3797 = vsel %vm645, %v3794, 0
        %v3800 = vsel %vm670, %v3796, 0
        %3802 = vmatpush.msra.mxu0 0.0
        %3803 = vmatpush.msra.mxu0 0.0
        %3804 = vmatpush.msra.mxu0 0.0
        %3805 = vmatpush.msra.mxu0 0.0
        %3806 = vmatpush.msra.mxu0 0.0
        %3807 = vmatpush.msra.mxu0 0.0
        %3808 = vmatpush.msra.mxu0 0.0
        %3809 = vmatpush.msra.mxu0 0.0
        %3810 = vmatpush.msra.mxu0 0.0
        %3811 = vmatpush.msra.mxu0 0.0
        %3812 = vmatpush.msra.mxu0 0.0
        %3813 = vmatpush.msra.mxu0 0.0
        %3814 = vmatpush.msra.mxu0 0.0
        %3815 = vmatpush.msra.mxu0 0.0
        %3816 = vmatpush.msra.mxu0 0.0
        %3817 = vmatpush.msra.mxu0 %v3800
        %3818 = vmatmul.f32.gmra.mxu0 %v1021
        %v3819 = vpop.f32.mrf.mxu0
        %v3820 = vadd.f32 0.0, %v3819
        %3821 = vmatmul.f32.gmra.mxu0 %v1023
        %v3822 = vpop.f32.mrf.mxu0
        %v3823 = vadd.f32 0.0, %v3822
        %3824 = vmatmul.f32.gmra.mxu0 %v1025
        %v3825 = vpop.f32.mrf.mxu0
        %v3826 = vadd.f32 0.0, %v3825
        %3827 = vmatmul.f32.gmra.mxu0 %v1027
        %v3828 = vpop.f32.mrf.mxu0
        %v3829 = vadd.f32 0.0, %v3828
        %3830 = vmatmul.f32.gmra.mxu0 %v1029
        %v3831 = vpop.f32.mrf.mxu0
        %v3832 = vadd.f32 0.0, %v3831
        %3833 = vmatmul.f32.gmra.mxu0 %v2153
        %v3834 = vpop.f32.mrf.mxu0
        %v3835 = vadd.f32 0.0, %v3834
        %3836 = vmatmul.f32.gmra.mxu0 %v2975
        %v3837 = vpop.f32.mrf.mxu0
        %v3838 = vadd.f32 0.0, %v3837
        %3839 = vmatmul.f32.gmra.mxu0 %v3797
        %v3840 = vpop.f32.mrf.mxu0
        %v3841 = vadd.f32 0.0, %v3840
        %3842 = vdwg.mxu0
        %v3843 = vadd.f32 %v3784, %v3820
        %v3844 = vadd.f32 %v3785, %v3823
        %v3845 = vadd.f32 %v3786, %v3826
        %v3846 = vadd.f32 %v3787, %v3829
        %v3847 = vadd.f32 %v3788, %v3832
        %v3848 = vadd.f32 %v3789, %v3835
        %v3849 = vadd.f32 %v3790, %v3838
        %v3850 = vadd.f32 %v3791, %v3841
        %v3851 = vrot.slane %v598, 2
        %v3852 = vrot.slane %v599, 2
        %v3853 = vsel %vm988, %v3851, %v3852
        %s3854 = scalar_lea.vmem %s1, 47
        %v3855 = vld [vmem:[%s3854] sm:$0x1]
        %v3856 = vsel %vm645, %v3853, 0
        %v3859 = vsel %vm670, %v3855, 0
        %3861 = vmatpush.msra.mxu0 0.0
        %3862 = vmatpush.msra.mxu0 0.0
        %3863 = vmatpush.msra.mxu0 0.0
        %3864 = vmatpush.msra.mxu0 0.0
        %3865 = vmatpush.msra.mxu0 0.0
        %3866 = vmatpush.msra.mxu0 0.0
        %3867 = vmatpush.msra.mxu0 0.0
        %3868 = vmatpush.msra.mxu0 0.0
        %3869 = vmatpush.msra.mxu0 0.0
        %3870 = vmatpush.msra.mxu0 0.0
        %3871 = vmatpush.msra.mxu0 0.0
        %3872 = vmatpush.msra.mxu0 0.0
        %3873 = vmatpush.msra.mxu0 0.0
        %3874 = vmatpush.msra.mxu0 0.0
        %3875 = vmatpush.msra.mxu0 0.0
        %3876 = vmatpush.msra.mxu0 %v3859
        %3877 = vmatmul.f32.gmra.mxu0 %v1115
        %v3878 = vpop.f32.mrf.mxu0
        %v3879 = vadd.f32 0.0, %v3878
        %3880 = vmatmul.f32.gmra.mxu0 %v1117
        %v3881 = vpop.f32.mrf.mxu0
        %v3882 = vadd.f32 0.0, %v3881
        %3883 = vmatmul.f32.gmra.mxu0 %v1119
        %v3884 = vpop.f32.mrf.mxu0
        %v3885 = vadd.f32 0.0, %v3884
        %3886 = vmatmul.f32.gmra.mxu0 %v1121
        %v3887 = vpop.f32.mrf.mxu0
        %v3888 = vadd.f32 0.0, %v3887
        %3889 = vmatmul.f32.gmra.mxu0 %v1123
        %v3890 = vpop.f32.mrf.mxu0
        %v3891 = vadd.f32 0.0, %v3890
        %3892 = vmatmul.f32.gmra.mxu0 %v2212
        %v3893 = vpop.f32.mrf.mxu0
        %v3894 = vadd.f32 0.0, %v3893
        %3895 = vmatmul.f32.gmra.mxu0 %v3034
        %v3896 = vpop.f32.mrf.mxu0
        %v3897 = vadd.f32 0.0, %v3896
        %3898 = vmatmul.f32.gmra.mxu0 %v3856
        %v3899 = vpop.f32.mrf.mxu0
        %v3900 = vadd.f32 0.0, %v3899
        %3901 = vdwg.mxu0
        %v3902 = vadd.f32 %v3843, %v3879
        %v3903 = vadd.f32 %v3844, %v3882
        %v3904 = vadd.f32 %v3845, %v3885
        %v3905 = vadd.f32 %v3846, %v3888
        %v3906 = vadd.f32 %v3847, %v3891
        %v3907 = vadd.f32 %v3848, %v3894
        %v3908 = vadd.f32 %v3849, %v3897
        %v3909 = vadd.f32 %v3850, %v3900
        %v3910 = vrot.slane %v575, 3
        %v3911 = vrot.slane %v576, 3
        %v3912 = vsel %vm1177, %v3910, %v3911
        %s3913 = scalar_lea.vmem %s1, 48
        %v3914 = vld [vmem:[%s3913] sm:$0x1]
        %v3915 = vsel %vm645, %v3912, 0
        %v3918 = vsel %vm670, %v3914, 0
        %3920 = vmatpush.msra.mxu0 0.0
        %3921 = vmatpush.msra.mxu0 0.0
        %3922 = vmatpush.msra.mxu0 0.0
        %3923 = vmatpush.msra.mxu0 0.0
        %3924 = vmatpush.msra.mxu0 0.0
        %3925 = vmatpush.msra.mxu0 0.0
        %3926 = vmatpush.msra.mxu0 0.0
        %3927 = vmatpush.msra.mxu0 0.0
        %3928 = vmatpush.msra.mxu0 0.0
        %3929 = vmatpush.msra.mxu0 0.0
        %3930 = vmatpush.msra.mxu0 0.0
        %3931 = vmatpush.msra.mxu0 0.0
        %3932 = vmatpush.msra.mxu0 0.0
        %3933 = vmatpush.msra.mxu0 0.0
        %3934 = vmatpush.msra.mxu0 0.0
        %3935 = vmatpush.msra.mxu0 %v3918
        %3936 = vmatmul.f32.gmra.mxu0 %v1210
        %v3937 = vpop.f32.mrf.mxu0
        %v3938 = vadd.f32 0.0, %v3937
        %3939 = vmatmul.f32.gmra.mxu0 %v1212
        %v3940 = vpop.f32.mrf.mxu0
        %v3941 = vadd.f32 0.0, %v3940
        %3942 = vmatmul.f32.gmra.mxu0 %v1214
        %v3943 = vpop.f32.mrf.mxu0
        %v3944 = vadd.f32 0.0, %v3943
        %3945 = vmatmul.f32.gmra.mxu0 %v1216
        %v3946 = vpop.f32.mrf.mxu0
        %v3947 = vadd.f32 0.0, %v3946
        %3948 = vmatmul.f32.gmra.mxu0 %v1218
        %v3949 = vpop.f32.mrf.mxu0
        %v3950 = vadd.f32 0.0, %v3949
        %3951 = vmatmul.f32.gmra.mxu0 %v2271
        %v3952 = vpop.f32.mrf.mxu0
        %v3953 = vadd.f32 0.0, %v3952
        %3954 = vmatmul.f32.gmra.mxu0 %v3093
        %v3955 = vpop.f32.mrf.mxu0
        %v3956 = vadd.f32 0.0, %v3955
        %3957 = vmatmul.f32.gmra.mxu0 %v3915
        %v3958 = vpop.f32.mrf.mxu0
        %v3959 = vadd.f32 0.0, %v3958
        %3960 = vdwg.mxu0
        %v3961 = vadd.f32 %v3902, %v3938
        %v3962 = vadd.f32 %v3903, %v3941
        %v3963 = vadd.f32 %v3904, %v3944
        %v3964 = vadd.f32 %v3905, %v3947
        %v3965 = vadd.f32 %v3906, %v3950
        %v3966 = vadd.f32 %v3907, %v3953
        %v3967 = vadd.f32 %v3908, %v3956
        %v3968 = vadd.f32 %v3909, %v3959
        %v3969 = vld [vmem:[%s2] sm:$0x1]
        %v3971 = vperm.slane %v3969, 0
        %v3973 = vadd.f32 %v3961, %v3971
        %v3974 = vadd.f32 %v3962, %v3971
        %v3975 = vadd.f32 %v3963, %v3971
        %v3976 = vadd.f32 %v3964, %v3971
        %v3977 = vadd.f32 %v3965, %v3971
        %v3978 = vadd.f32 %v3966, %v3971
        %v3979 = vadd.f32 %v3967, %v3971
        %v3980 = vadd.f32 %v3968, %v3971
        %3981 = vst [vmem:[%s554] sm:$0xff] %v3973
        %3982 = vst [vmem:[%s554 + $0x8] sm:$0xff] %v3974
        %3983 = vst [vmem:[%s554 + $0x10] sm:$0xff] %v3975
        %3984 = vst [vmem:[%s554 + $0x18] sm:$0xff] %v3976
        %3985 = vst [vmem:[%s554 + $0x20] sm:$0xff] %v3977
        %3986 = vst [vmem:[%s554 + $0x28] sm:$0xff] %v3978
        %3987 = vst [vmem:[%s554 + $0x30] sm:$0xff] %v3979
        %3988 = vst [vmem:[%s554 + $0x38] sm:$0xff] %v3980
        %p3989 = scmp.lt.s32.totalorder %s14, 1
        %s3990 = scalar_select %p3989, %s14, 1
        %s3991 = smul.addr %s3990, 8
        %s3992 = smul.addr %s3991, 8
        %s3993 = scalar_lea.vmem %s3, %s3992
        // Predicated region
        $region71: #{_lambda_.3} parent=65 // pred_check
          %p3994 = pneg %p100
        $region72: #{_lambda_.3} parent=65 // pred_check_branch
          %3996 = sbr.rel (%p3994) target = $region74
        $region73: #{_lambda_.3} parent=65 // pred_region
          _
        $region74: #{_lambda_.3} parent=65 // pred_fallthru
          _
      $region66: #{_lambda_.3} parent=5 // pred_fallthru
        _
      %p3997 = scmp.le.s32.totalorder 2, %s9
      // Predicated region
      $region75: #{_lambda_.3} parent=5 // pred_check
        %p3998 = pneg %p3997
      $region76: #{_lambda_.3} parent=5 // pred_check_branch
        %4000 = sbr.rel (%p3998) target = $region78
      $region77: #{_lambda_.3} parent=5 // pred_region
        %s4001 = ssub.s32 %s9, 2
        // Predicated region
        $region79: #{_lambda_.3} parent=77 // pred_check
          %p4002 = pneg %p106
        $region80: #{_lambda_.3} parent=77 // pred_check_branch
          %4004 = sbr.rel (%p4002) target = $region82
        $region81: #{_lambda_.3} parent=77 // pred_region
          %p4005 = scmp.lt.s32.totalorder %s15, 1
          %s4006 = scalar_select %p4005, %s15, 1
          %s4007 = smul.addr %s4006, 8
          %s4008 = smul.addr %s4007, 8
          %s4009 = scalar_lea.vmem %s3, %s4008
        $region82: #{_lambda_.3} parent=77 // pred_fallthru
          _
      $region78: #{_lambda_.3} parent=5 // pred_fallthru
        _
    $region6: #{_lambda_.3} parent=1 // loop_footer
      %s13 = sadd.s32 1, %s9
    $region7: #{_lambda_.3} parent=1 // loop_footer_branch
      %8 = sbr.rel target = $region3
    $region8: #{_lambda_.3} parent=1 // loop_exit
      _

</llo_original>
